<compile_context>
chip_gen: v7x
topology: tpu7x:2x2x1
jax: 0.10.0
libtpu: 0.0.40
codegen_flags: <defaults>
</compile_context>

<pallas_src>
import functools

import jax
import jax.numpy as jnp
from jax.experimental import pallas as pl
from jax.experimental.pallas import tpu as pltpu

BN_EPS = 1e-5
VMEM_LIMIT_BYTES = 48 * 1024 * 1024     # explicit cap: fits v7x's 64 MiB with headroom
TILE_VMEM_BUDGET = 10 * 1024 * 1024     # per-tile working-set target


def _pick_row_tile(h, row_bytes, budget=TILE_VMEM_BUDGET):
    """Largest divisor of `h` (kept < h so the grid has >=2 row tiles and the halo
    paths are exercised) whose per-tile working set fits the VMEM budget."""
    best = 1
    for d in range(1, h):
        if h % d == 0 and d * row_bytes <= budget:
            best = d
    return best


# ---------------------------------------------------------------------------
# Kernel 1: [optional fused BN+ReLU on the input] -> 3x3 conv -> partial BN stats
# ---------------------------------------------------------------------------
def _conv_stats_kernel(x_ref, top_ref, bot_ref, w_ref, sc_ref, sh_ref,
                       y_ref, st_ref, win_ref, *, bh, width, cin, cout,
                       apply_input_act):
    i = pl.program_id(1)
    n_tiles = pl.num_programs(1)

    def prep(v):
        # Optionally apply the previous stage's BatchNorm+ReLU on the fly, then
        # cast to bf16 for the MXU (f32 accumulation below).
        if apply_input_act:
            v = jnp.maximum(v.astype(jnp.float32) * sc_ref[...] + sh_ref[...], 0.0)
        return v.astype(jnp.bfloat16)

    # Assemble the zero-padded (bh+2, W+2, Cin) window in VMEM -- replaces the
    # wrapper-side jnp.pad HBM pass; borders stay zero.
    win_ref[...] = jnp.zeros(win_ref.shape, win_ref.dtype)
    win_ref[1:bh + 1, 1:width + 1, :] = prep(x_ref[...])

    @pl.when(i > 0)                      # top halo row (zero at the image border)
    def _():
        win_ref[0:1, 1:width + 1, :] = prep(top_ref[...])

    @pl.when(i < n_tiles - 1)            # bottom halo row
    def _():
        win_ref[bh + 1:bh + 2, 1:width + 1, :] = prep(bot_ref[...])

    # im2col: fold the 3x3 taps into K = 9*Cin -> a single deep MXU matmul.
    pieces = []
    for dy in range(3):
        for dx in range(3):
            pieces.append(
                win_ref[dy:dy + bh, dx:dx + width, :].reshape(bh * width, cin))
    patches = jnp.concatenate(pieces, axis=1)                    # (bh*W, 9*Cin) bf16
    acc = jnp.dot(patches, w_ref[...],
                  preferred_element_type=jnp.float32)            # (bh*W, Cout) f32

    y_ref[...] = acc.reshape(bh, width, cout).astype(y_ref.dtype)

    # Per-tile partial BatchNorm statistics (sum, sum of squares).
    st_ref[0:1, :] = jnp.sum(acc, axis=0, keepdims=True)
    st_ref[1:2, :] = jnp.sum(acc * acc, axis=0, keepdims=True)


def _conv3x3_stats(x, w_oihw, scale_in=None, shift_in=None):
    """3x3 SAME conv on NHWC `x` (optionally preceded by a fused per-channel
    affine+ReLU = previous stage's BatchNorm). Returns (y, stats) where
    y: (N,H,W,Cout) f32 un-normalized conv output, stats: (N,T,2,Cout) partial
    [sum, sumsq] per row tile."""
    n, h, wd, cin = x.shape
    cout = w_oihw.shape[0]
    apply_act = scale_in is not None

    # torch (Cout, Cin, 3, 3) -> (ky, kx, Cin, Cout) -> (9*Cin, Cout), bf16.
    wk = jnp.transpose(w_oihw, (2, 3, 1, 0)).reshape(9 * cin, cout)
    wk = wk.astype(jnp.bfloat16)

    if apply_act:
        sc = scale_in.reshape(1, cin).astype(jnp.float32)
        sh = shift_in.reshape(1, cin).astype(jnp.float32)
    else:
        sc = jnp.ones((1, cin), jnp.float32)
        sh = jnp.zeros((1, cin), jnp.float32)

    in_bytes = x.dtype.itemsize
    row_bytes = wd * (2 * cin * in_bytes     # main input block (double buffered)
                      + cin * 2              # padded window scratch (bf16)
                      + 9 * cin * 2          # im2col patches (bf16)
                      + cout * 4             # f32 accumulator
                      + 2 * cout * 4)        # f32 output block (double buffered)
    bh = _pick_row_tile(h, row_bytes)
    t = h // bh

    kernel = functools.partial(_conv_stats_kernel, bh=bh, width=wd, cin=cin,
                               cout=cout, apply_input_act=apply_act)

    in_specs = [
        # main row tile
        pl.BlockSpec((None, bh, wd, cin), lambda b, i: (b, i, 0, 0)),
        # 1-row halos (element-indexed since block height == 1), clamped + masked
        pl.BlockSpec((None, 1, wd, cin),
                     lambda b, i: (b, jnp.maximum(i * bh - 1, 0), 0, 0)),
        pl.BlockSpec((None, 1, wd, cin),
                     lambda b, i: (b, jnp.minimum((i + 1) * bh, h - 1), 0, 0)),
        # weights and per-channel affine (tiny, same block every step)
        pl.BlockSpec((9 * cin, cout), lambda b, i: (0, 0)),
        pl.BlockSpec((1, cin), lambda b, i: (0, 0)),
        pl.BlockSpec((1, cin), lambda b, i: (0, 0)),
    ]
    out_specs = (
        pl.BlockSpec((None, bh, wd, cout), lambda b, i: (b, i, 0, 0)),
        pl.BlockSpec((None, None, 2, cout), lambda b, i: (b, i, 0, 0)),
    )
    out_shape = (
        jax.ShapeDtypeStruct((n, h, wd, cout), jnp.float32),
        jax.ShapeDtypeStruct((n, t, 2, cout), jnp.float32),
    )

    y, stats = pl.pallas_call(
        kernel,
        grid_spec=pltpu.PrefetchScalarGridSpec(
            num_scalar_prefetch=0,
            grid=(n, t),
            in_specs=in_specs,
            out_specs=out_specs,
            scratch_shapes=[pltpu.VMEM((bh + 2, wd + 2, cin), jnp.bfloat16)],
        ),
        out_shape=out_shape,
        compiler_params=pltpu.CompilerParams(
            dimension_semantics=("parallel", "parallel"),
            vmem_limit_bytes=VMEM_LIMIT_BYTES),
    )(x, x, x, wk, sc, sh)
    return y, stats


def _bn_affine(stats, gamma, beta, count):
    """Reduce per-tile partial stats -> per-channel (scale, shift) for y*scale+shift."""
    s = jnp.sum(stats[:, :, 0, :], axis=(0, 1))
    ss = jnp.sum(stats[:, :, 1, :], axis=(0, 1))
    mean = s / count
    var = jnp.maximum(ss / count - mean * mean, 0.0)   # clamp: E[x^2]-m^2 can dip < 0
    inv_std = jax.lax.rsqrt(var + BN_EPS)
    scale = gamma * inv_std
    shift = beta - mean * scale
    return scale, shift


# ---------------------------------------------------------------------------
# Kernel 2: final BN apply + ReLU epilogue
# ---------------------------------------------------------------------------
def _bn_relu_kernel(y_ref, sc_ref, sh_ref, o_ref):
    o_ref[...] = jnp.maximum(y_ref[...] * sc_ref[...] + sh_ref[...], 0.0
                             ).astype(o_ref.dtype)


def _bn_relu(y, scale, shift):
    n, h, wd, c = y.shape
    row_bytes = 2 * wd * c * 4 + 2 * wd * c * 4       # in + out blocks, double buffered
    bh = _pick_row_tile(h, row_bytes)
    t = h // bh
    return pl.pallas_call(
        _bn_relu_kernel,
        grid_spec=pltpu.PrefetchScalarGridSpec(
            num_scalar_prefetch=0,
            grid=(n, t),
            in_specs=[
                pl.BlockSpec((None, bh, wd, c), lambda b, i: (b, i, 0, 0)),
                pl.BlockSpec((1, c), lambda b, i: (0, 0)),
                pl.BlockSpec((1, c), lambda b, i: (0, 0)),
            ],
            out_specs=pl.BlockSpec((None, bh, wd, c), lambda b, i: (b, i, 0, 0)),
        ),
        out_shape=jax.ShapeDtypeStruct((n, h, wd, c), jnp.float32),
        compiler_params=pltpu.CompilerParams(
            dimension_semantics=("parallel", "parallel"),
            vmem_limit_bytes=VMEM_LIMIT_BYTES),
    )(y, scale.reshape(1, c).astype(jnp.float32),
      shift.reshape(1, c).astype(jnp.float32))


# ---------------------------------------------------------------------------
# ConvBlock.forward  (NCHW in, NCHW out — matches the torch module)
# ---------------------------------------------------------------------------
def conv_block_forward(x_nchw, params):
    n, _, h, wd = x_nchw.shape
    x = jnp.transpose(x_nchw, (0, 2, 3, 1)).astype(jnp.bfloat16)   # NCHW -> NHWC, bf16

    # stage 1: conv1 + batch stats
    y1, st1 = _conv3x3_stats(x, params["w1"])
    sc1, sh1 = _bn_affine(st1, params["g1"], params["b1"], n * h * wd)

    # stage 2: BN1+ReLU fused into conv2's input load; conv2 + batch stats
    y2, st2 = _conv3x3_stats(y1, params["w2"], scale_in=sc1, shift_in=sh1)
    sc2, sh2 = _bn_affine(st2, params["g2"], params["b2"], n * h * wd)

    # final BN2 + ReLU epilogue
    out = _bn_relu(y2, sc2, sh2)
    return jnp.transpose(out, (0, 3, 1, 2))                        # NHWC -> NCHW


def init_params(key, in_ch, out_ch):
    k1, k2, k3, k4, k5, k6 = jax.random.split(key, 6)
    return {
        # torch layout (Cout, Cin, 3, 3), no conv bias
        "w1": 0.1 * jax.random.normal(k1, (out_ch, in_ch, 3, 3), jnp.float32),
        "g1": 1.0 + 0.1 * jax.random.normal(k3, (out_ch,), jnp.float32),
        "b1": 0.1 * jax.random.normal(k4, (out_ch,), jnp.float32),
        "w2": 0.1 * jax.random.normal(k2, (out_ch, out_ch, 3, 3), jnp.float32),
        "g2": 1.0 + 0.1 * jax.random.normal(k5, (out_ch,), jnp.float32),
        "b2": 0.1 * jax.random.normal(k6, (out_ch,), jnp.float32),
    }


# ------------------------------ pure-JAX reference --------------------------
def _ref_stage(x_nhwc, w_oihw, g, b):
    w_hwio = jnp.transpose(w_oihw, (2, 3, 1, 0)).astype(jnp.bfloat16)
    y = jax.lax.conv_general_dilated(
        x_nhwc.astype(jnp.bfloat16), w_hwio, window_strides=(1, 1),
        padding="SAME", dimension_numbers=("NHWC", "HWIO", "NHWC"),
        preferred_element_type=jnp.float32)
    mean = jnp.mean(y, axis=(0, 1, 2))
    var = jnp.var(y, axis=(0, 1, 2))
    y = (y - mean) * jax.lax.rsqrt(var + BN_EPS) * g + b
    return jnp.maximum(y, 0.0)


def conv_block_ref(x_nchw, params):
    x = jnp.transpose(x_nchw, (0, 2, 3, 1))
    y = _ref_stage(x, params["w1"], params["g1"], params["b1"])
    y = _ref_stage(y, params["w2"], params["g2"], params["b2"])
    return jnp.transpose(y, (0, 3, 1, 2))


if __name__ == "__main__":
    key = jax.random.PRNGKey(0)
    kx, kp = jax.random.split(key)

    N, C_IN, C_OUT, H, W = 2, 4, 8, 16, 16
    x = jax.random.normal(kx, (N, C_IN, H, W), jnp.float32)   # NCHW, like torch
    params = init_params(kp, C_IN, C_OUT)

    out = jax.block_until_ready(jax.jit(conv_block_forward)(x, params))
    assert out.shape == (N, C_OUT, H, W), out.shape

    ref = jax.block_until_ready(conv_block_ref(x, params))
    max_err = float(jnp.max(jnp.abs(out - ref)))
    assert jnp.allclose(out, ref, atol=5e-3, rtol=5e-3), max_err

    print("KERNEL_OK")
</pallas_src>

<mosaic_0001>
module attributes {stable_mosaic.version = 11 : i64} {
  func.func @_bn_relu_kernel(%arg0: i32, %arg1: i32, %arg2: memref<1x8x16x8xf32, #tpu.memory_space<vmem>>, %arg3: memref<1x8xf32, #tpu.memory_space<vmem>>, %arg4: memref<1x8xf32, #tpu.memory_space<vmem>>, %arg5: memref<1x8x16x8xf32, #tpu.memory_space<vmem>>) attributes {dimension_semantics = [#tpu.dimension_semantics<parallel>, #tpu.dimension_semantics<parallel>], iteration_bounds = array<i64: 2, 2>, scalar_prefetch = 0 : i64, scratch_operands = 0 : i64, tpu.core_type = #tpu.core_type<tc>, window_params = [{transform_indices = @transform_0, window_bounds = array<i64: 1, 8, 16, 8>}, {pipeline_mode = #tpu.pipeline_mode<synchronous>, transform_indices = @transform_1, window_bounds = array<i64: 1, 8>}, {pipeline_mode = #tpu.pipeline_mode<synchronous>, transform_indices = @transform_2, window_bounds = array<i64: 1, 8>}, {transform_indices = @transform_3, window_bounds = array<i64: 1, 8, 16, 8>}]} {
    %c0 = arith.constant 0 : index
    %c0_0 = arith.constant 0 : index
    %c0_1 = arith.constant 0 : index
    %c0_2 = arith.constant 0 : index
    %0 = vector.load %arg2[%c0, %c0_0, %c0_1, %c0_2] : memref<1x8x16x8xf32, #tpu.memory_space<vmem>>, vector<1x8x16x8xf32>
    %1 = vector.shape_cast %0 : vector<1x8x16x8xf32> to vector<8x16x8xf32>
    %c0_3 = arith.constant 0 : index
    %c0_4 = arith.constant 0 : index
    %2 = vector.load %arg3[%c0_3, %c0_4] : memref<1x8xf32, #tpu.memory_space<vmem>>, vector<1x8xf32>
    %3 = vector.shape_cast %2 : vector<1x8xf32> to vector<1x1x8xf32>
    %4 = vector.broadcast %3 : vector<1x1x8xf32> to vector<8x16x8xf32>
    %5 = arith.mulf %1, %4 : vector<8x16x8xf32>
    %c0_5 = arith.constant 0 : index
    %c0_6 = arith.constant 0 : index
    %6 = vector.load %arg4[%c0_5, %c0_6] : memref<1x8xf32, #tpu.memory_space<vmem>>, vector<1x8xf32>
    %7 = vector.shape_cast %6 : vector<1x8xf32> to vector<1x1x8xf32>
    %8 = vector.broadcast %7 : vector<1x1x8xf32> to vector<8x16x8xf32>
    %9 = arith.addf %5, %8 : vector<8x16x8xf32>
    %cst = arith.constant 0.000000e+00 : f32
    %10 = vector.broadcast %cst : f32 to vector<8x16x8xf32>
    %11 = arith.maximumf %9, %10 : vector<8x16x8xf32>
    %c0_7 = arith.constant 0 : index
    %c0_8 = arith.constant 0 : index
    %c0_9 = arith.constant 0 : index
    %c0_10 = arith.constant 0 : index
    %12 = vector.load %arg5[%c0_7, %c0_8, %c0_9, %c0_10] : memref<1x8x16x8xf32, #tpu.memory_space<vmem>>, vector<1x8x16x8xf32>
    %13 = vector.shape_cast %12 : vector<1x8x16x8xf32> to vector<8x16x8xf32>
    %14 = vector.shape_cast %11 : vector<8x16x8xf32> to vector<1x8x16x8xf32>
    tpu.vector_store %arg5[%c0_7, %c0_8, %c0_9, %c0_10], %14 {strides = array<i32>} : memref<1x8x16x8xf32, #tpu.memory_space<vmem>>, vector<1x8x16x8xf32>,
    return
  }
  func.func @transform_0(%arg0: i32, %arg1: i32) -> (i32, i32, i32, i32) {
    %c0_i32 = arith.constant 0 : i32
    %c0_i32_0 = arith.constant 0 : i32
    %c0_i32_1 = arith.constant 0 : i32
    return %arg0, %arg1, %c0_i32, %c0_i32_0 : i32, i32, i32, i32
  }
  func.func @transform_1(%arg0: i32, %arg1: i32) -> (i32, i32) {
    %c0_i32 = arith.constant 0 : i32
    %c0_i32_0 = arith.constant 0 : i32
    %c0_i32_1 = arith.constant 0 : i32
    return %c0_i32, %c0_i32_0 : i32, i32
  }
  func.func @transform_2(%arg0: i32, %arg1: i32) -> (i32, i32) {
    %c0_i32 = arith.constant 0 : i32
    %c0_i32_0 = arith.constant 0 : i32
    %c0_i32_1 = arith.constant 0 : i32
    return %c0_i32, %c0_i32_0 : i32, i32
  }
  func.func @transform_3(%arg0: i32, %arg1: i32) -> (i32, i32, i32, i32) {
    %c0_i32 = arith.constant 0 : i32
    %c0_i32_0 = arith.constant 0 : i32
    %c0_i32_1 = arith.constant 0 : i32
    return %arg0, %arg1, %c0_i32, %c0_i32_0 : i32, i32, i32, i32
  }
}

module attributes {stable_mosaic.version = 11 : i64} {
  func.func @_conv_stats_kernel(%arg0: i32, %arg1: i32, %arg2: memref<1x8x16x8xf32, #tpu.memory_space<vmem>>, %arg3: memref<1x1x16x8xf32, #tpu.memory_space<vmem>>, %arg4: memref<1x1x16x8xf32, #tpu.memory_space<vmem>>, %arg5: memref<72x8xbf16, #tpu.memory_space<vmem>>, %arg6: memref<1x8xf32, #tpu.memory_space<vmem>>, %arg7: memref<1x8xf32, #tpu.memory_space<vmem>>, %arg8: memref<1x8x16x8xf32, #tpu.memory_space<vmem>>, %arg9: memref<1x1x2x8xf32, #tpu.memory_space<vmem>>, %arg10: memref<10x18x8xbf16, #tpu.memory_space<vmem>>) attributes {dimension_semantics = [#tpu.dimension_semantics<parallel>, #tpu.dimension_semantics<parallel>], iteration_bounds = array<i64: 2, 2>, scalar_prefetch = 0 : i64, scratch_operands = 1 : i64, tpu.core_type = #tpu.core_type<tc>, window_params = [{transform_indices = @transform_0, window_bounds = array<i64: 1, 8, 16, 8>}, {transform_indices = @transform_1, window_bounds = array<i64: 1, 1, 16, 8>}, {transform_indices = @transform_2, window_bounds = array<i64: 1, 1, 16, 8>}, {pipeline_mode = #tpu.pipeline_mode<synchronous>, transform_indices = @transform_3, window_bounds = array<i64: 72, 8>}, {pipeline_mode = #tpu.pipeline_mode<synchronous>, transform_indices = @transform_4, window_bounds = array<i64: 1, 8>}, {pipeline_mode = #tpu.pipeline_mode<synchronous>, transform_indices = @transform_5, window_bounds = array<i64: 1, 8>}, {transform_indices = @transform_6, window_bounds = array<i64: 1, 8, 16, 8>}, {transform_indices = @transform_7, window_bounds = array<i64: 1, 1, 2, 8>}]} {
    %cst = arith.constant 0.000000e+00 : bf16
    %0 = vector.broadcast %cst : bf16 to vector<10x18x8xbf16>
    %c0 = arith.constant 0 : index
    %c0_0 = arith.constant 0 : index
    %c0_1 = arith.constant 0 : index
    %1 = vector.load %arg10[%c0, %c0_0, %c0_1] : memref<10x18x8xbf16, #tpu.memory_space<vmem>>, vector<10x18x8xbf16>
    tpu.vector_store %arg10[%c0, %c0_0, %c0_1], %0 {strides = array<i32>} : memref<10x18x8xbf16, #tpu.memory_space<vmem>>, vector<10x18x8xbf16>,
    %c0_2 = arith.constant 0 : index
    %c0_3 = arith.constant 0 : index
    %c0_4 = arith.constant 0 : index
    %c0_5 = arith.constant 0 : index
    %2 = vector.load %arg2[%c0_2, %c0_3, %c0_4, %c0_5] : memref<1x8x16x8xf32, #tpu.memory_space<vmem>>, vector<1x8x16x8xf32>
    %3 = vector.shape_cast %2 : vector<1x8x16x8xf32> to vector<8x16x8xf32>
    %c0_6 = arith.constant 0 : index
    %c0_7 = arith.constant 0 : index
    %4 = vector.load %arg6[%c0_6, %c0_7] : memref<1x8xf32, #tpu.memory_space<vmem>>, vector<1x8xf32>
    %5 = vector.shape_cast %4 : vector<1x8xf32> to vector<1x1x8xf32>
    %6 = vector.broadcast %5 : vector<1x1x8xf32> to vector<8x16x8xf32>
    %7 = arith.mulf %3, %6 : vector<8x16x8xf32>
    %c0_8 = arith.constant 0 : index
    %c0_9 = arith.constant 0 : index
    %8 = vector.load %arg7[%c0_8, %c0_9] : memref<1x8xf32, #tpu.memory_space<vmem>>, vector<1x8xf32>
    %9 = vector.shape_cast %8 : vector<1x8xf32> to vector<1x1x8xf32>
    %10 = vector.broadcast %9 : vector<1x1x8xf32> to vector<8x16x8xf32>
    %11 = arith.addf %7, %10 : vector<8x16x8xf32>
    %cst_10 = arith.constant 0.000000e+00 : f32
    %12 = vector.broadcast %cst_10 : f32 to vector<8x16x8xf32>
    %13 = arith.maximumf %11, %12 : vector<8x16x8xf32>
    %14 = arith.truncf %13 : vector<8x16x8xf32> to vector<8x16x8xbf16>
    %c1 = arith.constant 1 : index
    %c1_11 = arith.constant 1 : index
    %c0_12 = arith.constant 0 : index
    %15 = vector.load %arg10[%c1, %c1_11, %c0_12] : memref<10x18x8xbf16, #tpu.memory_space<vmem>>, vector<8x16x8xbf16>
    tpu.vector_store %arg10[%c1, %c1_11, %c0_12], %14 {strides = array<i32>} : memref<10x18x8xbf16, #tpu.memory_space<vmem>>, vector<8x16x8xbf16>,
    %c0_i32 = arith.constant 0 : i32
    %16 = arith.cmpi sgt, %arg1, %c0_i32 : i32
    %17 = arith.extui %16 : i1 to i32
    %c0_i32_13 = arith.constant 0 : i32
    %18 = arith.cmpi ne, %17, %c0_i32_13 : i32
    scf.if %18 {
      %c0_58 = arith.constant 0 : index
      %c0_59 = arith.constant 0 : index
      %c0_60 = arith.constant 0 : index
      %c0_61 = arith.constant 0 : index
      %58 = vector.load %arg3[%c0_58, %c0_59, %c0_60, %c0_61] : memref<1x1x16x8xf32, #tpu.memory_space<vmem>>, vector<1x1x16x8xf32>
      %59 = vector.shape_cast %58 : vector<1x1x16x8xf32> to vector<1x16x8xf32>
      %c0_62 = arith.constant 0 : index
      %c0_63 = arith.constant 0 : index
      %60 = vector.load %arg6[%c0_62, %c0_63] : memref<1x8xf32, #tpu.memory_space<vmem>>, vector<1x8xf32>
      %61 = vector.shape_cast %60 : vector<1x8xf32> to vector<1x1x8xf32>
      %62 = vector.broadcast %61 : vector<1x1x8xf32> to vector<1x16x8xf32>
      %63 = arith.mulf %59, %62 : vector<1x16x8xf32>
      %c0_64 = arith.constant 0 : index
      %c0_65 = arith.constant 0 : index
      %64 = vector.load %arg7[%c0_64, %c0_65] : memref<1x8xf32, #tpu.memory_space<vmem>>, vector<1x8xf32>
      %65 = vector.shape_cast %64 : vector<1x8xf32> to vector<1x1x8xf32>
      %66 = vector.broadcast %65 : vector<1x1x8xf32> to vector<1x16x8xf32>
      %67 = arith.addf %63, %66 : vector<1x16x8xf32>
      %cst_66 = arith.constant 0.000000e+00 : f32
      %68 = vector.broadcast %cst_66 : f32 to vector<1x16x8xf32>
      %69 = arith.maximumf %67, %68 : vector<1x16x8xf32>
      %70 = arith.truncf %69 : vector<1x16x8xf32> to vector<1x16x8xbf16>
      %c0_67 = arith.constant 0 : index
      %c1_68 = arith.constant 1 : index
      %c0_69 = arith.constant 0 : index
      %71 = vector.load %arg10[%c0_67, %c1_68, %c0_69] : memref<10x18x8xbf16, #tpu.memory_space<vmem>>, vector<1x16x8xbf16>
      tpu.vector_store %arg10[%c0_67, %c1_68, %c0_69], %70 {strides = array<i32>} : memref<10x18x8xbf16, #tpu.memory_space<vmem>>, vector<1x16x8xbf16>,
    } else {
    }
    %c1_i32 = arith.constant 1 : i32
    %19 = arith.cmpi slt, %arg1, %c1_i32 : i32
    %20 = arith.extui %19 : i1 to i32
    %c0_i32_14 = arith.constant 0 : i32
    %21 = arith.cmpi ne, %20, %c0_i32_14 : i32
    scf.if %21 {
      %c0_58 = arith.constant 0 : index
      %c0_59 = arith.constant 0 : index
      %c0_60 = arith.constant 0 : index
      %c0_61 = arith.constant 0 : index
      %58 = vector.load %arg4[%c0_58, %c0_59, %c0_60, %c0_61] : memref<1x1x16x8xf32, #tpu.memory_space<vmem>>, vector<1x1x16x8xf32>
      %59 = vector.shape_cast %58 : vector<1x1x16x8xf32> to vector<1x16x8xf32>
      %c0_62 = arith.constant 0 : index
      %c0_63 = arith.constant 0 : index
      %60 = vector.load %arg6[%c0_62, %c0_63] : memref<1x8xf32, #tpu.memory_space<vmem>>, vector<1x8xf32>
      %61 = vector.shape_cast %60 : vector<1x8xf32> to vector<1x1x8xf32>
      %62 = vector.broadcast %61 : vector<1x1x8xf32> to vector<1x16x8xf32>
      %63 = arith.mulf %59, %62 : vector<1x16x8xf32>
      %c0_64 = arith.constant 0 : index
      %c0_65 = arith.constant 0 : index
      %64 = vector.load %arg7[%c0_64, %c0_65] : memref<1x8xf32, #tpu.memory_space<vmem>>, vector<1x8xf32>
      %65 = vector.shape_cast %64 : vector<1x8xf32> to vector<1x1x8xf32>
      %66 = vector.broadcast %65 : vector<1x1x8xf32> to vector<1x16x8xf32>
      %67 = arith.addf %63, %66 : vector<1x16x8xf32>
      %cst_66 = arith.constant 0.000000e+00 : f32
      %68 = vector.broadcast %cst_66 : f32 to vector<1x16x8xf32>
      %69 = arith.maximumf %67, %68 : vector<1x16x8xf32>
      %70 = arith.truncf %69 : vector<1x16x8xf32> to vector<1x16x8xbf16>
      %c9 = arith.constant 9 : index
      %c1_67 = arith.constant 1 : index
      %c0_68 = arith.constant 0 : index
      %71 = vector.load %arg10[%c9, %c1_67, %c0_68] : memref<10x18x8xbf16, #tpu.memory_space<vmem>>, vector<1x16x8xbf16>
      tpu.vector_store %arg10[%c9, %c1_67, %c0_68], %70 {strides = array<i32>} : memref<10x18x8xbf16, #tpu.memory_space<vmem>>, vector<1x16x8xbf16>,
    } else {
    }
    %c0_15 = arith.constant 0 : index
    %c0_16 = arith.constant 0 : index
    %c0_17 = arith.constant 0 : index
    %22 = vector.load %arg10[%c0_15, %c0_16, %c0_17] : memref<10x18x8xbf16, #tpu.memory_space<vmem>>, vector<8x16x8xbf16>
    %23 = vector.shape_cast %22 : vector<8x16x8xbf16> to vector<128x8xbf16>
    %c0_18 = arith.constant 0 : index
    %c1_19 = arith.constant 1 : index
    %c0_20 = arith.constant 0 : index
    %24 = vector.load %arg10[%c0_18, %c1_19, %c0_20] : memref<10x18x8xbf16, #tpu.memory_space<vmem>>, vector<8x16x8xbf16>
    %25 = vector.shape_cast %24 : vector<8x16x8xbf16> to vector<128x8xbf16>
    %c0_21 = arith.constant 0 : index
    %c2 = arith.constant 2 : index
    %c0_22 = arith.constant 0 : index
    %26 = vector.load %arg10[%c0_21, %c2, %c0_22] : memref<10x18x8xbf16, #tpu.memory_space<vmem>>, vector<8x16x8xbf16>
    %27 = vector.shape_cast %26 : vector<8x16x8xbf16> to vector<128x8xbf16>
    %c1_23 = arith.constant 1 : index
    %c0_24 = arith.constant 0 : index
    %c0_25 = arith.constant 0 : index
    %28 = vector.load %arg10[%c1_23, %c0_24, %c0_25] : memref<10x18x8xbf16, #tpu.memory_space<vmem>>, vector<8x16x8xbf16>
    %29 = vector.shape_cast %28 : vector<8x16x8xbf16> to vector<128x8xbf16>
    %c1_26 = arith.constant 1 : index
    %c1_27 = arith.constant 1 : index
    %c0_28 = arith.constant 0 : index
    %30 = vector.load %arg10[%c1_26, %c1_27, %c0_28] : memref<10x18x8xbf16, #tpu.memory_space<vmem>>, vector<8x16x8xbf16>
    %31 = vector.shape_cast %30 : vector<8x16x8xbf16> to vector<128x8xbf16>
    %c1_29 = arith.constant 1 : index
    %c2_30 = arith.constant 2 : index
    %c0_31 = arith.constant 0 : index
    %32 = vector.load %arg10[%c1_29, %c2_30, %c0_31] : memref<10x18x8xbf16, #tpu.memory_space<vmem>>, vector<8x16x8xbf16>
    %33 = vector.shape_cast %32 : vector<8x16x8xbf16> to vector<128x8xbf16>
    %c2_32 = arith.constant 2 : index
    %c0_33 = arith.constant 0 : index
    %c0_34 = arith.constant 0 : index
    %34 = vector.load %arg10[%c2_32, %c0_33, %c0_34] : memref<10x18x8xbf16, #tpu.memory_space<vmem>>, vector<8x16x8xbf16>
    %35 = vector.shape_cast %34 : vector<8x16x8xbf16> to vector<128x8xbf16>
    %c2_35 = arith.constant 2 : index
    %c1_36 = arith.constant 1 : index
    %c0_37 = arith.constant 0 : index
    %36 = vector.load %arg10[%c2_35, %c1_36, %c0_37] : memref<10x18x8xbf16, #tpu.memory_space<vmem>>, vector<8x16x8xbf16>
    %37 = vector.shape_cast %36 : vector<8x16x8xbf16> to vector<128x8xbf16>
    %c2_38 = arith.constant 2 : index
    %c2_39 = arith.constant 2 : index
    %c0_40 = arith.constant 0 : index
    %38 = vector.load %arg10[%c2_38, %c2_39, %c0_40] : memref<10x18x8xbf16, #tpu.memory_space<vmem>>, vector<8x16x8xbf16>
    %39 = vector.shape_cast %38 : vector<8x16x8xbf16> to vector<128x8xbf16>
    %40 = tpu.concatenate %23, %25, %27, %29, %31, %33, %35, %37, %39 in 1 : vector<128x8xbf16>, vector<128x8xbf16>, vector<128x8xbf16>, vector<128x8xbf16>, vector<128x8xbf16>, vector<128x8xbf16>, vector<128x8xbf16>, vector<128x8xbf16>, vector<128x8xbf16> -> vector<128x72xbf16>
    %c0_41 = arith.constant 0 : index
    %c0_42 = arith.constant 0 : index
    %41 = vector.load %arg5[%c0_41, %c0_42] : memref<72x8xbf16, #tpu.memory_space<vmem>>, vector<72x8xbf16>
    %cst_43 = arith.constant dense<0.000000e+00> : vector<128x8xf32>
    %42 = tpu.matmul %40, %41, %cst_43 {dimension_numbers = #tpu.dot_dimension_numbers<[1], [0], [0], [1], [0, 0, 1, 1], [], []>} : vector<128x72xbf16>, vector<72x8xbf16>, vector<128x8xf32> -> vector<128x8xf32>
    %43 = vector.shape_cast %42 : vector<128x8xf32> to vector<8x16x8xf32>
    %c0_44 = arith.constant 0 : index
    %c0_45 = arith.constant 0 : index
    %c0_46 = arith.constant 0 : index
    %c0_47 = arith.constant 0 : index
    %44 = vector.load %arg8[%c0_44, %c0_45, %c0_46, %c0_47] : memref<1x8x16x8xf32, #tpu.memory_space<vmem>>, vector<1x8x16x8xf32>
    %45 = vector.shape_cast %44 : vector<1x8x16x8xf32> to vector<8x16x8xf32>
    %46 = vector.shape_cast %43 : vector<8x16x8xf32> to vector<1x8x16x8xf32>
    tpu.vector_store %arg8[%c0_44, %c0_45, %c0_46, %c0_47], %46 {strides = array<i32>} : memref<1x8x16x8xf32, #tpu.memory_space<vmem>>, vector<1x8x16x8xf32>,
    %cst_48 = arith.constant dense<0.000000e+00> : vector<8xf32>
    %47 = vector.multi_reduction <add>, %42, %cst_48 [0] : vector<128x8xf32> to vector<8xf32>
    %48 = vector.shape_cast %47 : vector<8xf32> to vector<1x8xf32>
    %c0_49 = arith.constant 0 : index
    %c0_50 = arith.constant 0 : index
    %c0_51 = arith.constant 0 : index
    %c0_52 = arith.constant 0 : index
    %49 = vector.load %arg9[%c0_49, %c0_50, %c0_51, %c0_52] : memref<1x1x2x8xf32, #tpu.memory_space<vmem>>, vector<1x1x1x8xf32>
    %50 = vector.shape_cast %49 : vector<1x1x1x8xf32> to vector<1x8xf32>
    %51 = vector.shape_cast %48 : vector<1x8xf32> to vector<1x1x1x8xf32>
    tpu.vector_store %arg9[%c0_49, %c0_50, %c0_51, %c0_52], %51 {strides = array<i32>} : memref<1x1x2x8xf32, #tpu.memory_space<vmem>>, vector<1x1x1x8xf32>,
    %52 = arith.mulf %42, %42 : vector<128x8xf32>
    %cst_53 = arith.constant dense<0.000000e+00> : vector<8xf32>
    %53 = vector.multi_reduction <add>, %52, %cst_53 [0] : vector<128x8xf32> to vector<8xf32>
    %54 = vector.shape_cast %53 : vector<8xf32> to vector<1x8xf32>
    %c0_54 = arith.constant 0 : index
    %c0_55 = arith.constant 0 : index
    %c1_56 = arith.constant 1 : index
    %c0_57 = arith.constant 0 : index
    %55 = vector.load %arg9[%c0_54, %c0_55, %c1_56, %c0_57] : memref<1x1x2x8xf32, #tpu.memory_space<vmem>>, vector<1x1x1x8xf32>
    %56 = vector.shape_cast %55 : vector<1x1x1x8xf32> to vector<1x8xf32>
    %57 = vector.shape_cast %54 : vector<1x8xf32> to vector<1x1x1x8xf32>
    tpu.vector_store %arg9[%c0_54, %c0_55, %c1_56, %c0_57], %57 {strides = array<i32>} : memref<1x1x2x8xf32, #tpu.memory_space<vmem>>, vector<1x1x1x8xf32>,
    return
  }
  func.func @transform_0(%arg0: i32, %arg1: i32) -> (i32, i32, i32, i32) {
    %c0_i32 = arith.constant 0 : i32
    %c0_i32_0 = arith.constant 0 : i32
    %c0_i32_1 = arith.constant 0 : i32
    return %arg0, %arg1, %c0_i32, %c0_i32_0 : i32, i32, i32, i32
  }
  func.func @transform_1(%arg0: i32, %arg1: i32) -> (i32, i32, i32, i32) {
    %c8_i32 = arith.constant 8 : i32
    %0 = arith.muli %arg1, %c8_i32 : i32
    %c1_i32 = arith.constant 1 : i32
    %1 = arith.subi %0, %c1_i32 : i32
    %c0_i32 = arith.constant 0 : i32
    %2 = arith.maxsi %1, %c0_i32 : i32
    %c0_i32_0 = arith.constant 0 : i32
    %c0_i32_1 = arith.constant 0 : i32
    %c0_i32_2 = arith.constant 0 : i32
    return %arg0, %2, %c0_i32_0, %c0_i32_1 : i32, i32, i32, i32
  }
  func.func @transform_2(%arg0: i32, %arg1: i32) -> (i32, i32, i32, i32) {
    %c1_i32 = arith.constant 1 : i32
    %0 = arith.addi %arg1, %c1_i32 : i32
    %c8_i32 = arith.constant 8 : i32
    %1 = arith.muli %0, %c8_i32 : i32
    %c15_i32 = arith.constant 15 : i32
    %2 = arith.minsi %1, %c15_i32 : i32
    %c0_i32 = arith.constant 0 : i32
    %c0_i32_0 = arith.constant 0 : i32
    %c0_i32_1 = arith.constant 0 : i32
    return %arg0, %2, %c0_i32, %c0_i32_0 : i32, i32, i32, i32
  }
  func.func @transform_3(%arg0: i32, %arg1: i32) -> (i32, i32) {
    %c0_i32 = arith.constant 0 : i32
    %c0_i32_0 = arith.constant 0 : i32
    %c0_i32_1 = arith.constant 0 : i32
    return %c0_i32, %c0_i32_0 : i32, i32
  }
  func.func @transform_4(%arg0: i32, %arg1: i32) -> (i32, i32) {
    %c0_i32 = arith.constant 0 : i32
    %c0_i32_0 = arith.constant 0 : i32
    %c0_i32_1 = arith.constant 0 : i32
    return %c0_i32, %c0_i32_0 : i32, i32
  }
  func.func @transform_5(%arg0: i32, %arg1: i32) -> (i32, i32) {
    %c0_i32 = arith.constant 0 : i32
    %c0_i32_0 = arith.constant 0 : i32
    %c0_i32_1 = arith.constant 0 : i32
    return %c0_i32, %c0_i32_0 : i32, i32
  }
  func.func @transform_6(%arg0: i32, %arg1: i32) -> (i32, i32, i32, i32) {
    %c0_i32 = arith.constant 0 : i32
    %c0_i32_0 = arith.constant 0 : i32
    %c0_i32_1 = arith.constant 0 : i32
    return %arg0, %arg1, %c0_i32, %c0_i32_0 : i32, i32, i32, i32
  }
  func.func @transform_7(%arg0: i32, %arg1: i32) -> (i32, i32, i32, i32) {
    %c0_i32 = arith.constant 0 : i32
    %c0_i32_0 = arith.constant 0 : i32
    %c0_i32_1 = arith.constant 0 : i32
    return %arg0, %arg1, %c0_i32, %c0_i32_0 : i32, i32, i32, i32
  }
}

module attributes {stable_mosaic.version = 11 : i64} {
  func.func @_conv_stats_kernel(%arg0: i32, %arg1: i32, %arg2: memref<1x8x16x4xbf16, #tpu.memory_space<vmem>>, %arg3: memref<1x1x16x4xbf16, #tpu.memory_space<vmem>>, %arg4: memref<1x1x16x4xbf16, #tpu.memory_space<vmem>>, %arg5: memref<36x8xbf16, #tpu.memory_space<vmem>>, %arg6: memref<1x4xf32, #tpu.memory_space<vmem>>, %arg7: memref<1x4xf32, #tpu.memory_space<vmem>>, %arg8: memref<1x8x16x8xf32, #tpu.memory_space<vmem>>, %arg9: memref<1x1x2x8xf32, #tpu.memory_space<vmem>>, %arg10: memref<10x18x4xbf16, #tpu.memory_space<vmem>>) attributes {dimension_semantics = [#tpu.dimension_semantics<parallel>, #tpu.dimension_semantics<parallel>], iteration_bounds = array<i64: 2, 2>, scalar_prefetch = 0 : i64, scratch_operands = 1 : i64, tpu.core_type = #tpu.core_type<tc>, window_params = [{transform_indices = @transform_0, window_bounds = array<i64: 1, 8, 16, 4>}, {transform_indices = @transform_1, window_bounds = array<i64: 1, 1, 16, 4>}, {transform_indices = @transform_2, window_bounds = array<i64: 1, 1, 16, 4>}, {pipeline_mode = #tpu.pipeline_mode<synchronous>, transform_indices = @transform_3, window_bounds = array<i64: 36, 8>}, {pipeline_mode = #tpu.pipeline_mode<synchronous>, transform_indices = @transform_4, window_bounds = array<i64: 1, 4>}, {pipeline_mode = #tpu.pipeline_mode<synchronous>, transform_indices = @transform_5, window_bounds = array<i64: 1, 4>}, {transform_indices = @transform_6, window_bounds = array<i64: 1, 8, 16, 8>}, {transform_indices = @transform_7, window_bounds = array<i64: 1, 1, 2, 8>}]} {
    %cst = arith.constant 0.000000e+00 : bf16
    %0 = vector.broadcast %cst : bf16 to vector<10x18x4xbf16>
    %c0 = arith.constant 0 : index
    %c0_0 = arith.constant 0 : index
    %c0_1 = arith.constant 0 : index
    %1 = vector.load %arg10[%c0, %c0_0, %c0_1] : memref<10x18x4xbf16, #tpu.memory_space<vmem>>, vector<10x18x4xbf16>
    tpu.vector_store %arg10[%c0, %c0_0, %c0_1], %0 {strides = array<i32>} : memref<10x18x4xbf16, #tpu.memory_space<vmem>>, vector<10x18x4xbf16>,
    %c0_2 = arith.constant 0 : index
    %c0_3 = arith.constant 0 : index
    %c0_4 = arith.constant 0 : index
    %c0_5 = arith.constant 0 : index
    %2 = vector.load %arg2[%c0_2, %c0_3, %c0_4, %c0_5] : memref<1x8x16x4xbf16, #tpu.memory_space<vmem>>, vector<1x8x16x4xbf16>
    %3 = vector.shape_cast %2 : vector<1x8x16x4xbf16> to vector<8x16x4xbf16>
    %c1 = arith.constant 1 : index
    %c1_6 = arith.constant 1 : index
    %c0_7 = arith.constant 0 : index
    %4 = vector.load %arg10[%c1, %c1_6, %c0_7] : memref<10x18x4xbf16, #tpu.memory_space<vmem>>, vector<8x16x4xbf16>
    tpu.vector_store %arg10[%c1, %c1_6, %c0_7], %3 {strides = array<i32>} : memref<10x18x4xbf16, #tpu.memory_space<vmem>>, vector<8x16x4xbf16>,
    %c0_i32 = arith.constant 0 : i32
    %5 = arith.cmpi sgt, %arg1, %c0_i32 : i32
    %6 = arith.extui %5 : i1 to i32
    %c0_i32_8 = arith.constant 0 : i32
    %7 = arith.cmpi ne, %6, %c0_i32_8 : i32
    scf.if %7 {
      %c0_53 = arith.constant 0 : index
      %c0_54 = arith.constant 0 : index
      %c0_55 = arith.constant 0 : index
      %c0_56 = arith.constant 0 : index
      %47 = vector.load %arg3[%c0_53, %c0_54, %c0_55, %c0_56] : memref<1x1x16x4xbf16, #tpu.memory_space<vmem>>, vector<1x1x16x4xbf16>
      %48 = vector.shape_cast %47 : vector<1x1x16x4xbf16> to vector<1x16x4xbf16>
      %c0_57 = arith.constant 0 : index
      %c1_58 = arith.constant 1 : index
      %c0_59 = arith.constant 0 : index
      %49 = vector.load %arg10[%c0_57, %c1_58, %c0_59] : memref<10x18x4xbf16, #tpu.memory_space<vmem>>, vector<1x16x4xbf16>
      tpu.vector_store %arg10[%c0_57, %c1_58, %c0_59], %48 {strides = array<i32>} : memref<10x18x4xbf16, #tpu.memory_space<vmem>>, vector<1x16x4xbf16>,
    } else {
    }
    %c1_i32 = arith.constant 1 : i32
    %8 = arith.cmpi slt, %arg1, %c1_i32 : i32
    %9 = arith.extui %8 : i1 to i32
    %c0_i32_9 = arith.constant 0 : i32
    %10 = arith.cmpi ne, %9, %c0_i32_9 : i32
    scf.if %10 {
      %c0_53 = arith.constant 0 : index
      %c0_54 = arith.constant 0 : index
      %c0_55 = arith.constant 0 : index
      %c0_56 = arith.constant 0 : index
      %47 = vector.load %arg4[%c0_53, %c0_54, %c0_55, %c0_56] : memref<1x1x16x4xbf16, #tpu.memory_space<vmem>>, vector<1x1x16x4xbf16>
      %48 = vector.shape_cast %47 : vector<1x1x16x4xbf16> to vector<1x16x4xbf16>
      %c9 = arith.constant 9 : index
      %c1_57 = arith.constant 1 : index
      %c0_58 = arith.constant 0 : index
      %49 = vector.load %arg10[%c9, %c1_57, %c0_58] : memref<10x18x4xbf16, #tpu.memory_space<vmem>>, vector<1x16x4xbf16>
      tpu.vector_store %arg10[%c9, %c1_57, %c0_58], %48 {strides = array<i32>} : memref<10x18x4xbf16, #tpu.memory_space<vmem>>, vector<1x16x4xbf16>,
    } else {
    }
    %c0_10 = arith.constant 0 : index
    %c0_11 = arith.constant 0 : index
    %c0_12 = arith.constant 0 : index
    %11 = vector.load %arg10[%c0_10, %c0_11, %c0_12] : memref<10x18x4xbf16, #tpu.memory_space<vmem>>, vector<8x16x4xbf16>
    %12 = vector.shape_cast %11 : vector<8x16x4xbf16> to vector<128x4xbf16>
    %c0_13 = arith.constant 0 : index
    %c1_14 = arith.constant 1 : index
    %c0_15 = arith.constant 0 : index
    %13 = vector.load %arg10[%c0_13, %c1_14, %c0_15] : memref<10x18x4xbf16, #tpu.memory_space<vmem>>, vector<8x16x4xbf16>
    %14 = vector.shape_cast %13 : vector<8x16x4xbf16> to vector<128x4xbf16>
    %c0_16 = arith.constant 0 : index
    %c2 = arith.constant 2 : index
    %c0_17 = arith.constant 0 : index
    %15 = vector.load %arg10[%c0_16, %c2, %c0_17] : memref<10x18x4xbf16, #tpu.memory_space<vmem>>, vector<8x16x4xbf16>
    %16 = vector.shape_cast %15 : vector<8x16x4xbf16> to vector<128x4xbf16>
    %c1_18 = arith.constant 1 : index
    %c0_19 = arith.constant 0 : index
    %c0_20 = arith.constant 0 : index
    %17 = vector.load %arg10[%c1_18, %c0_19, %c0_20] : memref<10x18x4xbf16, #tpu.memory_space<vmem>>, vector<8x16x4xbf16>
    %18 = vector.shape_cast %17 : vector<8x16x4xbf16> to vector<128x4xbf16>
    %c1_21 = arith.constant 1 : index
    %c1_22 = arith.constant 1 : index
    %c0_23 = arith.constant 0 : index
    %19 = vector.load %arg10[%c1_21, %c1_22, %c0_23] : memref<10x18x4xbf16, #tpu.memory_space<vmem>>, vector<8x16x4xbf16>
    %20 = vector.shape_cast %19 : vector<8x16x4xbf16> to vector<128x4xbf16>
    %c1_24 = arith.constant 1 : index
    %c2_25 = arith.constant 2 : index
    %c0_26 = arith.constant 0 : index
    %21 = vector.load %arg10[%c1_24, %c2_25, %c0_26] : memref<10x18x4xbf16, #tpu.memory_space<vmem>>, vector<8x16x4xbf16>
    %22 = vector.shape_cast %21 : vector<8x16x4xbf16> to vector<128x4xbf16>
    %c2_27 = arith.constant 2 : index
    %c0_28 = arith.constant 0 : index
    %c0_29 = arith.constant 0 : index
    %23 = vector.load %arg10[%c2_27, %c0_28, %c0_29] : memref<10x18x4xbf16, #tpu.memory_space<vmem>>, vector<8x16x4xbf16>
    %24 = vector.shape_cast %23 : vector<8x16x4xbf16> to vector<128x4xbf16>
    %c2_30 = arith.constant 2 : index
    %c1_31 = arith.constant 1 : index
    %c0_32 = arith.constant 0 : index
    %25 = vector.load %arg10[%c2_30, %c1_31, %c0_32] : memref<10x18x4xbf16, #tpu.memory_space<vmem>>, vector<8x16x4xbf16>
    %26 = vector.shape_cast %25 : vector<8x16x4xbf16> to vector<128x4xbf16>
    %c2_33 = arith.constant 2 : index
    %c2_34 = arith.constant 2 : index
    %c0_35 = arith.constant 0 : index
    %27 = vector.load %arg10[%c2_33, %c2_34, %c0_35] : memref<10x18x4xbf16, #tpu.memory_space<vmem>>, vector<8x16x4xbf16>
    %28 = vector.shape_cast %27 : vector<8x16x4xbf16> to vector<128x4xbf16>
    %29 = tpu.concatenate %12, %14, %16, %18, %20, %22, %24, %26, %28 in 1 : vector<128x4xbf16>, vector<128x4xbf16>, vector<128x4xbf16>, vector<128x4xbf16>, vector<128x4xbf16>, vector<128x4xbf16>, vector<128x4xbf16>, vector<128x4xbf16>, vector<128x4xbf16> -> vector<128x36xbf16>
    %c0_36 = arith.constant 0 : index
    %c0_37 = arith.constant 0 : index
    %30 = vector.load %arg5[%c0_36, %c0_37] : memref<36x8xbf16, #tpu.memory_space<vmem>>, vector<36x8xbf16>
    %cst_38 = arith.constant dense<0.000000e+00> : vector<128x8xf32>
    %31 = tpu.matmul %29, %30, %cst_38 {dimension_numbers = #tpu.dot_dimension_numbers<[1], [0], [0], [1], [0, 0, 1, 1], [], []>} : vector<128x36xbf16>, vector<36x8xbf16>, vector<128x8xf32> -> vector<128x8xf32>
    %32 = vector.shape_cast %31 : vector<128x8xf32> to vector<8x16x8xf32>
    %c0_39 = arith.constant 0 : index
    %c0_40 = arith.constant 0 : index
    %c0_41 = arith.constant 0 : index
    %c0_42 = arith.constant 0 : index
    %33 = vector.load %arg8[%c0_39, %c0_40, %c0_41, %c0_42] : memref<1x8x16x8xf32, #tpu.memory_space<vmem>>, vector<1x8x16x8xf32>
    %34 = vector.shape_cast %33 : vector<1x8x16x8xf32> to vector<8x16x8xf32>
    %35 = vector.shape_cast %32 : vector<8x16x8xf32> to vector<1x8x16x8xf32>
    tpu.vector_store %arg8[%c0_39, %c0_40, %c0_41, %c0_42], %35 {strides = array<i32>} : memref<1x8x16x8xf32, #tpu.memory_space<vmem>>, vector<1x8x16x8xf32>,
    %cst_43 = arith.constant dense<0.000000e+00> : vector<8xf32>
    %36 = vector.multi_reduction <add>, %31, %cst_43 [0] : vector<128x8xf32> to vector<8xf32>
    %37 = vector.shape_cast %36 : vector<8xf32> to vector<1x8xf32>
    %c0_44 = arith.constant 0 : index
    %c0_45 = arith.constant 0 : index
    %c0_46 = arith.constant 0 : index
    %c0_47 = arith.constant 0 : index
    %38 = vector.load %arg9[%c0_44, %c0_45, %c0_46, %c0_47] : memref<1x1x2x8xf32, #tpu.memory_space<vmem>>, vector<1x1x1x8xf32>
    %39 = vector.shape_cast %38 : vector<1x1x1x8xf32> to vector<1x8xf32>
    %40 = vector.shape_cast %37 : vector<1x8xf32> to vector<1x1x1x8xf32>
    tpu.vector_store %arg9[%c0_44, %c0_45, %c0_46, %c0_47], %40 {strides = array<i32>} : memref<1x1x2x8xf32, #tpu.memory_space<vmem>>, vector<1x1x1x8xf32>,
    %41 = arith.mulf %31, %31 : vector<128x8xf32>
    %cst_48 = arith.constant dense<0.000000e+00> : vector<8xf32>
    %42 = vector.multi_reduction <add>, %41, %cst_48 [0] : vector<128x8xf32> to vector<8xf32>
    %43 = vector.shape_cast %42 : vector<8xf32> to vector<1x8xf32>
    %c0_49 = arith.constant 0 : index
    %c0_50 = arith.constant 0 : index
    %c1_51 = arith.constant 1 : index
    %c0_52 = arith.constant 0 : index
    %44 = vector.load %arg9[%c0_49, %c0_50, %c1_51, %c0_52] : memref<1x1x2x8xf32, #tpu.memory_space<vmem>>, vector<1x1x1x8xf32>
    %45 = vector.shape_cast %44 : vector<1x1x1x8xf32> to vector<1x8xf32>
    %46 = vector.shape_cast %43 : vector<1x8xf32> to vector<1x1x1x8xf32>
    tpu.vector_store %arg9[%c0_49, %c0_50, %c1_51, %c0_52], %46 {strides = array<i32>} : memref<1x1x2x8xf32, #tpu.memory_space<vmem>>, vector<1x1x1x8xf32>,
    return
  }
  func.func @transform_0(%arg0: i32, %arg1: i32) -> (i32, i32, i32, i32) {
    %c0_i32 = arith.constant 0 : i32
    %c0_i32_0 = arith.constant 0 : i32
    %c0_i32_1 = arith.constant 0 : i32
    return %arg0, %arg1, %c0_i32, %c0_i32_0 : i32, i32, i32, i32
  }
  func.func @transform_1(%arg0: i32, %arg1: i32) -> (i32, i32, i32, i32) {
    %c8_i32 = arith.constant 8 : i32
    %0 = arith.muli %arg1, %c8_i32 : i32
    %c1_i32 = arith.constant 1 : i32
    %1 = arith.subi %0, %c1_i32 : i32
    %c0_i32 = arith.constant 0 : i32
    %2 = arith.maxsi %1, %c0_i32 : i32
    %c0_i32_0 = arith.constant 0 : i32
    %c0_i32_1 = arith.constant 0 : i32
    %c0_i32_2 = arith.constant 0 : i32
    return %arg0, %2, %c0_i32_0, %c0_i32_1 : i32, i32, i32, i32
  }
  func.func @transform_2(%arg0: i32, %arg1: i32) -> (i32, i32, i32, i32) {
    %c1_i32 = arith.constant 1 : i32
    %0 = arith.addi %arg1, %c1_i32 : i32
    %c8_i32 = arith.constant 8 : i32
    %1 = arith.muli %0, %c8_i32 : i32
    %c15_i32 = arith.constant 15 : i32
    %2 = arith.minsi %1, %c15_i32 : i32
    %c0_i32 = arith.constant 0 : i32
    %c0_i32_0 = arith.constant 0 : i32
    %c0_i32_1 = arith.constant 0 : i32
    return %arg0, %2, %c0_i32, %c0_i32_0 : i32, i32, i32, i32
  }
  func.func @transform_3(%arg0: i32, %arg1: i32) -> (i32, i32) {
    %c0_i32 = arith.constant 0 : i32
    %c0_i32_0 = arith.constant 0 : i32
    %c0_i32_1 = arith.constant 0 : i32
    return %c0_i32, %c0_i32_0 : i32, i32
  }
  func.func @transform_4(%arg0: i32, %arg1: i32) -> (i32, i32) {
    %c0_i32 = arith.constant 0 : i32
    %c0_i32_0 = arith.constant 0 : i32
    %c0_i32_1 = arith.constant 0 : i32
    return %c0_i32, %c0_i32_0 : i32, i32
  }
  func.func @transform_5(%arg0: i32, %arg1: i32) -> (i32, i32) {
    %c0_i32 = arith.constant 0 : i32
    %c0_i32_0 = arith.constant 0 : i32
    %c0_i32_1 = arith.constant 0 : i32
    return %c0_i32, %c0_i32_0 : i32, i32
  }
  func.func @transform_6(%arg0: i32, %arg1: i32) -> (i32, i32, i32, i32) {
    %c0_i32 = arith.constant 0 : i32
    %c0_i32_0 = arith.constant 0 : i32
    %c0_i32_1 = arith.constant 0 : i32
    return %arg0, %arg1, %c0_i32, %c0_i32_0 : i32, i32, i32, i32
  }
  func.func @transform_7(%arg0: i32, %arg1: i32) -> (i32, i32, i32, i32) {
    %c0_i32 = arith.constant 0 : i32
    %c0_i32_0 = arith.constant 0 : i32
    %c0_i32_1 = arith.constant 0 : i32
    return %arg0, %arg1, %c0_i32, %c0_i32_0 : i32, i32, i32, i32
  }
}

</mosaic_0001>

<llo_original>
// kernel: conv_block_forward.5
$region0: #{conv_block_forward.5}
  #allocation0 [shape = 'u32[]', space=smem, size = 0x4, offset = 0x4, fixed_abs, tag = 'smem constant byte address 0x4 - core index']
  #allocation1 [shape = 'u32[144,128]{1,0:T(1,128)}', space=vmem, size = 0x12000, scoped, tag = 'internal scratch']
  %s0 = inlined_call_operand.vmem [shape: f32[2,16,16,8], index: 0, kind: input, shape index: {}]
  %s1 = inlined_call_operand.vmem [shape: f32[1,8], index: 1, kind: input, shape index: {}]
  %s2 = inlined_call_operand.vmem [shape: f32[1,8], index: 2, kind: input, shape index: {}]
  %s3 = inlined_call_operand.vmem [shape: f32[2,16,16,8], index: 3, kind: output, shape index: {}]
  %s4 = sld [smem:[#allocation0]]
  $region45: #{conv_block_forward.5} parent=0
    _
  %s6 = ssub.s32 1, %s4
  %s7 = scalar_select 0, %s6, %s4
  loop: start=0, step=1, limit=6
  $region2: #{conv_block_forward.5} parent=0 // loop_pre_header
    _
  $region3: #{conv_block_forward.5} parent=0 // loop_header
    %s9 = sphi 0, %s13
    %p10 = scmp.ge.s32.totalorder %s9, 6
    %s16 = sphi 0, %s28
    %s17 = sphi 0, %s24
    %s18 = sphi 0, %s16
    %s19 = sphi 0, %s17
    %s20 = sphi 0, %s18
    %s21 = sphi 0, %s19
    %s33 = sphi 0, %s35
    %s36 = sphi 0, %s33
    %s37 = sphi 0, %s36
    %s53 = sphi 0, %s37
    %s57 = sphi 0, %s57
    %s59 = sphi 0, %s57
    %s60 = sphi 0, %s59
    %s74 = sphi 0, %s60
    %s78 = sphi 0, %s78
    %s80 = sphi 0, %s78
    %s81 = sphi 0, %s80
    %s95 = sphi 0, %s81
    %s103 = sphi 0, %s105
    %s106 = sphi 0, %s103
    %s107 = sphi 0, %s106
    %s123 = sphi 0, %s107
  $region4: #{conv_block_forward.5} parent=0 // loop_header_branch
    %12 = sbr.rel (%p10) target = $region8
  $region5: #{conv_block_forward.5} parent=0 // loop_body
    %s14 = ssub.s32 %s9, 1
    %s15 = ssub.s32 %s9, 2
    %s22 = sadd.s32 1, %s17
    %p23 = scmp.ge.s32.totalorder %s22, 2
    %s24 = scalar_select %p23, 0, %s22
    %s25 = sadd.s32 1, %s16
    %s26 = scalar_select %p23, %s25, %s16
    %p27 = scmp.ge.s32.totalorder %s26, 2
    %s28 = scalar_select %p27, 0, %s26
    %s29 = ssub.s32 %s16, %s28
    %s30 = ssub.s32 %s17, %s24
    %s31 = sor.u32 %s29, %s30
    %p32 = scmp.eq.s32.totalorder %s31, 0
    %s34 = sadd.s32 %s33, 1
    %s35 = scalar_select %p32, %s33, %s34
    %p38 = pneg %p32
    %p39 = scmp.eq.s32.totalorder %s9, 3
    %p40 = por %p38, %p39
    %p41 = scmp.ne.s32.totalorder %s33, %s36
    %p42 = scmp.eq.s32.totalorder %s9, 0
    %p43 = por %p41, %p42
    %p44 = scmp.ne.s32.totalorder %s33, %s36
    %p45 = scmp.eq.s32.totalorder %s14, 3
    %p46 = por %p44, %p45
    %p47 = scmp.ne.s32.totalorder %s36, %s37
    %p48 = scmp.eq.s32.totalorder %s14, 0
    %p49 = por %p47, %p48
    %p50 = scmp.ne.s32.totalorder %s36, %s37
    %p51 = scmp.eq.s32.totalorder %s15, 3
    %p52 = por %p50, %p51
    %p54 = scmp.ne.s32.totalorder %s37, %s53
    %p55 = scmp.eq.s32.totalorder %s15, 0
    %p56 = por %p54, %p55
    %s58 = sadd.s32 %s57, 1
    %p61 = scmp.eq.s32.totalorder %s9, 3
    %p62 = scmp.ne.s32.totalorder %s57, %s59
    %p63 = scmp.eq.s32.totalorder %s9, 0
    %p64 = por %p62, %p63
    %p65 = scmp.ne.s32.totalorder %s57, %s59
    %p66 = scmp.eq.s32.totalorder %s14, 3
    %p67 = por %p65, %p66
    %p68 = scmp.ne.s32.totalorder %s59, %s60
    %p69 = scmp.eq.s32.totalorder %s14, 0
    %p70 = por %p68, %p69
    %p71 = scmp.ne.s32.totalorder %s59, %s60
    %p72 = scmp.eq.s32.totalorder %s15, 3
    %p73 = por %p71, %p72
    %p75 = scmp.ne.s32.totalorder %s60, %s74
    %p76 = scmp.eq.s32.totalorder %s15, 0
    %p77 = por %p75, %p76
    %s79 = sadd.s32 %s78, 1
    %p82 = scmp.eq.s32.totalorder %s9, 3
    %p83 = scmp.ne.s32.totalorder %s78, %s80
    %p84 = scmp.eq.s32.totalorder %s9, 0
    %p85 = por %p83, %p84
    %p86 = scmp.ne.s32.totalorder %s78, %s80
    %p87 = scmp.eq.s32.totalorder %s14, 3
    %p88 = por %p86, %p87
    %p89 = scmp.ne.s32.totalorder %s80, %s81
    %p90 = scmp.eq.s32.totalorder %s14, 0
    %p91 = por %p89, %p90
    %p92 = scmp.ne.s32.totalorder %s80, %s81
    %p93 = scmp.eq.s32.totalorder %s15, 3
    %p94 = por %p92, %p93
    %p96 = scmp.ne.s32.totalorder %s81, %s95
    %p97 = scmp.eq.s32.totalorder %s15, 0
    %p98 = por %p96, %p97
    %s99 = ssub.s32 %s16, %s28
    %s100 = ssub.s32 %s17, %s24
    %s101 = sor.u32 %s99, %s100
    %p102 = scmp.eq.s32.totalorder %s101, 0
    %s104 = sadd.s32 %s103, 1
    %s105 = scalar_select %p102, %s103, %s104
    %p108 = pneg %p102
    %p109 = scmp.eq.s32.totalorder %s9, 3
    %p110 = por %p108, %p109
    %p111 = scmp.ne.s32.totalorder %s103, %s106
    %p112 = scmp.eq.s32.totalorder %s9, 0
    %p113 = por %p111, %p112
    %p114 = scmp.ne.s32.totalorder %s103, %s106
    %p115 = scmp.eq.s32.totalorder %s14, 3
    %p116 = por %p114, %p115
    %p117 = scmp.ne.s32.totalorder %s106, %s107
    %p118 = scmp.eq.s32.totalorder %s14, 0
    %p119 = por %p117, %p118
    %p120 = scmp.ne.s32.totalorder %s106, %s107
    %p121 = scmp.eq.s32.totalorder %s15, 3
    %p122 = por %p120, %p121
    %p124 = scmp.ne.s32.totalorder %s107, %s123
    %p125 = scmp.eq.s32.totalorder %s15, 0
    %p126 = por %p124, %p125
    %p127 = scmp.le.s32.totalorder 1, %s9
    %p128 = scmp.lt.s32.totalorder %s9, 5
    %p129 = pnand %p127, %p128
    %p130 = pneg %p129
    // Predicated region
    $region9: #{conv_block_forward.5} parent=5 // pred_check
      _
    $region10: #{conv_block_forward.5} parent=5 // pred_check_branch
      %132 = sbr.rel (%p129) target = $region12
    $region11: #{conv_block_forward.5} parent=5 // pred_region
      %s133 = ssub.s32 %s9, 1
      // Predicated region
      $region13: #{conv_block_forward.5} parent=11 // pred_check
        %p134 = pneg %p70
      $region14: #{conv_block_forward.5} parent=11 // pred_check_branch
        %136 = sbr.rel (%p134) target = $region16
      $region15: #{conv_block_forward.5} parent=11 // pred_region
        _
      $region16: #{conv_block_forward.5} parent=11 // pred_fallthru
        _
      // Predicated region
      $region17: #{conv_block_forward.5} parent=11 // pred_check
        %p137 = pneg %p91
      $region18: #{conv_block_forward.5} parent=11 // pred_check_branch
        %139 = sbr.rel (%p137) target = $region20
      $region19: #{conv_block_forward.5} parent=11 // pred_region
        _
      $region20: #{conv_block_forward.5} parent=11 // pred_fallthru
        _
    $region12: #{conv_block_forward.5} parent=5 // pred_fallthru
      _
    %p140 = scmp.lt.s32.totalorder %s9, 4
    // Predicated region
    $region21: #{conv_block_forward.5} parent=5 // pred_check
      %p141 = pneg %p140
    $region22: #{conv_block_forward.5} parent=5 // pred_check_branch
      %143 = sbr.rel (%p141) target = $region24
    $region23: #{conv_block_forward.5} parent=5 // pred_region
      // Predicated region
      $region25: #{conv_block_forward.5} parent=23 // pred_check
        %p144 = pneg %p43
      $region26: #{conv_block_forward.5} parent=23 // pred_check_branch
        %146 = sbr.rel (%p144) target = $region28
      $region27: #{conv_block_forward.5} parent=23 // pred_region
        %s147 = smul.u32 8, %s17
        %p148 = scmp.lt.s32.totalorder %s16, 1
        %s149 = scalar_select %p148, %s16, 1
        %p150 = scmp.lt.s32.totalorder %s147, 15
        %s151 = scalar_select %p150, %s147, 15
        %s152 = smul.addr %s151, 2
        %s153 = smul.addr %s149, 32
        %s154 = sadd.s32 %s152, %s153
        %s155 = smul.addr %s154, 8
        %s156 = scalar_lea.vmem %s0, %s155
        %s157 = smul.u32 8, %s17
      $region28: #{conv_block_forward.5} parent=23 // pred_fallthru
        _
    $region24: #{conv_block_forward.5} parent=5 // pred_fallthru
      _
    %p158 = scmp.le.s32.totalorder 1, %s9
    %p159 = scmp.lt.s32.totalorder %s9, 5
    %p160 = pnand %p158, %p159
    %p161 = pneg %p160
    // Predicated region
    $region29: #{conv_block_forward.5} parent=5 // pred_check
      _
    $region30: #{conv_block_forward.5} parent=5 // pred_check_branch
      %163 = sbr.rel (%p160) target = $region32
    $region31: #{conv_block_forward.5} parent=5 // pred_region
      %s164 = ssub.s32 %s9, 1
      %s165 = smul.u32 8, %s19
      %p166 = scmp.lt.s32.totalorder %s18, 1
      %s167 = scalar_select %p166, %s18, 1
      %p168 = scmp.lt.s32.totalorder %s165, 15
      %s169 = scalar_select %p168, %s165, 15
      %s170 = smul.addr %s169, 2
      %s171 = smul.addr %s167, 32
      %s172 = sadd.s32 %s170, %s171
      %s173 = smul.addr %s172, 8
      %s174 = scalar_lea.vmem %s0, %s173
      %p175 = pneg %p49
      %p176 = pneg %p46
      %p177 = pneg %p70
      %p178 = pneg %p67
      %p179 = pneg %p91
      %p180 = pneg %p88
      %p181 = pneg %p119
      %p182 = pneg %p116
      %s183 = smul.u32 8, %s19
      %p184 = scmp.lt.s32.totalorder %s18, 1
      %s185 = scalar_select %p184, %s18, 1
      %p186 = scmp.lt.s32.totalorder %s183, 15
      %s187 = scalar_select %p186, %s183, 15
      %s188 = smul.addr %s187, 2
      %s189 = smul.addr %s185, 32
      %s190 = sadd.s32 %s188, %s189
      %s191 = smul.addr %s190, 8
      %s192 = scalar_lea.vmem %s3, %s191
      %s193 = smul.u32 8, %s19
      %p194 = scmp.lt.s32.totalorder %s18, 1
      %s195 = scalar_select %p194, %s18, 1
      %p196 = scmp.lt.s32.totalorder %s193, 15
      %s197 = scalar_select %p196, %s193, 15
      %s198 = smul.addr %s197, 2
      %s199 = smul.addr %s195, 32
      %s200 = sadd.s32 %s198, %s199
      %s201 = smul.addr %s200, 8
      %s202 = scalar_lea.vmem %s0, %s201
      %s203 = smul.u32 8, %s19
      %s204 = smul.u32 8, %s19
      %p205 = scmp.lt.s32.totalorder %s18, 1
      %s206 = scalar_select %p205, %s18, 1
      %p207 = scmp.lt.s32.totalorder %s204, 15
      %s208 = scalar_select %p207, %s204, 15
      %s209 = smul.addr %s208, 2
      %s210 = smul.addr %s206, 32
      %s211 = sadd.s32 %s209, %s210
      %s212 = smul.addr %s211, 8
      %s213 = scalar_lea.vmem %s3, %s212
      %s214 = smul.u32 8, %s19
      %v215 = vld [vmem:[%s202] sm:$0xff]
      %v216 = vld [vmem:[%s202 + $0x8] sm:$0xff]
      %v217 = vld [vmem:[%s202 + $0x10] sm:$0xff]
      %v218 = vld [vmem:[%s202 + $0x18] sm:$0xff]
      %v219 = vld [vmem:[%s202 + $0x20] sm:$0xff]
      %v220 = vld [vmem:[%s202 + $0x28] sm:$0xff]
      %v221 = vld [vmem:[%s202 + $0x30] sm:$0xff]
      %v222 = vld [vmem:[%s202 + $0x38] sm:$0xff]
      %v223 = vld [vmem:[%s202 + $0x40] sm:$0xff]
      %v224 = vld [vmem:[%s202 + $0x48] sm:$0xff]
      %v225 = vld [vmem:[%s202 + $0x50] sm:$0xff]
      %v226 = vld [vmem:[%s202 + $0x58] sm:$0xff]
      %v227 = vld [vmem:[%s202 + $0x60] sm:$0xff]
      %v228 = vld [vmem:[%s202 + $0x68] sm:$0xff]
      %v229 = vld [vmem:[%s202 + $0x70] sm:$0xff]
      %v230 = vld [vmem:[%s202 + $0x78] sm:$0xff]
      %v231 = vld [vmem:[%s1] sm:$0x1]
      %v233 = vlaneseq
      %v234 = vshrl.u32 %v233, 7
      %v235 = vsub.s32 0, %v234
      %v236 = vrot.slane %v231, %v235
      %v238 = vmul.f32 %v215, %v236
      %v239 = vmul.f32 %v216, %v236
      %v240 = vmul.f32 %v217, %v236
      %v241 = vmul.f32 %v218, %v236
      %v242 = vmul.f32 %v219, %v236
      %v243 = vmul.f32 %v220, %v236
      %v244 = vmul.f32 %v221, %v236
      %v245 = vmul.f32 %v222, %v236
      %v246 = vmul.f32 %v223, %v236
      %v247 = vmul.f32 %v224, %v236
      %v248 = vmul.f32 %v225, %v236
      %v249 = vmul.f32 %v226, %v236
      %v250 = vmul.f32 %v227, %v236
      %v251 = vmul.f32 %v228, %v236
      %v252 = vmul.f32 %v229, %v236
      %v253 = vmul.f32 %v230, %v236
      %v254 = vld [vmem:[%s2] sm:$0x1]
      %v256 = vlaneseq
      %v257 = vshrl.u32 %v256, 7
      %v258 = vsub.s32 0, %v257
      %v259 = vrot.slane %v254, %v258
      %v261 = vadd.f32 %v238, %v259
      %v262 = vadd.f32 %v239, %v259
      %v263 = vadd.f32 %v240, %v259
      %v264 = vadd.f32 %v241, %v259
      %v265 = vadd.f32 %v242, %v259
      %v266 = vadd.f32 %v243, %v259
      %v267 = vadd.f32 %v244, %v259
      %v268 = vadd.f32 %v245, %v259
      %v269 = vadd.f32 %v246, %v259
      %v270 = vadd.f32 %v247, %v259
      %v271 = vadd.f32 %v248, %v259
      %v272 = vadd.f32 %v249, %v259
      %v273 = vadd.f32 %v250, %v259
      %v274 = vadd.f32 %v251, %v259
      %v275 = vadd.f32 %v252, %v259
      %v276 = vadd.f32 %v253, %v259
      %v277 = vmax.f32 %v261, 0.0
      %v278 = vmax.f32 %v262, 0.0
      %v279 = vmax.f32 %v263, 0.0
      %v280 = vmax.f32 %v264, 0.0
      %v281 = vmax.f32 %v265, 0.0
      %v282 = vmax.f32 %v266, 0.0
      %v283 = vmax.f32 %v267, 0.0
      %v284 = vmax.f32 %v268, 0.0
      %v285 = vmax.f32 %v269, 0.0
      %v286 = vmax.f32 %v270, 0.0
      %v287 = vmax.f32 %v271, 0.0
      %v288 = vmax.f32 %v272, 0.0
      %v289 = vmax.f32 %v273, 0.0
      %v290 = vmax.f32 %v274, 0.0
      %v291 = vmax.f32 %v275, 0.0
      %v292 = vmax.f32 %v276, 0.0
      %vm293 = vcmask 64512
      %294 = vst.msk [vmem:[%s213] sm:$0xff] %vm293, %v277
      %295 = vst.msk [vmem:[%s213 + $0x8] sm:$0xff] %vm293, %v278
      %296 = vst.msk [vmem:[%s213 + $0x10] sm:$0xff] %vm293, %v279
      %297 = vst.msk [vmem:[%s213 + $0x18] sm:$0xff] %vm293, %v280
      %298 = vst.msk [vmem:[%s213 + $0x20] sm:$0xff] %vm293, %v281
      %299 = vst.msk [vmem:[%s213 + $0x28] sm:$0xff] %vm293, %v282
      %300 = vst.msk [vmem:[%s213 + $0x30] sm:$0xff] %vm293, %v283
      %301 = vst.msk [vmem:[%s213 + $0x38] sm:$0xff] %vm293, %v284
      %302 = vst.msk [vmem:[%s213 + $0x40] sm:$0xff] %vm293, %v285
      %303 = vst.msk [vmem:[%s213 + $0x48] sm:$0xff] %vm293, %v286
      %304 = vst.msk [vmem:[%s213 + $0x50] sm:$0xff] %vm293, %v287
      %305 = vst.msk [vmem:[%s213 + $0x58] sm:$0xff] %vm293, %v288
      %306 = vst.msk [vmem:[%s213 + $0x60] sm:$0xff] %vm293, %v289
      %307 = vst.msk [vmem:[%s213 + $0x68] sm:$0xff] %vm293, %v290
      %308 = vst.msk [vmem:[%s213 + $0x70] sm:$0xff] %vm293, %v291
      %309 = vst.msk [vmem:[%s213 + $0x78] sm:$0xff] %vm293, %v292
      %s310 = smul.u32 8, %s19
      %p311 = scmp.lt.s32.totalorder %s18, 1
      %s312 = scalar_select %p311, %s18, 1
      %p313 = scmp.lt.s32.totalorder %s310, 15
      %s314 = scalar_select %p313, %s310, 15
      %s315 = smul.addr %s314, 2
      %s316 = smul.addr %s312, 32
      %s317 = sadd.s32 %s315, %s316
      %s318 = smul.addr %s317, 8
      %s319 = scalar_lea.vmem %s3, %s318
      // Predicated region
      $region33: #{conv_block_forward.5} parent=31 // pred_check
        %p320 = pneg %p116
      $region34: #{conv_block_forward.5} parent=31 // pred_check_branch
        %322 = sbr.rel (%p320) target = $region36
      $region35: #{conv_block_forward.5} parent=31 // pred_region
        %s323 = smul.u32 8, %s19
      $region36: #{conv_block_forward.5} parent=31 // pred_fallthru
        _
    $region32: #{conv_block_forward.5} parent=5 // pred_fallthru
      _
    %p324 = scmp.le.s32.totalorder 2, %s9
    // Predicated region
    $region37: #{conv_block_forward.5} parent=5 // pred_check
      %p325 = pneg %p324
    $region38: #{conv_block_forward.5} parent=5 // pred_check_branch
      %327 = sbr.rel (%p325) target = $region40
    $region39: #{conv_block_forward.5} parent=5 // pred_region
      %s328 = ssub.s32 %s9, 2
      // Predicated region
      $region41: #{conv_block_forward.5} parent=39 // pred_check
        %p329 = pneg %p122
      $region42: #{conv_block_forward.5} parent=39 // pred_check_branch
        %331 = sbr.rel (%p329) target = $region44
      $region43: #{conv_block_forward.5} parent=39 // pred_region
        %s332 = smul.u32 8, %s21
        %p333 = scmp.lt.s32.totalorder %s20, 1
        %s334 = scalar_select %p333, %s20, 1
        %p335 = scmp.lt.s32.totalorder %s332, 15
        %s336 = scalar_select %p335, %s332, 15
        %s337 = smul.addr %s336, 2
        %s338 = smul.addr %s334, 32
        %s339 = sadd.s32 %s337, %s338
        %s340 = smul.addr %s339, 8
        %s341 = scalar_lea.vmem %s3, %s340
      $region44: #{conv_block_forward.5} parent=39 // pred_fallthru
        _
    $region40: #{conv_block_forward.5} parent=5 // pred_fallthru
      _
  $region6: #{conv_block_forward.5} parent=0 // loop_footer
    %s13 = sadd.s32 1, %s9
  $region7: #{conv_block_forward.5} parent=0 // loop_footer_branch
    %8 = sbr.rel target = $region3
  $region8: #{conv_block_forward.5} parent=0 // loop_exit
    _

// kernel: conv_block_forward.3
$region0: #{conv_block_forward.3}
  #allocation0 [shape = 'u32[]', space=smem, size = 0x4, offset = 0x4, fixed_abs, tag = 'smem constant byte address 0x4 - core index']
  #allocation1 [shape = 'u32[144,128]{1,0:T(1,128)}', space=vmem, size = 0x12000, scoped, tag = 'internal scratch']
  #allocation2 [shape = 'bf16[10,18,4]{2,1,0:T(8,128)(2,1)}', space=vmem, size = 0xf000, scoped, tag = 'scratch operand']
  %s0 = inlined_call_operand.vmem [shape: bf16[2,16,16,4], index: 0, kind: input, shape index: {}, may-alias: {0,1,2}]
  %s1 = inlined_call_operand.vmem [shape: bf16[2,16,16,4], index: 1, kind: input, shape index: {}, may-alias: {0,1,2}]
  %s2 = inlined_call_operand.vmem [shape: bf16[2,16,16,4], index: 2, kind: input, shape index: {}, may-alias: {0,1,2}]
  %s3 = inlined_call_operand.vmem [shape: bf16[36,8], index: 3, kind: input, shape index: {}]
  %s4 = inlined_call_operand.vmem [shape: f32[1,4], index: 4, kind: input, shape index: {}]
  %s5 = inlined_call_operand.vmem [shape: f32[1,4], index: 5, kind: input, shape index: {}]
  %s6 = inlined_call_operand.vmem [shape: f32[2,16,16,8], index: 6, kind: output, shape index: {0}]
  %s7 = inlined_call_operand.vmem [shape: f32[2,2,2,8], index: 7, kind: output, shape index: {1}]
  %8 = xla_tuple %s6, %s7
  %s9 = sld [smem:[#allocation0]]
  $region73: #{conv_block_forward.3} parent=0
    _
  %s11 = ssub.s32 1, %s9
  %s12 = scalar_select 0, %s11, %s9
  loop: start=0, step=1, limit=6
  $region2: #{conv_block_forward.3} parent=0 // loop_pre_header
    _
  $region3: #{conv_block_forward.3} parent=0 // loop_header
    %s14 = sphi 0, %s18
    %p15 = scmp.ge.s32.totalorder %s14, 6
    %s21 = sphi 0, %s33
    %s22 = sphi 0, %s29
    %s23 = sphi 0, %s21
    %s24 = sphi 0, %s22
    %s25 = sphi 0, %s23
    %s26 = sphi 0, %s24
    %s38 = sphi 0, %s40
    %s41 = sphi 0, %s38
    %s42 = sphi 0, %s41
    %s58 = sphi 0, %s42
    %s74 = sphi 0, %s76
    %s77 = sphi 0, %s74
    %s78 = sphi 0, %s77
    %s94 = sphi 0, %s78
    %s110 = sphi 0, %s112
    %s113 = sphi 0, %s110
    %s114 = sphi 0, %s113
    %s130 = sphi 0, %s114
    %s134 = sphi 0, %s134
    %s136 = sphi 0, %s134
    %s137 = sphi 0, %s136
    %s151 = sphi 0, %s137
    %s155 = sphi 0, %s155
    %s157 = sphi 0, %s155
    %s158 = sphi 0, %s157
    %s172 = sphi 0, %s158
    %s176 = sphi 0, %s176
    %s178 = sphi 0, %s176
    %s179 = sphi 0, %s178
    %s193 = sphi 0, %s179
    %s201 = sphi 0, %s203
    %s204 = sphi 0, %s201
    %s205 = sphi 0, %s204
    %s221 = sphi 0, %s205
    %s229 = sphi 0, %s231
    %s232 = sphi 0, %s229
    %s233 = sphi 0, %s232
    %s249 = sphi 0, %s233
  $region4: #{conv_block_forward.3} parent=0 // loop_header_branch
    %17 = sbr.rel (%p15) target = $region8
  $region5: #{conv_block_forward.3} parent=0 // loop_body
    %s19 = ssub.s32 %s14, 1
    %s20 = ssub.s32 %s14, 2
    %s27 = sadd.s32 1, %s22
    %p28 = scmp.ge.s32.totalorder %s27, 2
    %s29 = scalar_select %p28, 0, %s27
    %s30 = sadd.s32 1, %s21
    %s31 = scalar_select %p28, %s30, %s21
    %p32 = scmp.ge.s32.totalorder %s31, 2
    %s33 = scalar_select %p32, 0, %s31
    %s34 = ssub.s32 %s21, %s33
    %s35 = ssub.s32 %s22, %s29
    %s36 = sor.u32 %s34, %s35
    %p37 = scmp.eq.s32.totalorder %s36, 0
    %s39 = sadd.s32 %s38, 1
    %s40 = scalar_select %p37, %s38, %s39
    %p43 = pneg %p37
    %p44 = scmp.eq.s32.totalorder %s14, 3
    %p45 = por %p43, %p44
    %p46 = scmp.ne.s32.totalorder %s38, %s41
    %p47 = scmp.eq.s32.totalorder %s14, 0
    %p48 = por %p46, %p47
    %p49 = scmp.ne.s32.totalorder %s38, %s41
    %p50 = scmp.eq.s32.totalorder %s19, 3
    %p51 = por %p49, %p50
    %p52 = scmp.ne.s32.totalorder %s41, %s42
    %p53 = scmp.eq.s32.totalorder %s19, 0
    %p54 = por %p52, %p53
    %p55 = scmp.ne.s32.totalorder %s41, %s42
    %p56 = scmp.eq.s32.totalorder %s20, 3
    %p57 = por %p55, %p56
    %p59 = scmp.ne.s32.totalorder %s42, %s58
    %p60 = scmp.eq.s32.totalorder %s20, 0
    %p61 = por %p59, %p60
    %s62 = smul.u32 %s22, 8
    %s63 = ssub.s32 %s62, 1
    %p64 = scmp.gt.s32.totalorder %s63, 0
    %s65 = scalar_select %p64, %s63, 0
    %s66 = smul.u32 %s29, 8
    %s67 = ssub.s32 %s66, 1
    %p68 = scmp.gt.s32.totalorder %s67, 0
    %s69 = scalar_select %p68, %s67, 0
    %s70 = ssub.s32 %s21, %s33
    %s71 = ssub.s32 %s65, %s69
    %s72 = sor.u32 %s70, %s71
    %p73 = scmp.eq.s32.totalorder %s72, 0
    %s75 = sadd.s32 %s74, 1
    %s76 = scalar_select %p73, %s74, %s75
    %p79 = pneg %p73
    %p80 = scmp.eq.s32.totalorder %s14, 3
    %p81 = por %p79, %p80
    %p82 = scmp.ne.s32.totalorder %s74, %s77
    %p83 = scmp.eq.s32.totalorder %s14, 0
    %p84 = por %p82, %p83
    %p85 = scmp.ne.s32.totalorder %s74, %s77
    %p86 = scmp.eq.s32.totalorder %s19, 3
    %p87 = por %p85, %p86
    %p88 = scmp.ne.s32.totalorder %s77, %s78
    %p89 = scmp.eq.s32.totalorder %s19, 0
    %p90 = por %p88, %p89
    %p91 = scmp.ne.s32.totalorder %s77, %s78
    %p92 = scmp.eq.s32.totalorder %s20, 3
    %p93 = por %p91, %p92
    %p95 = scmp.ne.s32.totalorder %s78, %s94
    %p96 = scmp.eq.s32.totalorder %s20, 0
    %p97 = por %p95, %p96
    %s98 = sadd.s32 %s22, 1
    %s99 = smul.u32 %s98, 8
    %p100 = scmp.lt.s32.totalorder %s99, 15
    %s101 = scalar_select %p100, %s99, 15
    %s102 = sadd.s32 %s29, 1
    %s103 = smul.u32 %s102, 8
    %p104 = scmp.lt.s32.totalorder %s103, 15
    %s105 = scalar_select %p104, %s103, 15
    %s106 = ssub.s32 %s21, %s33
    %s107 = ssub.s32 %s101, %s105
    %s108 = sor.u32 %s106, %s107
    %p109 = scmp.eq.s32.totalorder %s108, 0
    %s111 = sadd.s32 %s110, 1
    %s112 = scalar_select %p109, %s110, %s111
    %p115 = pneg %p109
    %p116 = scmp.eq.s32.totalorder %s14, 3
    %p117 = por %p115, %p116
    %p118 = scmp.ne.s32.totalorder %s110, %s113
    %p119 = scmp.eq.s32.totalorder %s14, 0
    %p120 = por %p118, %p119
    %p121 = scmp.ne.s32.totalorder %s110, %s113
    %p122 = scmp.eq.s32.totalorder %s19, 3
    %p123 = por %p121, %p122
    %p124 = scmp.ne.s32.totalorder %s113, %s114
    %p125 = scmp.eq.s32.totalorder %s19, 0
    %p126 = por %p124, %p125
    %p127 = scmp.ne.s32.totalorder %s113, %s114
    %p128 = scmp.eq.s32.totalorder %s20, 3
    %p129 = por %p127, %p128
    %p131 = scmp.ne.s32.totalorder %s114, %s130
    %p132 = scmp.eq.s32.totalorder %s20, 0
    %p133 = por %p131, %p132
    %s135 = sadd.s32 %s134, 1
    %p138 = scmp.eq.s32.totalorder %s14, 3
    %p139 = scmp.ne.s32.totalorder %s134, %s136
    %p140 = scmp.eq.s32.totalorder %s14, 0
    %p141 = por %p139, %p140
    %p142 = scmp.ne.s32.totalorder %s134, %s136
    %p143 = scmp.eq.s32.totalorder %s19, 3
    %p144 = por %p142, %p143
    %p145 = scmp.ne.s32.totalorder %s136, %s137
    %p146 = scmp.eq.s32.totalorder %s19, 0
    %p147 = por %p145, %p146
    %p148 = scmp.ne.s32.totalorder %s136, %s137
    %p149 = scmp.eq.s32.totalorder %s20, 3
    %p150 = por %p148, %p149
    %p152 = scmp.ne.s32.totalorder %s137, %s151
    %p153 = scmp.eq.s32.totalorder %s20, 0
    %p154 = por %p152, %p153
    %s156 = sadd.s32 %s155, 1
    %p159 = scmp.eq.s32.totalorder %s14, 3
    %p160 = scmp.ne.s32.totalorder %s155, %s157
    %p161 = scmp.eq.s32.totalorder %s14, 0
    %p162 = por %p160, %p161
    %p163 = scmp.ne.s32.totalorder %s155, %s157
    %p164 = scmp.eq.s32.totalorder %s19, 3
    %p165 = por %p163, %p164
    %p166 = scmp.ne.s32.totalorder %s157, %s158
    %p167 = scmp.eq.s32.totalorder %s19, 0
    %p168 = por %p166, %p167
    %p169 = scmp.ne.s32.totalorder %s157, %s158
    %p170 = scmp.eq.s32.totalorder %s20, 3
    %p171 = por %p169, %p170
    %p173 = scmp.ne.s32.totalorder %s158, %s172
    %p174 = scmp.eq.s32.totalorder %s20, 0
    %p175 = por %p173, %p174
    %s177 = sadd.s32 %s176, 1
    %p180 = scmp.eq.s32.totalorder %s14, 3
    %p181 = scmp.ne.s32.totalorder %s176, %s178
    %p182 = scmp.eq.s32.totalorder %s14, 0
    %p183 = por %p181, %p182
    %p184 = scmp.ne.s32.totalorder %s176, %s178
    %p185 = scmp.eq.s32.totalorder %s19, 3
    %p186 = por %p184, %p185
    %p187 = scmp.ne.s32.totalorder %s178, %s179
    %p188 = scmp.eq.s32.totalorder %s19, 0
    %p189 = por %p187, %p188
    %p190 = scmp.ne.s32.totalorder %s178, %s179
    %p191 = scmp.eq.s32.totalorder %s20, 3
    %p192 = por %p190, %p191
    %p194 = scmp.ne.s32.totalorder %s179, %s193
    %p195 = scmp.eq.s32.totalorder %s20, 0
    %p196 = por %p194, %p195
    %s197 = ssub.s32 %s21, %s33
    %s198 = ssub.s32 %s22, %s29
    %s199 = sor.u32 %s197, %s198
    %p200 = scmp.eq.s32.totalorder %s199, 0
    %s202 = sadd.s32 %s201, 1
    %s203 = scalar_select %p200, %s201, %s202
    %p206 = pneg %p200
    %p207 = scmp.eq.s32.totalorder %s14, 3
    %p208 = por %p206, %p207
    %p209 = scmp.ne.s32.totalorder %s201, %s204
    %p210 = scmp.eq.s32.totalorder %s14, 0
    %p211 = por %p209, %p210
    %p212 = scmp.ne.s32.totalorder %s201, %s204
    %p213 = scmp.eq.s32.totalorder %s19, 3
    %p214 = por %p212, %p213
    %p215 = scmp.ne.s32.totalorder %s204, %s205
    %p216 = scmp.eq.s32.totalorder %s19, 0
    %p217 = por %p215, %p216
    %p218 = scmp.ne.s32.totalorder %s204, %s205
    %p219 = scmp.eq.s32.totalorder %s20, 3
    %p220 = por %p218, %p219
    %p222 = scmp.ne.s32.totalorder %s205, %s221
    %p223 = scmp.eq.s32.totalorder %s20, 0
    %p224 = por %p222, %p223
    %s225 = ssub.s32 %s21, %s33
    %s226 = ssub.s32 %s22, %s29
    %s227 = sor.u32 %s225, %s226
    %p228 = scmp.eq.s32.totalorder %s227, 0
    %s230 = sadd.s32 %s229, 1
    %s231 = scalar_select %p228, %s229, %s230
    %p234 = pneg %p228
    %p235 = scmp.eq.s32.totalorder %s14, 3
    %p236 = por %p234, %p235
    %p237 = scmp.ne.s32.totalorder %s229, %s232
    %p238 = scmp.eq.s32.totalorder %s14, 0
    %p239 = por %p237, %p238
    %p240 = scmp.ne.s32.totalorder %s229, %s232
    %p241 = scmp.eq.s32.totalorder %s19, 3
    %p242 = por %p240, %p241
    %p243 = scmp.ne.s32.totalorder %s232, %s233
    %p244 = scmp.eq.s32.totalorder %s19, 0
    %p245 = por %p243, %p244
    %p246 = scmp.ne.s32.totalorder %s232, %s233
    %p247 = scmp.eq.s32.totalorder %s20, 3
    %p248 = por %p246, %p247
    %p250 = scmp.ne.s32.totalorder %s233, %s249
    %p251 = scmp.eq.s32.totalorder %s20, 0
    %p252 = por %p250, %p251
    %p253 = scmp.le.s32.totalorder 1, %s14
    %p254 = scmp.lt.s32.totalorder %s14, 5
    %p255 = pnand %p253, %p254
    %p256 = pneg %p255
    // Predicated region
    $region9: #{conv_block_forward.3} parent=5 // pred_check
      _
    $region10: #{conv_block_forward.3} parent=5 // pred_check_branch
      %258 = sbr.rel (%p255) target = $region12
    $region11: #{conv_block_forward.3} parent=5 // pred_region
      %s259 = ssub.s32 %s14, 1
      // Predicated region
      $region13: #{conv_block_forward.3} parent=11 // pred_check
        %p260 = pneg %p147
      $region14: #{conv_block_forward.3} parent=11 // pred_check_branch
        %262 = sbr.rel (%p260) target = $region16
      $region15: #{conv_block_forward.3} parent=11 // pred_region
        _
      $region16: #{conv_block_forward.3} parent=11 // pred_fallthru
        _
      // Predicated region
      $region17: #{conv_block_forward.3} parent=11 // pred_check
        %p263 = pneg %p168
      $region18: #{conv_block_forward.3} parent=11 // pred_check_branch
        %265 = sbr.rel (%p263) target = $region20
      $region19: #{conv_block_forward.3} parent=11 // pred_region
        _
      $region20: #{conv_block_forward.3} parent=11 // pred_fallthru
        _
      // Predicated region
      $region21: #{conv_block_forward.3} parent=11 // pred_check
        %p266 = pneg %p189
      $region22: #{conv_block_forward.3} parent=11 // pred_check_branch
        %268 = sbr.rel (%p266) target = $region24
      $region23: #{conv_block_forward.3} parent=11 // pred_region
        _
      $region24: #{conv_block_forward.3} parent=11 // pred_fallthru
        _
    $region12: #{conv_block_forward.3} parent=5 // pred_fallthru
      _
    %p269 = scmp.lt.s32.totalorder %s14, 4
    // Predicated region
    $region25: #{conv_block_forward.3} parent=5 // pred_check
      %p270 = pneg %p269
    $region26: #{conv_block_forward.3} parent=5 // pred_check_branch
      %272 = sbr.rel (%p270) target = $region28
    $region27: #{conv_block_forward.3} parent=5 // pred_region
      // Predicated region
      $region29: #{conv_block_forward.3} parent=27 // pred_check
        %p273 = pneg %p48
      $region30: #{conv_block_forward.3} parent=27 // pred_check_branch
        %275 = sbr.rel (%p273) target = $region32
      $region31: #{conv_block_forward.3} parent=27 // pred_region
        %s276 = smul.u32 8, %s22
        %p277 = scmp.lt.s32.totalorder %s21, 1
        %s278 = scalar_select %p277, %s21, 1
        %p279 = scmp.lt.s32.totalorder %s276, 15
        %s280 = scalar_select %p279, %s276, 15
        %s281 = smul.addr %s280, 2
        %s282 = smul.addr %s278, 32
        %s283 = sadd.s32 %s281, %s282
        %s284 = smul.addr %s283, 4
        %s285 = scalar_lea.vmem %s0, %s284
        %s286 = smul.u32 8, %s22
      $region32: #{conv_block_forward.3} parent=27 // pred_fallthru
        _
      // Predicated region
      $region33: #{conv_block_forward.3} parent=27 // pred_check
        %p287 = pneg %p84
      $region34: #{conv_block_forward.3} parent=27 // pred_check_branch
        %289 = sbr.rel (%p287) target = $region36
      $region35: #{conv_block_forward.3} parent=27 // pred_region
        %s290 = smul.u32 %s22, 8
        %s291 = ssub.s32 %s290, 1
        %p292 = scmp.gt.s32.totalorder %s291, 0
        %s293 = scalar_select %p292, %s291, 0
        %p294 = scmp.lt.s32.totalorder %s21, 1
        %s295 = scalar_select %p294, %s21, 1
        %p296 = scmp.lt.s32.totalorder %s293, 15
        %s297 = scalar_select %p296, %s293, 15
        %s298 = smul.addr %s297, 2
        %s299 = smul.addr %s295, 32
        %s300 = sadd.s32 %s298, %s299
        %s301 = smul.addr %s300, 4
        %s302 = scalar_lea.vmem %s1, %s301
        %s303 = smul.u32 %s22, 8
        %s304 = ssub.s32 %s303, 1
        %p305 = scmp.gt.s32.totalorder %s304, 0
        %s306 = scalar_select %p305, %s304, 0
      $region36: #{conv_block_forward.3} parent=27 // pred_fallthru
        _
      // Predicated region
      $region37: #{conv_block_forward.3} parent=27 // pred_check
        %p307 = pneg %p120
      $region38: #{conv_block_forward.3} parent=27 // pred_check_branch
        %309 = sbr.rel (%p307) target = $region40
      $region39: #{conv_block_forward.3} parent=27 // pred_region
        %s310 = sadd.s32 %s22, 1
        %s311 = smul.u32 %s310, 8
        %p312 = scmp.lt.s32.totalorder %s311, 15
        %s313 = scalar_select %p312, %s311, 15
        %p314 = scmp.lt.s32.totalorder %s21, 1
        %s315 = scalar_select %p314, %s21, 1
        %p316 = scmp.lt.s32.totalorder %s313, 15
        %s317 = scalar_select %p316, %s313, 15
        %s318 = smul.addr %s317, 2
        %s319 = smul.addr %s315, 32
        %s320 = sadd.s32 %s318, %s319
        %s321 = smul.addr %s320, 4
        %s322 = scalar_lea.vmem %s2, %s321
        %s323 = sadd.s32 %s22, 1
        %s324 = smul.u32 %s323, 8
        %p325 = scmp.lt.s32.totalorder %s324, 15
        %s326 = scalar_select %p325, %s324, 15
      $region40: #{conv_block_forward.3} parent=27 // pred_fallthru
        _
    $region28: #{conv_block_forward.3} parent=5 // pred_fallthru
      _
    %p327 = scmp.le.s32.totalorder 1, %s14
    %p328 = scmp.lt.s32.totalorder %s14, 5
    %p329 = pnand %p327, %p328
    %p330 = pneg %p329
    // Predicated region
    $region41: #{conv_block_forward.3} parent=5 // pred_check
      _
    $region42: #{conv_block_forward.3} parent=5 // pred_check_branch
      %332 = sbr.rel (%p329) target = $region44
    $region43: #{conv_block_forward.3} parent=5 // pred_region
      %s333 = ssub.s32 %s14, 1
      %s334 = smul.u32 8, %s24
      %p335 = scmp.lt.s32.totalorder %s23, 1
      %s336 = scalar_select %p335, %s23, 1
      %p337 = scmp.lt.s32.totalorder %s334, 15
      %s338 = scalar_select %p337, %s334, 15
      %s339 = smul.addr %s338, 2
      %s340 = smul.addr %s336, 32
      %s341 = sadd.s32 %s339, %s340
      %s342 = smul.addr %s341, 4
      %s343 = scalar_lea.vmem %s0, %s342
      %p344 = pneg %p54
      %p345 = pneg %p51
      %s346 = smul.u32 %s24, 8
      %s347 = ssub.s32 %s346, 1
      %p348 = scmp.gt.s32.totalorder %s347, 0
      %s349 = scalar_select %p348, %s347, 0
      %p350 = scmp.lt.s32.totalorder %s23, 1
      %s351 = scalar_select %p350, %s23, 1
      %p352 = scmp.lt.s32.totalorder %s349, 15
      %s353 = scalar_select %p352, %s349, 15
      %s354 = smul.addr %s353, 2
      %s355 = smul.addr %s351, 32
      %s356 = sadd.s32 %s354, %s355
      %s357 = smul.addr %s356, 4
      %s358 = scalar_lea.vmem %s1, %s357
      %p359 = pneg %p90
      %p360 = pneg %p87
      %s361 = sadd.s32 %s24, 1
      %s362 = smul.u32 %s361, 8
      %p363 = scmp.lt.s32.totalorder %s362, 15
      %s364 = scalar_select %p363, %s362, 15
      %p365 = scmp.lt.s32.totalorder %s23, 1
      %s366 = scalar_select %p365, %s23, 1
      %p367 = scmp.lt.s32.totalorder %s364, 15
      %s368 = scalar_select %p367, %s364, 15
      %s369 = smul.addr %s368, 2
      %s370 = smul.addr %s366, 32
      %s371 = sadd.s32 %s369, %s370
      %s372 = smul.addr %s371, 4
      %s373 = scalar_lea.vmem %s2, %s372
      %p374 = pneg %p126
      %p375 = pneg %p123
      %p376 = pneg %p147
      %p377 = pneg %p144
      %p378 = pneg %p168
      %p379 = pneg %p165
      %p380 = pneg %p189
      %p381 = pneg %p186
      %p382 = pneg %p217
      %p383 = pneg %p214
      %s384 = smul.u32 8, %s24
      %p385 = scmp.lt.s32.totalorder %s23, 1
      %s386 = scalar_select %p385, %s23, 1
      %p387 = scmp.lt.s32.totalorder %s384, 15
      %s388 = scalar_select %p387, %s384, 15
      %s389 = smul.addr %s388, 2
      %s390 = smul.addr %s386, 32
      %s391 = sadd.s32 %s389, %s390
      %s392 = smul.addr %s391, 8
      %s393 = scalar_lea.vmem %s6, %s392
      %p394 = pneg %p245
      %p395 = pneg %p242
      %p396 = scmp.lt.s32.totalorder %s23, 1
      %s397 = scalar_select %p396, %s23, 1
      %p398 = scmp.lt.s32.totalorder %s24, 1
      %s399 = scalar_select %p398, %s24, 1
      %s400 = smul.addr %s397, 2
      %s401 = sadd.s32 %s399, %s400
      %s402 = smul.addr %s401, 2
      %s403 = scalar_lea.vmem %s7, %s402
      %s404 = smul.u32 8, %s24
      %p405 = scmp.lt.s32.totalorder %s23, 1
      %s406 = scalar_select %p405, %s23, 1
      %p407 = scmp.lt.s32.totalorder %s404, 15
      %s408 = scalar_select %p407, %s404, 15
      %s409 = smul.addr %s408, 2
      %s410 = smul.addr %s406, 32
      %s411 = sadd.s32 %s409, %s410
      %s412 = smul.addr %s411, 4
      %s413 = scalar_lea.vmem %s0, %s412
      %s414 = smul.u32 8, %s24
      %s415 = smul.u32 %s24, 8
      %s416 = ssub.s32 %s415, 1
      %p417 = scmp.gt.s32.totalorder %s416, 0
      %s418 = scalar_select %p417, %s416, 0
      %p419 = scmp.lt.s32.totalorder %s23, 1
      %s420 = scalar_select %p419, %s23, 1
      %p421 = scmp.lt.s32.totalorder %s418, 15
      %s422 = scalar_select %p421, %s418, 15
      %s423 = smul.addr %s422, 2
      %s424 = smul.addr %s420, 32
      %s425 = sadd.s32 %s423, %s424
      %s426 = smul.addr %s425, 4
      %s427 = scalar_lea.vmem %s1, %s426
      %s428 = smul.u32 %s24, 8
      %s429 = ssub.s32 %s428, 1
      %p430 = scmp.gt.s32.totalorder %s429, 0
      %s431 = scalar_select %p430, %s429, 0
      %s432 = sadd.s32 %s24, 1
      %s433 = smul.u32 %s432, 8
      %p434 = scmp.lt.s32.totalorder %s433, 15
      %s435 = scalar_select %p434, %s433, 15
      %p436 = scmp.lt.s32.totalorder %s23, 1
      %s437 = scalar_select %p436, %s23, 1
      %p438 = scmp.lt.s32.totalorder %s435, 15
      %s439 = scalar_select %p438, %s435, 15
      %s440 = smul.addr %s439, 2
      %s441 = smul.addr %s437, 32
      %s442 = sadd.s32 %s440, %s441
      %s443 = smul.addr %s442, 4
      %s444 = scalar_lea.vmem %s2, %s443
      %s445 = sadd.s32 %s24, 1
      %s446 = smul.u32 %s445, 8
      %p447 = scmp.lt.s32.totalorder %s446, 15
      %s448 = scalar_select %p447, %s446, 15
      %s449 = smul.u32 8, %s24
      %p450 = scmp.lt.s32.totalorder %s23, 1
      %s451 = scalar_select %p450, %s23, 1
      %p452 = scmp.lt.s32.totalorder %s449, 15
      %s453 = scalar_select %p452, %s449, 15
      %s454 = smul.addr %s453, 2
      %s455 = smul.addr %s451, 32
      %s456 = sadd.s32 %s454, %s455
      %s457 = smul.addr %s456, 8
      %s458 = scalar_lea.vmem %s6, %s457
      %s459 = smul.u32 8, %s24
      %p460 = scmp.lt.s32.totalorder %s23, 1
      %s461 = scalar_select %p460, %s23, 1
      %p462 = scmp.lt.s32.totalorder %s24, 1
      %s463 = scalar_select %p462, %s24, 1
      %s464 = smul.addr %s461, 2
      %s465 = sadd.s32 %s463, %s464
      %s466 = smul.addr %s465, 2
      %s467 = scalar_lea.vmem %s7, %s466
      %vm469 = vcmask 27648
      %470 = vst.msk [vmem:[#allocation2] sm:$0xf] %vm469, 0
      %471 = vst.msk [vmem:[#allocation2 + $0x4] sm:$0xf] %vm469, 0
      %vm472 = vcmask 24576
      %473 = vst.msk [vmem:[#allocation2 + $0x8] sm:$0x1] %vm472, 0
      %474 = vst.msk [vmem:[#allocation2 + $0xc] sm:$0xf] %vm469, 0
      %475 = vst.msk [vmem:[#allocation2 + $0x10] sm:$0xf] %vm469, 0
      %476 = vst.msk [vmem:[#allocation2 + $0x14] sm:$0x1] %vm472, 0
      %477 = vst.msk [vmem:[#allocation2 + $0x18] sm:$0xf] %vm469, 0
      %478 = vst.msk [vmem:[#allocation2 + $0x1c] sm:$0xf] %vm469, 0
      %479 = vst.msk [vmem:[#allocation2 + $0x20] sm:$0x1] %vm472, 0
      %480 = vst.msk [vmem:[#allocation2 + $0x24] sm:$0xf] %vm469, 0
      %481 = vst.msk [vmem:[#allocation2 + $0x28] sm:$0xf] %vm469, 0
      %482 = vst.msk [vmem:[#allocation2 + $0x2c] sm:$0x1] %vm472, 0
      %483 = vst.msk [vmem:[#allocation2 + $0x30] sm:$0xf] %vm469, 0
      %484 = vst.msk [vmem:[#allocation2 + $0x34] sm:$0xf] %vm469, 0
      %485 = vst.msk [vmem:[#allocation2 + $0x38] sm:$0x1] %vm472, 0
      %486 = vst.msk [vmem:[#allocation2 + $0x3c] sm:$0xf] %vm469, 0
      %487 = vst.msk [vmem:[#allocation2 + $0x40] sm:$0xf] %vm469, 0
      %488 = vst.msk [vmem:[#allocation2 + $0x44] sm:$0x1] %vm472, 0
      %489 = vst.msk [vmem:[#allocation2 + $0x48] sm:$0xf] %vm469, 0
      %490 = vst.msk [vmem:[#allocation2 + $0x4c] sm:$0xf] %vm469, 0
      %491 = vst.msk [vmem:[#allocation2 + $0x50] sm:$0x1] %vm472, 0
      %492 = vst.msk [vmem:[#allocation2 + $0x54] sm:$0xf] %vm469, 0
      %493 = vst.msk [vmem:[#allocation2 + $0x58] sm:$0xf] %vm469, 0
      %494 = vst.msk [vmem:[#allocation2 + $0x5c] sm:$0x1] %vm472, 0
      %495 = vst.msk [vmem:[#allocation2 + $0x60] sm:$0xf] %vm469, 0
      %496 = vst.msk [vmem:[#allocation2 + $0x64] sm:$0xf] %vm469, 0
      %497 = vst.msk [vmem:[#allocation2 + $0x68] sm:$0x1] %vm472, 0
      %498 = vst.msk [vmem:[#allocation2 + $0x6c] sm:$0xf] %vm469, 0
      %499 = vst.msk [vmem:[#allocation2 + $0x70] sm:$0xf] %vm469, 0
      %500 = vst.msk [vmem:[#allocation2 + $0x74] sm:$0x1] %vm472, 0
      %v501 = vld [vmem:[%s413] sm:$0xf]
      %v502 = vld [vmem:[%s413 + $0x4] sm:$0xf]
      %v503 = vld [vmem:[%s413 + $0x8] sm:$0xf]
      %v504 = vld [vmem:[%s413 + $0xc] sm:$0xf]
      %v505 = vld [vmem:[%s413 + $0x10] sm:$0xf]
      %v506 = vld [vmem:[%s413 + $0x14] sm:$0xf]
      %v507 = vld [vmem:[%s413 + $0x18] sm:$0xf]
      %v508 = vld [vmem:[%s413 + $0x1c] sm:$0xf]
      %v509 = vld [vmem:[%s413 + $0x20] sm:$0xf]
      %v510 = vld [vmem:[%s413 + $0x24] sm:$0xf]
      %v511 = vld [vmem:[%s413 + $0x28] sm:$0xf]
      %v512 = vld [vmem:[%s413 + $0x2c] sm:$0xf]
      %v513 = vld [vmem:[%s413 + $0x30] sm:$0xf]
      %v514 = vld [vmem:[%s413 + $0x34] sm:$0xf]
      %v515 = vld [vmem:[%s413 + $0x38] sm:$0xf]
      %v516 = vld [vmem:[%s413 + $0x3c] sm:$0xf]
      %vm517 = vsmask.f32 256
      %vm518 = vsmask.f32 4368
      %vm519 = vmor %vm517, %vm518
      %v521 = vshrl.u32 %v501, 16
      %v523 = vrot.slane %v521, 7
      %v524 = vshll.u32 %v501, 16
      %v526 = vor.u32 %v523, %v524
      %v527 = vrot.slane %v523, 4
      %v529 = vshrl.u32 %v502, 16
      %v531 = vrot.slane %v529, 7
      %v532 = vshll.u32 %v502, 16
      %v534 = vor.u32 %v531, %v532
      %v535 = vsel %vm519, %v527, %v534
      %v536 = vrot.slane %v531, 4
      %v538 = vshrl.u32 %v503, 16
      %v540 = vrot.slane %v538, 7
      %v541 = vshll.u32 %v503, 16
      %v543 = vor.u32 %v540, %v541
      %v544 = vrot.slane %v540, 4
      %v546 = vshrl.u32 %v504, 16
      %v548 = vrot.slane %v546, 7
      %v549 = vshll.u32 %v504, 16
      %v551 = vor.u32 %v548, %v549
      %v552 = vsel %vm519, %v544, %v551
      %v553 = vrot.slane %v548, 4
      %v555 = vshrl.u32 %v505, 16
      %v557 = vrot.slane %v555, 7
      %v558 = vshll.u32 %v505, 16
      %v560 = vor.u32 %v557, %v558
      %v561 = vrot.slane %v557, 4
      %v563 = vshrl.u32 %v506, 16
      %v565 = vrot.slane %v563, 7
      %v566 = vshll.u32 %v506, 16
      %v568 = vor.u32 %v565, %v566
      %v569 = vsel %vm519, %v561, %v568
      %v570 = vrot.slane %v565, 4
      %v572 = vshrl.u32 %v507, 16
      %v574 = vrot.slane %v572, 7
      %v575 = vshll.u32 %v507, 16
      %v577 = vor.u32 %v574, %v575
      %v578 = vrot.slane %v574, 4
      %v580 = vshrl.u32 %v508, 16
      %v582 = vrot.slane %v580, 7
      %v583 = vshll.u32 %v508, 16
      %v585 = vor.u32 %v582, %v583
      %v586 = vsel %vm519, %v578, %v585
      %v587 = vrot.slane %v582, 4
      %v589 = vshrl.u32 %v509, 16
      %v591 = vrot.slane %v589, 7
      %v592 = vshll.u32 %v509, 16
      %v594 = vor.u32 %v591, %v592
      %v595 = vrot.slane %v591, 4
      %v597 = vshrl.u32 %v510, 16
      %v599 = vrot.slane %v597, 7
      %v600 = vshll.u32 %v510, 16
      %v602 = vor.u32 %v599, %v600
      %v603 = vsel %vm519, %v595, %v602
      %v604 = vrot.slane %v599, 4
      %v606 = vshrl.u32 %v511, 16
      %v608 = vrot.slane %v606, 7
      %v609 = vshll.u32 %v511, 16
      %v611 = vor.u32 %v608, %v609
      %v612 = vrot.slane %v608, 4
      %v614 = vshrl.u32 %v512, 16
      %v616 = vrot.slane %v614, 7
      %v617 = vshll.u32 %v512, 16
      %v619 = vor.u32 %v616, %v617
      %v620 = vsel %vm519, %v612, %v619
      %v621 = vrot.slane %v616, 4
      %v623 = vshrl.u32 %v513, 16
      %v625 = vrot.slane %v623, 7
      %v626 = vshll.u32 %v513, 16
      %v628 = vor.u32 %v625, %v626
      %v629 = vrot.slane %v625, 4
      %v631 = vshrl.u32 %v514, 16
      %v633 = vrot.slane %v631, 7
      %v634 = vshll.u32 %v514, 16
      %v636 = vor.u32 %v633, %v634
      %v637 = vsel %vm519, %v629, %v636
      %v638 = vrot.slane %v633, 4
      %v640 = vshrl.u32 %v515, 16
      %v642 = vrot.slane %v640, 7
      %v643 = vshll.u32 %v515, 16
      %v645 = vor.u32 %v642, %v643
      %v646 = vrot.slane %v642, 4
      %v648 = vshrl.u32 %v516, 16
      %v650 = vrot.slane %v648, 7
      %v651 = vshll.u32 %v516, 16
      %v653 = vor.u32 %v650, %v651
      %v654 = vsel %vm519, %v646, %v653
      %v655 = vrot.slane %v650, 4
      %s680 = scalar_lea.vmem [#allocation2], 12
      %vm681 = vcmask 27648
      %vm682 = vsmask.f32 7938
      %vm683 = vmand %vm681, %vm682
      %v684 = vld [vmem:[%s680] sm:$0xf]
      %v685 = vsel %vm683, %v526, %v684
      %686 = vst [vmem:[%s680] sm:$0xf] %v685
      %687 = vst.msk [vmem:[%s680 + $0x4] sm:$0xf] %vm469, %v535
      %vm688 = vcmask 24576
      %vm689 = vmand %vm688, %vm517
      %v690 = vld [vmem:[%s680 + $0x8] sm:$0x1]
      %v691 = vsel %vm689, %v536, %v690
      %692 = vst [vmem:[%s680 + $0x8] sm:$0x1] %v691
      %v693 = vld [vmem:[%s680 + $0xc] sm:$0xf]
      %v694 = vsel %vm683, %v543, %v693
      %695 = vst [vmem:[%s680 + $0xc] sm:$0xf] %v694
      %696 = vst.msk [vmem:[%s680 + $0x10] sm:$0xf] %vm469, %v552
      %v697 = vld [vmem:[%s680 + $0x14] sm:$0x1]
      %v698 = vsel %vm689, %v553, %v697
      %699 = vst [vmem:[%s680 + $0x14] sm:$0x1] %v698
      %v700 = vld [vmem:[%s680 + $0x18] sm:$0xf]
      %v701 = vsel %vm683, %v560, %v700
      %702 = vst [vmem:[%s680 + $0x18] sm:$0xf] %v701
      %703 = vst.msk [vmem:[%s680 + $0x1c] sm:$0xf] %vm469, %v569
      %v704 = vld [vmem:[%s680 + $0x20] sm:$0x1]
      %v705 = vsel %vm689, %v570, %v704
      %706 = vst [vmem:[%s680 + $0x20] sm:$0x1] %v705
      %v707 = vld [vmem:[%s680 + $0x24] sm:$0xf]
      %v708 = vsel %vm683, %v577, %v707
      %709 = vst [vmem:[%s680 + $0x24] sm:$0xf] %v708
      %710 = vst.msk [vmem:[%s680 + $0x28] sm:$0xf] %vm469, %v586
      %v711 = vld [vmem:[%s680 + $0x2c] sm:$0x1]
      %v712 = vsel %vm689, %v587, %v711
      %713 = vst [vmem:[%s680 + $0x2c] sm:$0x1] %v712
      %v714 = vld [vmem:[%s680 + $0x30] sm:$0xf]
      %v715 = vsel %vm683, %v594, %v714
      %716 = vst [vmem:[%s680 + $0x30] sm:$0xf] %v715
      %717 = vst.msk [vmem:[%s680 + $0x34] sm:$0xf] %vm469, %v603
      %v718 = vld [vmem:[%s680 + $0x38] sm:$0x1]
      %v719 = vsel %vm689, %v604, %v718
      %720 = vst [vmem:[%s680 + $0x38] sm:$0x1] %v719
      %v721 = vld [vmem:[%s680 + $0x3c] sm:$0xf]
      %v722 = vsel %vm683, %v611, %v721
      %723 = vst [vmem:[%s680 + $0x3c] sm:$0xf] %v722
      %724 = vst.msk [vmem:[%s680 + $0x40] sm:$0xf] %vm469, %v620
      %v725 = vld [vmem:[%s680 + $0x44] sm:$0x1]
      %v726 = vsel %vm689, %v621, %v725
      %727 = vst [vmem:[%s680 + $0x44] sm:$0x1] %v726
      %v728 = vld [vmem:[%s680 + $0x48] sm:$0xf]
      %v729 = vsel %vm683, %v628, %v728
      %730 = vst [vmem:[%s680 + $0x48] sm:$0xf] %v729
      %731 = vst.msk [vmem:[%s680 + $0x4c] sm:$0xf] %vm469, %v637
      %v732 = vld [vmem:[%s680 + $0x50] sm:$0x1]
      %v733 = vsel %vm689, %v638, %v732
      %734 = vst [vmem:[%s680 + $0x50] sm:$0x1] %v733
      %v735 = vld [vmem:[%s680 + $0x54] sm:$0xf]
      %v736 = vsel %vm683, %v645, %v735
      %737 = vst [vmem:[%s680 + $0x54] sm:$0xf] %v736
      %738 = vst.msk [vmem:[%s680 + $0x58] sm:$0xf] %vm469, %v654
      %v739 = vld [vmem:[%s680 + $0x5c] sm:$0x1]
      %v740 = vsel %vm689, %v655, %v739
      %741 = vst [vmem:[%s680 + $0x5c] sm:$0x1] %v740
      %p742 = scmp.gt.s32.totalorder %s24, 0
      // Predicated region
      $region45: #{conv_block_forward.3} parent=43 // pred_check
        %p743 = pneg %p742
      $region46: #{conv_block_forward.3} parent=43 // pred_check_branch
        %745 = sbr.rel (%p743) target = $region48
      $region47: #{conv_block_forward.3} parent=43 // pred_region
        %v746 = vld [vmem:[%s427] sm:$0xf]
        %v747 = vld [vmem:[%s427 + $0x4] sm:$0xf]
        %v749 = vshrl.u32 %v746, 16
        %v751 = vrot.slane %v749, 7
        %v752 = vshll.u32 %v746, 16
        %v754 = vor.u32 %v751, %v752
        %v755 = vrot.slane %v751, 4
        %v757 = vshrl.u32 %v747, 16
        %v759 = vrot.slane %v757, 7
        %v760 = vshll.u32 %v747, 16
        %v762 = vor.u32 %v759, %v760
        %v763 = vsel %vm519, %v755, %v762
        %v764 = vrot.slane %v759, 4
        %v768 = vld [vmem:[#allocation2] sm:$0xf]
        %v769 = vsel %vm683, %v754, %v768
        %770 = vst [vmem:[#allocation2] sm:$0xf] %v769
        %771 = vst.msk [vmem:[#allocation2 + $0x4] sm:$0xf] %vm469, %v763
        %v772 = vld [vmem:[#allocation2 + $0x8] sm:$0x1]
        %v773 = vsel %vm689, %v764, %v772
        %774 = vst [vmem:[#allocation2 + $0x8] sm:$0x1] %v773
      $region48: #{conv_block_forward.3} parent=43 // pred_fallthru
        _
      %p775 = scmp.lt.s32.totalorder %s24, 1
      // Predicated region
      $region49: #{conv_block_forward.3} parent=43 // pred_check
        %p776 = pneg %p775
      $region50: #{conv_block_forward.3} parent=43 // pred_check_branch
        %778 = sbr.rel (%p776) target = $region52
      $region51: #{conv_block_forward.3} parent=43 // pred_region
        %v779 = vld [vmem:[%s444] sm:$0xf]
        %v780 = vld [vmem:[%s444 + $0x4] sm:$0xf]
        %v782 = vshrl.u32 %v779, 16
        %v784 = vrot.slane %v782, 7
        %v785 = vshll.u32 %v779, 16
        %v787 = vor.u32 %v784, %v785
        %v788 = vrot.slane %v784, 4
        %v790 = vshrl.u32 %v780, 16
        %v792 = vrot.slane %v790, 7
        %v793 = vshll.u32 %v780, 16
        %v795 = vor.u32 %v792, %v793
        %v796 = vsel %vm519, %v788, %v795
        %v797 = vrot.slane %v792, 4
        %s801 = scalar_lea.vmem [#allocation2], 108
        %v802 = vld [vmem:[%s801] sm:$0xf]
        %v803 = vsel %vm683, %v787, %v802
        %804 = vst [vmem:[%s801] sm:$0xf] %v803
        %805 = vst.msk [vmem:[%s801 + $0x4] sm:$0xf] %vm469, %v796
        %v806 = vld [vmem:[%s801 + $0x8] sm:$0x1]
        %v807 = vsel %vm689, %v797, %v806
        %808 = vst [vmem:[%s801 + $0x8] sm:$0x1] %v807
      $region52: #{conv_block_forward.3} parent=43 // pred_fallthru
        _
      %v809 = vld [vmem:[#allocation2] sm:$0xf]
      %v810 = vld [vmem:[#allocation2 + $0x4] sm:$0xf]
      %v811 = vld [vmem:[#allocation2 + $0xc] sm:$0xf]
      %v812 = vld [vmem:[#allocation2 + $0x10] sm:$0xf]
      %v813 = vld [vmem:[#allocation2 + $0x18] sm:$0xf]
      %v814 = vld [vmem:[#allocation2 + $0x1c] sm:$0xf]
      %v815 = vld [vmem:[#allocation2 + $0x24] sm:$0xf]
      %v816 = vld [vmem:[#allocation2 + $0x28] sm:$0xf]
      %v817 = vld [vmem:[#allocation2 + $0x30] sm:$0xf]
      %v818 = vld [vmem:[#allocation2 + $0x34] sm:$0xf]
      %v819 = vld [vmem:[#allocation2 + $0x3c] sm:$0xf]
      %v820 = vld [vmem:[#allocation2 + $0x40] sm:$0xf]
      %v821 = vld [vmem:[#allocation2 + $0x48] sm:$0xf]
      %v822 = vld [vmem:[#allocation2 + $0x4c] sm:$0xf]
      %v823 = vld [vmem:[#allocation2 + $0x54] sm:$0xf]
      %v824 = vld [vmem:[#allocation2 + $0x58] sm:$0xf]
      %v825 = vld [vmem:[#allocation2 + $0x8] sm:$0x1]
      %v826 = vld [vmem:[#allocation2 + $0x14] sm:$0x1]
      %v827 = vld [vmem:[#allocation2 + $0x20] sm:$0x1]
      %v828 = vld [vmem:[#allocation2 + $0x2c] sm:$0x1]
      %v829 = vld [vmem:[#allocation2 + $0x38] sm:$0x1]
      %v830 = vld [vmem:[#allocation2 + $0x44] sm:$0x1]
      %v831 = vld [vmem:[#allocation2 + $0x50] sm:$0x1]
      %v832 = vld [vmem:[#allocation2 + $0x5c] sm:$0x1]
      %vm833 = vsmask.f32 3328
      %vm834 = vsmask.f32 7440
      %vm835 = vmor %vm833, %vm834
      %v837 = vshrl.u32 %v809, 16
      %v839 = vrot.slane %v837, 4
      %v840 = vshll.u32 %v809, 16
      %v842 = vrot.slane %v840, 5
      %v843 = vor.u32 %v839, %v842
      %v844 = vrot.slane %v843, 4
      %v846 = vshll.u32 %v810, 16
      %v848 = vrot.slane %v846, 5
      %v849 = vsel %vm835, %v844, %v848
      %v850 = vshrl.u32 %v810, 16
      %v852 = vrot.slane %v850, 4
      %v853 = vor.u32 %v852, %v848
      %v854 = vrot.slane %v853, 4
      %v856 = vshll.u32 %v825, 16
      %v858 = vrot.slane %v856, 5
      %v859 = vsel %vm835, %v854, %v858
      %v861 = vshrl.u32 %v811, 16
      %v863 = vrot.slane %v861, 4
      %v864 = vshll.u32 %v811, 16
      %v866 = vrot.slane %v864, 5
      %v867 = vor.u32 %v863, %v866
      %v868 = vrot.slane %v867, 4
      %v870 = vshll.u32 %v812, 16
      %v872 = vrot.slane %v870, 5
      %v873 = vsel %vm835, %v868, %v872
      %v874 = vshrl.u32 %v812, 16
      %v876 = vrot.slane %v874, 4
      %v877 = vor.u32 %v876, %v872
      %v878 = vrot.slane %v877, 4
      %v880 = vshll.u32 %v826, 16
      %v882 = vrot.slane %v880, 5
      %v883 = vsel %vm835, %v878, %v882
      %v885 = vshrl.u32 %v813, 16
      %v887 = vrot.slane %v885, 4
      %v888 = vshll.u32 %v813, 16
      %v890 = vrot.slane %v888, 5
      %v891 = vor.u32 %v887, %v890
      %v892 = vrot.slane %v891, 4
      %v894 = vshll.u32 %v814, 16
      %v896 = vrot.slane %v894, 5
      %v897 = vsel %vm835, %v892, %v896
      %v898 = vshrl.u32 %v814, 16
      %v900 = vrot.slane %v898, 4
      %v901 = vor.u32 %v900, %v896
      %v902 = vrot.slane %v901, 4
      %v904 = vshll.u32 %v827, 16
      %v906 = vrot.slane %v904, 5
      %v907 = vsel %vm835, %v902, %v906
      %v909 = vshrl.u32 %v815, 16
      %v911 = vrot.slane %v909, 4
      %v912 = vshll.u32 %v815, 16
      %v914 = vrot.slane %v912, 5
      %v915 = vor.u32 %v911, %v914
      %v916 = vrot.slane %v915, 4
      %v918 = vshll.u32 %v816, 16
      %v920 = vrot.slane %v918, 5
      %v921 = vsel %vm835, %v916, %v920
      %v922 = vshrl.u32 %v816, 16
      %v924 = vrot.slane %v922, 4
      %v925 = vor.u32 %v924, %v920
      %v926 = vrot.slane %v925, 4
      %v928 = vshll.u32 %v828, 16
      %v930 = vrot.slane %v928, 5
      %v931 = vsel %vm835, %v926, %v930
      %v933 = vshrl.u32 %v817, 16
      %v935 = vrot.slane %v933, 4
      %v936 = vshll.u32 %v817, 16
      %v938 = vrot.slane %v936, 5
      %v939 = vor.u32 %v935, %v938
      %v940 = vrot.slane %v939, 4
      %v942 = vshll.u32 %v818, 16
      %v944 = vrot.slane %v942, 5
      %v945 = vsel %vm835, %v940, %v944
      %v946 = vshrl.u32 %v818, 16
      %v948 = vrot.slane %v946, 4
      %v949 = vor.u32 %v948, %v944
      %v950 = vrot.slane %v949, 4
      %v952 = vshll.u32 %v829, 16
      %v954 = vrot.slane %v952, 5
      %v955 = vsel %vm835, %v950, %v954
      %v957 = vshrl.u32 %v819, 16
      %v959 = vrot.slane %v957, 4
      %v960 = vshll.u32 %v819, 16
      %v962 = vrot.slane %v960, 5
      %v963 = vor.u32 %v959, %v962
      %v964 = vrot.slane %v963, 4
      %v966 = vshll.u32 %v820, 16
      %v968 = vrot.slane %v966, 5
      %v969 = vsel %vm835, %v964, %v968
      %v970 = vshrl.u32 %v820, 16
      %v972 = vrot.slane %v970, 4
      %v973 = vor.u32 %v972, %v968
      %v974 = vrot.slane %v973, 4
      %v976 = vshll.u32 %v830, 16
      %v978 = vrot.slane %v976, 5
      %v979 = vsel %vm835, %v974, %v978
      %v981 = vshrl.u32 %v821, 16
      %v983 = vrot.slane %v981, 4
      %v984 = vshll.u32 %v821, 16
      %v986 = vrot.slane %v984, 5
      %v987 = vor.u32 %v983, %v986
      %v988 = vrot.slane %v987, 4
      %v990 = vshll.u32 %v822, 16
      %v992 = vrot.slane %v990, 5
      %v993 = vsel %vm835, %v988, %v992
      %v994 = vshrl.u32 %v822, 16
      %v996 = vrot.slane %v994, 4
      %v997 = vor.u32 %v996, %v992
      %v998 = vrot.slane %v997, 4
      %v1000 = vshll.u32 %v831, 16
      %v1002 = vrot.slane %v1000, 5
      %v1003 = vsel %vm835, %v998, %v1002
      %v1005 = vshrl.u32 %v823, 16
      %v1007 = vrot.slane %v1005, 4
      %v1008 = vshll.u32 %v823, 16
      %v1010 = vrot.slane %v1008, 5
      %v1011 = vor.u32 %v1007, %v1010
      %v1012 = vrot.slane %v1011, 4
      %v1014 = vshll.u32 %v824, 16
      %v1016 = vrot.slane %v1014, 5
      %v1017 = vsel %vm835, %v1012, %v1016
      %v1018 = vshrl.u32 %v824, 16
      %v1020 = vrot.slane %v1018, 4
      %v1021 = vor.u32 %v1020, %v1016
      %v1022 = vrot.slane %v1021, 4
      %v1024 = vshll.u32 %v832, 16
      %v1026 = vrot.slane %v1024, 5
      %v1027 = vsel %vm835, %v1022, %v1026
      %v1028 = vld [vmem:[#allocation2] sm:$0xe]
      %v1029 = vld [vmem:[#allocation2 + $0xc] sm:$0xe]
      %v1030 = vld [vmem:[#allocation2 + $0x18] sm:$0xe]
      %v1031 = vld [vmem:[#allocation2 + $0x24] sm:$0xe]
      %v1032 = vld [vmem:[#allocation2 + $0x30] sm:$0xe]
      %v1033 = vld [vmem:[#allocation2 + $0x3c] sm:$0xe]
      %v1034 = vld [vmem:[#allocation2 + $0x48] sm:$0xe]
      %v1035 = vld [vmem:[#allocation2 + $0x54] sm:$0xe]
      %vm1060 = vcmask 1042432
      %vm1061 = vcmask 1046532
      %vm1062 = vmor %vm1060, %vm1061
      %v1063 = vrot.slane %v1028, 5
      %v1064 = vrot.slane %v1063, 4
      %v1065 = vrot.slane %v810, 5
      %v1066 = vsel %vm1062, %v1064, %v1065
      %v1067 = vrot.slane %v1065, 4
      %v1068 = vrot.slane %v825, 5
      %v1069 = vsel %vm1062, %v1067, %v1068
      %v1070 = vrot.slane %v1029, 5
      %v1071 = vrot.slane %v1070, 4
      %v1072 = vrot.slane %v812, 5
      %v1073 = vsel %vm1062, %v1071, %v1072
      %v1074 = vrot.slane %v1072, 4
      %v1075 = vrot.slane %v826, 5
      %v1076 = vsel %vm1062, %v1074, %v1075
      %v1077 = vrot.slane %v1030, 5
      %v1078 = vrot.slane %v1077, 4
      %v1079 = vrot.slane %v814, 5
      %v1080 = vsel %vm1062, %v1078, %v1079
      %v1081 = vrot.slane %v1079, 4
      %v1082 = vrot.slane %v827, 5
      %v1083 = vsel %vm1062, %v1081, %v1082
      %v1084 = vrot.slane %v1031, 5
      %v1085 = vrot.slane %v1084, 4
      %v1086 = vrot.slane %v816, 5
      %v1087 = vsel %vm1062, %v1085, %v1086
      %v1088 = vrot.slane %v1086, 4
      %v1089 = vrot.slane %v828, 5
      %v1090 = vsel %vm1062, %v1088, %v1089
      %v1091 = vrot.slane %v1032, 5
      %v1092 = vrot.slane %v1091, 4
      %v1093 = vrot.slane %v818, 5
      %v1094 = vsel %vm1062, %v1092, %v1093
      %v1095 = vrot.slane %v1093, 4
      %v1096 = vrot.slane %v829, 5
      %v1097 = vsel %vm1062, %v1095, %v1096
      %v1098 = vrot.slane %v1033, 5
      %v1099 = vrot.slane %v1098, 4
      %v1100 = vrot.slane %v820, 5
      %v1101 = vsel %vm1062, %v1099, %v1100
      %v1102 = vrot.slane %v1100, 4
      %v1103 = vrot.slane %v830, 5
      %v1104 = vsel %vm1062, %v1102, %v1103
      %v1105 = vrot.slane %v1034, 5
      %v1106 = vrot.slane %v1105, 4
      %v1107 = vrot.slane %v822, 5
      %v1108 = vsel %vm1062, %v1106, %v1107
      %v1109 = vrot.slane %v1107, 4
      %v1110 = vrot.slane %v831, 5
      %v1111 = vsel %vm1062, %v1109, %v1110
      %v1112 = vrot.slane %v1035, 5
      %v1113 = vrot.slane %v1112, 4
      %v1114 = vrot.slane %v824, 5
      %v1115 = vsel %vm1062, %v1113, %v1114
      %v1116 = vrot.slane %v1114, 4
      %v1117 = vrot.slane %v832, 5
      %v1118 = vsel %vm1062, %v1116, %v1117
      %v1119 = vld [vmem:[%s680] sm:$0xf]
      %v1120 = vld [vmem:[%s680 + $0x4] sm:$0xf]
      %v1121 = vld [vmem:[%s680 + $0xc] sm:$0xf]
      %v1122 = vld [vmem:[%s680 + $0x10] sm:$0xf]
      %v1123 = vld [vmem:[%s680 + $0x18] sm:$0xf]
      %v1124 = vld [vmem:[%s680 + $0x1c] sm:$0xf]
      %v1125 = vld [vmem:[%s680 + $0x24] sm:$0xf]
      %v1126 = vld [vmem:[%s680 + $0x28] sm:$0xf]
      %v1127 = vld [vmem:[%s680 + $0x30] sm:$0xf]
      %v1128 = vld [vmem:[%s680 + $0x34] sm:$0xf]
      %v1129 = vld [vmem:[%s680 + $0x3c] sm:$0xf]
      %v1130 = vld [vmem:[%s680 + $0x40] sm:$0xf]
      %v1131 = vld [vmem:[%s680 + $0x48] sm:$0xf]
      %v1132 = vld [vmem:[%s680 + $0x4c] sm:$0xf]
      %v1133 = vld [vmem:[%s680 + $0x54] sm:$0xf]
      %v1134 = vld [vmem:[%s680 + $0x58] sm:$0xf]
      %v1135 = vld [vmem:[%s680 + $0x8] sm:$0x1]
      %v1136 = vld [vmem:[%s680 + $0x14] sm:$0x1]
      %v1137 = vld [vmem:[%s680 + $0x20] sm:$0x1]
      %v1138 = vld [vmem:[%s680 + $0x2c] sm:$0x1]
      %v1139 = vld [vmem:[%s680 + $0x38] sm:$0x1]
      %v1140 = vld [vmem:[%s680 + $0x44] sm:$0x1]
      %v1141 = vld [vmem:[%s680 + $0x50] sm:$0x1]
      %v1142 = vld [vmem:[%s680 + $0x5c] sm:$0x1]
      %v1144 = vshrl.u32 %v1119, 16
      %v1146 = vrot.slane %v1144, 4
      %v1147 = vshll.u32 %v1119, 16
      %v1149 = vrot.slane %v1147, 5
      %v1150 = vor.u32 %v1146, %v1149
      %v1151 = vrot.slane %v1150, 4
      %v1153 = vshll.u32 %v1120, 16
      %v1155 = vrot.slane %v1153, 5
      %v1156 = vsel %vm835, %v1151, %v1155
      %v1157 = vshrl.u32 %v1120, 16
      %v1159 = vrot.slane %v1157, 4
      %v1160 = vor.u32 %v1159, %v1155
      %v1161 = vrot.slane %v1160, 4
      %v1163 = vshll.u32 %v1135, 16
      %v1165 = vrot.slane %v1163, 5
      %v1166 = vsel %vm835, %v1161, %v1165
      %v1168 = vshrl.u32 %v1121, 16
      %v1170 = vrot.slane %v1168, 4
      %v1171 = vshll.u32 %v1121, 16
      %v1173 = vrot.slane %v1171, 5
      %v1174 = vor.u32 %v1170, %v1173
      %v1175 = vrot.slane %v1174, 4
      %v1177 = vshll.u32 %v1122, 16
      %v1179 = vrot.slane %v1177, 5
      %v1180 = vsel %vm835, %v1175, %v1179
      %v1181 = vshrl.u32 %v1122, 16
      %v1183 = vrot.slane %v1181, 4
      %v1184 = vor.u32 %v1183, %v1179
      %v1185 = vrot.slane %v1184, 4
      %v1187 = vshll.u32 %v1136, 16
      %v1189 = vrot.slane %v1187, 5
      %v1190 = vsel %vm835, %v1185, %v1189
      %v1192 = vshrl.u32 %v1123, 16
      %v1194 = vrot.slane %v1192, 4
      %v1195 = vshll.u32 %v1123, 16
      %v1197 = vrot.slane %v1195, 5
      %v1198 = vor.u32 %v1194, %v1197
      %v1199 = vrot.slane %v1198, 4
      %v1201 = vshll.u32 %v1124, 16
      %v1203 = vrot.slane %v1201, 5
      %v1204 = vsel %vm835, %v1199, %v1203
      %v1205 = vshrl.u32 %v1124, 16
      %v1207 = vrot.slane %v1205, 4
      %v1208 = vor.u32 %v1207, %v1203
      %v1209 = vrot.slane %v1208, 4
      %v1211 = vshll.u32 %v1137, 16
      %v1213 = vrot.slane %v1211, 5
      %v1214 = vsel %vm835, %v1209, %v1213
      %v1216 = vshrl.u32 %v1125, 16
      %v1218 = vrot.slane %v1216, 4
      %v1219 = vshll.u32 %v1125, 16
      %v1221 = vrot.slane %v1219, 5
      %v1222 = vor.u32 %v1218, %v1221
      %v1223 = vrot.slane %v1222, 4
      %v1225 = vshll.u32 %v1126, 16
      %v1227 = vrot.slane %v1225, 5
      %v1228 = vsel %vm835, %v1223, %v1227
      %v1229 = vshrl.u32 %v1126, 16
      %v1231 = vrot.slane %v1229, 4
      %v1232 = vor.u32 %v1231, %v1227
      %v1233 = vrot.slane %v1232, 4
      %v1235 = vshll.u32 %v1138, 16
      %v1237 = vrot.slane %v1235, 5
      %v1238 = vsel %vm835, %v1233, %v1237
      %v1240 = vshrl.u32 %v1127, 16
      %v1242 = vrot.slane %v1240, 4
      %v1243 = vshll.u32 %v1127, 16
      %v1245 = vrot.slane %v1243, 5
      %v1246 = vor.u32 %v1242, %v1245
      %v1247 = vrot.slane %v1246, 4
      %v1249 = vshll.u32 %v1128, 16
      %v1251 = vrot.slane %v1249, 5
      %v1252 = vsel %vm835, %v1247, %v1251
      %v1253 = vshrl.u32 %v1128, 16
      %v1255 = vrot.slane %v1253, 4
      %v1256 = vor.u32 %v1255, %v1251
      %v1257 = vrot.slane %v1256, 4
      %v1259 = vshll.u32 %v1139, 16
      %v1261 = vrot.slane %v1259, 5
      %v1262 = vsel %vm835, %v1257, %v1261
      %v1264 = vshrl.u32 %v1129, 16
      %v1266 = vrot.slane %v1264, 4
      %v1267 = vshll.u32 %v1129, 16
      %v1269 = vrot.slane %v1267, 5
      %v1270 = vor.u32 %v1266, %v1269
      %v1271 = vrot.slane %v1270, 4
      %v1273 = vshll.u32 %v1130, 16
      %v1275 = vrot.slane %v1273, 5
      %v1276 = vsel %vm835, %v1271, %v1275
      %v1277 = vshrl.u32 %v1130, 16
      %v1279 = vrot.slane %v1277, 4
      %v1280 = vor.u32 %v1279, %v1275
      %v1281 = vrot.slane %v1280, 4
      %v1283 = vshll.u32 %v1140, 16
      %v1285 = vrot.slane %v1283, 5
      %v1286 = vsel %vm835, %v1281, %v1285
      %v1288 = vshrl.u32 %v1131, 16
      %v1290 = vrot.slane %v1288, 4
      %v1291 = vshll.u32 %v1131, 16
      %v1293 = vrot.slane %v1291, 5
      %v1294 = vor.u32 %v1290, %v1293
      %v1295 = vrot.slane %v1294, 4
      %v1297 = vshll.u32 %v1132, 16
      %v1299 = vrot.slane %v1297, 5
      %v1300 = vsel %vm835, %v1295, %v1299
      %v1301 = vshrl.u32 %v1132, 16
      %v1303 = vrot.slane %v1301, 4
      %v1304 = vor.u32 %v1303, %v1299
      %v1305 = vrot.slane %v1304, 4
      %v1307 = vshll.u32 %v1141, 16
      %v1309 = vrot.slane %v1307, 5
      %v1310 = vsel %vm835, %v1305, %v1309
      %v1312 = vshrl.u32 %v1133, 16
      %v1314 = vrot.slane %v1312, 4
      %v1315 = vshll.u32 %v1133, 16
      %v1317 = vrot.slane %v1315, 5
      %v1318 = vor.u32 %v1314, %v1317
      %v1319 = vrot.slane %v1318, 4
      %v1321 = vshll.u32 %v1134, 16
      %v1323 = vrot.slane %v1321, 5
      %v1324 = vsel %vm835, %v1319, %v1323
      %v1325 = vshrl.u32 %v1134, 16
      %v1327 = vrot.slane %v1325, 4
      %v1328 = vor.u32 %v1327, %v1323
      %v1329 = vrot.slane %v1328, 4
      %v1331 = vshll.u32 %v1142, 16
      %v1333 = vrot.slane %v1331, 5
      %v1334 = vsel %vm835, %v1329, %v1333
      %v1335 = vld [vmem:[%s680] sm:$0xe]
      %v1336 = vld [vmem:[%s680 + $0xc] sm:$0xe]
      %v1337 = vld [vmem:[%s680 + $0x18] sm:$0xe]
      %v1338 = vld [vmem:[%s680 + $0x24] sm:$0xe]
      %v1339 = vld [vmem:[%s680 + $0x30] sm:$0xe]
      %v1340 = vld [vmem:[%s680 + $0x3c] sm:$0xe]
      %v1341 = vld [vmem:[%s680 + $0x48] sm:$0xe]
      %v1342 = vld [vmem:[%s680 + $0x54] sm:$0xe]
      %v1367 = vrot.slane %v1335, 5
      %v1368 = vrot.slane %v1367, 4
      %v1369 = vrot.slane %v1120, 5
      %v1370 = vsel %vm1062, %v1368, %v1369
      %v1371 = vrot.slane %v1369, 4
      %v1372 = vrot.slane %v1135, 5
      %v1373 = vsel %vm1062, %v1371, %v1372
      %v1374 = vrot.slane %v1336, 5
      %v1375 = vrot.slane %v1374, 4
      %v1376 = vrot.slane %v1122, 5
      %v1377 = vsel %vm1062, %v1375, %v1376
      %v1378 = vrot.slane %v1376, 4
      %v1379 = vrot.slane %v1136, 5
      %v1380 = vsel %vm1062, %v1378, %v1379
      %v1381 = vrot.slane %v1337, 5
      %v1382 = vrot.slane %v1381, 4
      %v1383 = vrot.slane %v1124, 5
      %v1384 = vsel %vm1062, %v1382, %v1383
      %v1385 = vrot.slane %v1383, 4
      %v1386 = vrot.slane %v1137, 5
      %v1387 = vsel %vm1062, %v1385, %v1386
      %v1388 = vrot.slane %v1338, 5
      %v1389 = vrot.slane %v1388, 4
      %v1390 = vrot.slane %v1126, 5
      %v1391 = vsel %vm1062, %v1389, %v1390
      %v1392 = vrot.slane %v1390, 4
      %v1393 = vrot.slane %v1138, 5
      %v1394 = vsel %vm1062, %v1392, %v1393
      %v1395 = vrot.slane %v1339, 5
      %v1396 = vrot.slane %v1395, 4
      %v1397 = vrot.slane %v1128, 5
      %v1398 = vsel %vm1062, %v1396, %v1397
      %v1399 = vrot.slane %v1397, 4
      %v1400 = vrot.slane %v1139, 5
      %v1401 = vsel %vm1062, %v1399, %v1400
      %v1402 = vrot.slane %v1340, 5
      %v1403 = vrot.slane %v1402, 4
      %v1404 = vrot.slane %v1130, 5
      %v1405 = vsel %vm1062, %v1403, %v1404
      %v1406 = vrot.slane %v1404, 4
      %v1407 = vrot.slane %v1140, 5
      %v1408 = vsel %vm1062, %v1406, %v1407
      %v1409 = vrot.slane %v1341, 5
      %v1410 = vrot.slane %v1409, 4
      %v1411 = vrot.slane %v1132, 5
      %v1412 = vsel %vm1062, %v1410, %v1411
      %v1413 = vrot.slane %v1411, 4
      %v1414 = vrot.slane %v1141, 5
      %v1415 = vsel %vm1062, %v1413, %v1414
      %v1416 = vrot.slane %v1342, 5
      %v1417 = vrot.slane %v1416, 4
      %v1418 = vrot.slane %v1134, 5
      %v1419 = vsel %vm1062, %v1417, %v1418
      %v1420 = vrot.slane %v1418, 4
      %v1421 = vrot.slane %v1142, 5
      %v1422 = vsel %vm1062, %v1420, %v1421
      %s1423 = scalar_lea.vmem [#allocation2], 24
      %v1424 = vld [vmem:[%s1423] sm:$0xf]
      %v1425 = vld [vmem:[%s1423 + $0x4] sm:$0xf]
      %v1426 = vld [vmem:[%s1423 + $0xc] sm:$0xf]
      %v1427 = vld [vmem:[%s1423 + $0x10] sm:$0xf]
      %v1428 = vld [vmem:[%s1423 + $0x18] sm:$0xf]
      %v1429 = vld [vmem:[%s1423 + $0x1c] sm:$0xf]
      %v1430 = vld [vmem:[%s1423 + $0x24] sm:$0xf]
      %v1431 = vld [vmem:[%s1423 + $0x28] sm:$0xf]
      %v1432 = vld [vmem:[%s1423 + $0x30] sm:$0xf]
      %v1433 = vld [vmem:[%s1423 + $0x34] sm:$0xf]
      %v1434 = vld [vmem:[%s1423 + $0x3c] sm:$0xf]
      %v1435 = vld [vmem:[%s1423 + $0x40] sm:$0xf]
      %v1436 = vld [vmem:[%s1423 + $0x48] sm:$0xf]
      %v1437 = vld [vmem:[%s1423 + $0x4c] sm:$0xf]
      %v1438 = vld [vmem:[%s1423 + $0x54] sm:$0xf]
      %v1439 = vld [vmem:[%s1423 + $0x58] sm:$0xf]
      %v1440 = vld [vmem:[%s1423 + $0x8] sm:$0x1]
      %v1441 = vld [vmem:[%s1423 + $0x14] sm:$0x1]
      %v1442 = vld [vmem:[%s1423 + $0x20] sm:$0x1]
      %v1443 = vld [vmem:[%s1423 + $0x2c] sm:$0x1]
      %v1444 = vld [vmem:[%s1423 + $0x38] sm:$0x1]
      %v1445 = vld [vmem:[%s1423 + $0x44] sm:$0x1]
      %v1446 = vld [vmem:[%s1423 + $0x50] sm:$0x1]
      %v1447 = vld [vmem:[%s1423 + $0x5c] sm:$0x1]
      %v1449 = vshrl.u32 %v1424, 16
      %v1451 = vrot.slane %v1449, 4
      %v1452 = vshll.u32 %v1424, 16
      %v1454 = vrot.slane %v1452, 5
      %v1455 = vor.u32 %v1451, %v1454
      %v1456 = vrot.slane %v1455, 4
      %v1458 = vshll.u32 %v1425, 16
      %v1460 = vrot.slane %v1458, 5
      %v1461 = vsel %vm835, %v1456, %v1460
      %v1462 = vshrl.u32 %v1425, 16
      %v1464 = vrot.slane %v1462, 4
      %v1465 = vor.u32 %v1464, %v1460
      %v1466 = vrot.slane %v1465, 4
      %v1468 = vshll.u32 %v1440, 16
      %v1470 = vrot.slane %v1468, 5
      %v1471 = vsel %vm835, %v1466, %v1470
      %v1473 = vshrl.u32 %v1426, 16
      %v1475 = vrot.slane %v1473, 4
      %v1476 = vshll.u32 %v1426, 16
      %v1478 = vrot.slane %v1476, 5
      %v1479 = vor.u32 %v1475, %v1478
      %v1480 = vrot.slane %v1479, 4
      %v1482 = vshll.u32 %v1427, 16
      %v1484 = vrot.slane %v1482, 5
      %v1485 = vsel %vm835, %v1480, %v1484
      %v1486 = vshrl.u32 %v1427, 16
      %v1488 = vrot.slane %v1486, 4
      %v1489 = vor.u32 %v1488, %v1484
      %v1490 = vrot.slane %v1489, 4
      %v1492 = vshll.u32 %v1441, 16
      %v1494 = vrot.slane %v1492, 5
      %v1495 = vsel %vm835, %v1490, %v1494
      %v1497 = vshrl.u32 %v1428, 16
      %v1499 = vrot.slane %v1497, 4
      %v1500 = vshll.u32 %v1428, 16
      %v1502 = vrot.slane %v1500, 5
      %v1503 = vor.u32 %v1499, %v1502
      %v1504 = vrot.slane %v1503, 4
      %v1506 = vshll.u32 %v1429, 16
      %v1508 = vrot.slane %v1506, 5
      %v1509 = vsel %vm835, %v1504, %v1508
      %v1510 = vshrl.u32 %v1429, 16
      %v1512 = vrot.slane %v1510, 4
      %v1513 = vor.u32 %v1512, %v1508
      %v1514 = vrot.slane %v1513, 4
      %v1516 = vshll.u32 %v1442, 16
      %v1518 = vrot.slane %v1516, 5
      %v1519 = vsel %vm835, %v1514, %v1518
      %v1521 = vshrl.u32 %v1430, 16
      %v1523 = vrot.slane %v1521, 4
      %v1524 = vshll.u32 %v1430, 16
      %v1526 = vrot.slane %v1524, 5
      %v1527 = vor.u32 %v1523, %v1526
      %v1528 = vrot.slane %v1527, 4
      %v1530 = vshll.u32 %v1431, 16
      %v1532 = vrot.slane %v1530, 5
      %v1533 = vsel %vm835, %v1528, %v1532
      %v1534 = vshrl.u32 %v1431, 16
      %v1536 = vrot.slane %v1534, 4
      %v1537 = vor.u32 %v1536, %v1532
      %v1538 = vrot.slane %v1537, 4
      %v1540 = vshll.u32 %v1443, 16
      %v1542 = vrot.slane %v1540, 5
      %v1543 = vsel %vm835, %v1538, %v1542
      %v1545 = vshrl.u32 %v1432, 16
      %v1547 = vrot.slane %v1545, 4
      %v1548 = vshll.u32 %v1432, 16
      %v1550 = vrot.slane %v1548, 5
      %v1551 = vor.u32 %v1547, %v1550
      %v1552 = vrot.slane %v1551, 4
      %v1554 = vshll.u32 %v1433, 16
      %v1556 = vrot.slane %v1554, 5
      %v1557 = vsel %vm835, %v1552, %v1556
      %v1558 = vshrl.u32 %v1433, 16
      %v1560 = vrot.slane %v1558, 4
      %v1561 = vor.u32 %v1560, %v1556
      %v1562 = vrot.slane %v1561, 4
      %v1564 = vshll.u32 %v1444, 16
      %v1566 = vrot.slane %v1564, 5
      %v1567 = vsel %vm835, %v1562, %v1566
      %v1569 = vshrl.u32 %v1434, 16
      %v1571 = vrot.slane %v1569, 4
      %v1572 = vshll.u32 %v1434, 16
      %v1574 = vrot.slane %v1572, 5
      %v1575 = vor.u32 %v1571, %v1574
      %v1576 = vrot.slane %v1575, 4
      %v1578 = vshll.u32 %v1435, 16
      %v1580 = vrot.slane %v1578, 5
      %v1581 = vsel %vm835, %v1576, %v1580
      %v1582 = vshrl.u32 %v1435, 16
      %v1584 = vrot.slane %v1582, 4
      %v1585 = vor.u32 %v1584, %v1580
      %v1586 = vrot.slane %v1585, 4
      %v1588 = vshll.u32 %v1445, 16
      %v1590 = vrot.slane %v1588, 5
      %v1591 = vsel %vm835, %v1586, %v1590
      %v1593 = vshrl.u32 %v1436, 16
      %v1595 = vrot.slane %v1593, 4
      %v1596 = vshll.u32 %v1436, 16
      %v1598 = vrot.slane %v1596, 5
      %v1599 = vor.u32 %v1595, %v1598
      %v1600 = vrot.slane %v1599, 4
      %v1602 = vshll.u32 %v1437, 16
      %v1604 = vrot.slane %v1602, 5
      %v1605 = vsel %vm835, %v1600, %v1604
      %v1606 = vshrl.u32 %v1437, 16
      %v1608 = vrot.slane %v1606, 4
      %v1609 = vor.u32 %v1608, %v1604
      %v1610 = vrot.slane %v1609, 4
      %v1612 = vshll.u32 %v1446, 16
      %v1614 = vrot.slane %v1612, 5
      %v1615 = vsel %vm835, %v1610, %v1614
      %v1617 = vshrl.u32 %v1438, 16
      %v1619 = vrot.slane %v1617, 4
      %v1620 = vshll.u32 %v1438, 16
      %v1622 = vrot.slane %v1620, 5
      %v1623 = vor.u32 %v1619, %v1622
      %v1624 = vrot.slane %v1623, 4
      %v1626 = vshll.u32 %v1439, 16
      %v1628 = vrot.slane %v1626, 5
      %v1629 = vsel %vm835, %v1624, %v1628
      %v1630 = vshrl.u32 %v1439, 16
      %v1632 = vrot.slane %v1630, 4
      %v1633 = vor.u32 %v1632, %v1628
      %v1634 = vrot.slane %v1633, 4
      %v1636 = vshll.u32 %v1447, 16
      %v1638 = vrot.slane %v1636, 5
      %v1639 = vsel %vm835, %v1634, %v1638
      %v1640 = vld [vmem:[%s1423] sm:$0xe]
      %v1641 = vld [vmem:[%s1423 + $0xc] sm:$0xe]
      %v1642 = vld [vmem:[%s1423 + $0x18] sm:$0xe]
      %v1643 = vld [vmem:[%s1423 + $0x24] sm:$0xe]
      %v1644 = vld [vmem:[%s1423 + $0x30] sm:$0xe]
      %v1645 = vld [vmem:[%s1423 + $0x3c] sm:$0xe]
      %v1646 = vld [vmem:[%s1423 + $0x48] sm:$0xe]
      %v1647 = vld [vmem:[%s1423 + $0x54] sm:$0xe]
      %v1672 = vrot.slane %v1640, 5
      %v1673 = vrot.slane %v1672, 4
      %v1674 = vrot.slane %v1425, 5
      %v1675 = vsel %vm1062, %v1673, %v1674
      %v1676 = vrot.slane %v1674, 4
      %v1677 = vrot.slane %v1440, 5
      %v1678 = vsel %vm1062, %v1676, %v1677
      %v1679 = vrot.slane %v1641, 5
      %v1680 = vrot.slane %v1679, 4
      %v1681 = vrot.slane %v1427, 5
      %v1682 = vsel %vm1062, %v1680, %v1681
      %v1683 = vrot.slane %v1681, 4
      %v1684 = vrot.slane %v1441, 5
      %v1685 = vsel %vm1062, %v1683, %v1684
      %v1686 = vrot.slane %v1642, 5
      %v1687 = vrot.slane %v1686, 4
      %v1688 = vrot.slane %v1429, 5
      %v1689 = vsel %vm1062, %v1687, %v1688
      %v1690 = vrot.slane %v1688, 4
      %v1691 = vrot.slane %v1442, 5
      %v1692 = vsel %vm1062, %v1690, %v1691
      %v1693 = vrot.slane %v1643, 5
      %v1694 = vrot.slane %v1693, 4
      %v1695 = vrot.slane %v1431, 5
      %v1696 = vsel %vm1062, %v1694, %v1695
      %v1697 = vrot.slane %v1695, 4
      %v1698 = vrot.slane %v1443, 5
      %v1699 = vsel %vm1062, %v1697, %v1698
      %v1700 = vrot.slane %v1644, 5
      %v1701 = vrot.slane %v1700, 4
      %v1702 = vrot.slane %v1433, 5
      %v1703 = vsel %vm1062, %v1701, %v1702
      %v1704 = vrot.slane %v1702, 4
      %v1705 = vrot.slane %v1444, 5
      %v1706 = vsel %vm1062, %v1704, %v1705
      %v1707 = vrot.slane %v1645, 5
      %v1708 = vrot.slane %v1707, 4
      %v1709 = vrot.slane %v1435, 5
      %v1710 = vsel %vm1062, %v1708, %v1709
      %v1711 = vrot.slane %v1709, 4
      %v1712 = vrot.slane %v1445, 5
      %v1713 = vsel %vm1062, %v1711, %v1712
      %v1714 = vrot.slane %v1646, 5
      %v1715 = vrot.slane %v1714, 4
      %v1716 = vrot.slane %v1437, 5
      %v1717 = vsel %vm1062, %v1715, %v1716
      %v1718 = vrot.slane %v1716, 4
      %v1719 = vrot.slane %v1446, 5
      %v1720 = vsel %vm1062, %v1718, %v1719
      %v1721 = vrot.slane %v1647, 5
      %v1722 = vrot.slane %v1721, 4
      %v1723 = vrot.slane %v1439, 5
      %v1724 = vsel %vm1062, %v1722, %v1723
      %v1725 = vrot.slane %v1723, 4
      %v1726 = vrot.slane %v1447, 5
      %v1727 = vsel %vm1062, %v1725, %v1726
      %v1736 = vunpack.c.l.b16 %v809
      %v1737 = vunpack.c.l.b16 %v810
      %v1738 = vunpack.c.l.b16 %v811
      %v1739 = vunpack.c.l.b16 %v812
      %v1740 = vunpack.c.l.b16 %v813
      %v1741 = vunpack.c.l.b16 %v814
      %v1742 = vunpack.c.l.b16 %v815
      %v1743 = vunpack.c.l.b16 %v816
      %v1744 = vunpack.c.l.b16 %v817
      %v1745 = vunpack.c.l.b16 %v818
      %v1746 = vunpack.c.l.b16 %v819
      %v1747 = vunpack.c.l.b16 %v820
      %v1748 = vunpack.c.l.b16 %v821
      %v1749 = vunpack.c.l.b16 %v822
      %v1750 = vunpack.c.l.b16 %v823
      %v1751 = vunpack.c.l.b16 %v824
      %v1752 = vpack.c.b16 %v1737, %v1736
      %v1753 = vpack.c.b16 %v1739, %v1738
      %v1754 = vpack.c.b16 %v1741, %v1740
      %v1755 = vpack.c.b16 %v1743, %v1742
      %v1756 = vpack.c.b16 %v1745, %v1744
      %v1757 = vpack.c.b16 %v1747, %v1746
      %v1758 = vpack.c.b16 %v1749, %v1748
      %v1759 = vpack.c.b16 %v1751, %v1750
      %v1760 = vunpack.c.l.b16 %v849
      %v1761 = vunpack.c.l.b16 %v859
      %v1762 = vunpack.c.l.b16 %v873
      %v1763 = vunpack.c.l.b16 %v883
      %v1764 = vunpack.c.l.b16 %v897
      %v1765 = vunpack.c.l.b16 %v907
      %v1766 = vunpack.c.l.b16 %v921
      %v1767 = vunpack.c.l.b16 %v931
      %v1768 = vunpack.c.l.b16 %v945
      %v1769 = vunpack.c.l.b16 %v955
      %v1770 = vunpack.c.l.b16 %v969
      %v1771 = vunpack.c.l.b16 %v979
      %v1772 = vunpack.c.l.b16 %v993
      %v1773 = vunpack.c.l.b16 %v1003
      %v1774 = vunpack.c.l.b16 %v1017
      %v1775 = vunpack.c.l.b16 %v1027
      %v1776 = vpack.c.b16 %v1761, %v1760
      %v1777 = vpack.c.b16 %v1763, %v1762
      %v1778 = vpack.c.b16 %v1765, %v1764
      %v1779 = vpack.c.b16 %v1767, %v1766
      %v1780 = vpack.c.b16 %v1769, %v1768
      %v1781 = vpack.c.b16 %v1771, %v1770
      %v1782 = vpack.c.b16 %v1773, %v1772
      %v1783 = vpack.c.b16 %v1775, %v1774
      %1784 = vrot.lane.b32.xlu0 %v1776, 4
      %v1785 = vpop.permute.xlu0 %1784
      %1786 = vrot.lane.b32.xlu0 %v1777, 4
      %v1787 = vpop.permute.xlu0 %1786
      %1788 = vrot.lane.b32.xlu0 %v1778, 4
      %v1789 = vpop.permute.xlu0 %1788
      %1790 = vrot.lane.b32.xlu0 %v1779, 4
      %v1791 = vpop.permute.xlu0 %1790
      %1792 = vrot.lane.b32.xlu0 %v1780, 4
      %v1793 = vpop.permute.xlu0 %1792
      %1794 = vrot.lane.b32.xlu0 %v1781, 4
      %v1795 = vpop.permute.xlu0 %1794
      %1796 = vrot.lane.b32.xlu0 %v1782, 4
      %v1797 = vpop.permute.xlu0 %1796
      %1798 = vrot.lane.b32.xlu0 %v1783, 4
      %v1799 = vpop.permute.xlu0 %1798
      %v1800 = vunpack.c.l.b16 %v1066
      %v1801 = vunpack.c.l.b16 %v1069
      %v1802 = vunpack.c.l.b16 %v1073
      %v1803 = vunpack.c.l.b16 %v1076
      %v1804 = vunpack.c.l.b16 %v1080
      %v1805 = vunpack.c.l.b16 %v1083
      %v1806 = vunpack.c.l.b16 %v1087
      %v1807 = vunpack.c.l.b16 %v1090
      %v1808 = vunpack.c.l.b16 %v1094
      %v1809 = vunpack.c.l.b16 %v1097
      %v1810 = vunpack.c.l.b16 %v1101
      %v1811 = vunpack.c.l.b16 %v1104
      %v1812 = vunpack.c.l.b16 %v1108
      %v1813 = vunpack.c.l.b16 %v1111
      %v1814 = vunpack.c.l.b16 %v1115
      %v1815 = vunpack.c.l.b16 %v1118
      %v1816 = vpack.c.b16 %v1801, %v1800
      %v1817 = vpack.c.b16 %v1803, %v1802
      %v1818 = vpack.c.b16 %v1805, %v1804
      %v1819 = vpack.c.b16 %v1807, %v1806
      %v1820 = vpack.c.b16 %v1809, %v1808
      %v1821 = vpack.c.b16 %v1811, %v1810
      %v1822 = vpack.c.b16 %v1813, %v1812
      %v1823 = vpack.c.b16 %v1815, %v1814
      %1824 = vrot.lane.b32.xlu0 %v1816, 8
      %v1825 = vpop.permute.xlu0 %1824
      %1826 = vrot.lane.b32.xlu0 %v1817, 8
      %v1827 = vpop.permute.xlu0 %1826
      %1828 = vrot.lane.b32.xlu0 %v1818, 8
      %v1829 = vpop.permute.xlu0 %1828
      %1830 = vrot.lane.b32.xlu0 %v1819, 8
      %v1831 = vpop.permute.xlu0 %1830
      %1832 = vrot.lane.b32.xlu0 %v1820, 8
      %v1833 = vpop.permute.xlu0 %1832
      %1834 = vrot.lane.b32.xlu0 %v1821, 8
      %v1835 = vpop.permute.xlu0 %1834
      %1836 = vrot.lane.b32.xlu0 %v1822, 8
      %v1837 = vpop.permute.xlu0 %1836
      %1838 = vrot.lane.b32.xlu0 %v1823, 8
      %v1839 = vpop.permute.xlu0 %1838
      %v1848 = vunpack.c.l.b16 %v1119
      %v1849 = vunpack.c.l.b16 %v1120
      %v1850 = vunpack.c.l.b16 %v1121
      %v1851 = vunpack.c.l.b16 %v1122
      %v1852 = vunpack.c.l.b16 %v1123
      %v1853 = vunpack.c.l.b16 %v1124
      %v1854 = vunpack.c.l.b16 %v1125
      %v1855 = vunpack.c.l.b16 %v1126
      %v1856 = vunpack.c.l.b16 %v1127
      %v1857 = vunpack.c.l.b16 %v1128
      %v1858 = vunpack.c.l.b16 %v1129
      %v1859 = vunpack.c.l.b16 %v1130
      %v1860 = vunpack.c.l.b16 %v1131
      %v1861 = vunpack.c.l.b16 %v1132
      %v1862 = vunpack.c.l.b16 %v1133
      %v1863 = vunpack.c.l.b16 %v1134
      %v1864 = vpack.c.b16 %v1849, %v1848
      %v1865 = vpack.c.b16 %v1851, %v1850
      %v1866 = vpack.c.b16 %v1853, %v1852
      %v1867 = vpack.c.b16 %v1855, %v1854
      %v1868 = vpack.c.b16 %v1857, %v1856
      %v1869 = vpack.c.b16 %v1859, %v1858
      %v1870 = vpack.c.b16 %v1861, %v1860
      %v1871 = vpack.c.b16 %v1863, %v1862
      %1872 = vrot.lane.b32.xlu0 %v1864, 12
      %v1873 = vpop.permute.xlu0 %1872
      %1874 = vrot.lane.b32.xlu0 %v1865, 12
      %v1875 = vpop.permute.xlu0 %1874
      %1876 = vrot.lane.b32.xlu0 %v1866, 12
      %v1877 = vpop.permute.xlu0 %1876
      %1878 = vrot.lane.b32.xlu0 %v1867, 12
      %v1879 = vpop.permute.xlu0 %1878
      %1880 = vrot.lane.b32.xlu0 %v1868, 12
      %v1881 = vpop.permute.xlu0 %1880
      %1882 = vrot.lane.b32.xlu0 %v1869, 12
      %v1883 = vpop.permute.xlu0 %1882
      %1884 = vrot.lane.b32.xlu0 %v1870, 12
      %v1885 = vpop.permute.xlu0 %1884
      %1886 = vrot.lane.b32.xlu0 %v1871, 12
      %v1887 = vpop.permute.xlu0 %1886
      %v1888 = vunpack.c.l.b16 %v1156
      %v1889 = vunpack.c.l.b16 %v1166
      %v1890 = vunpack.c.l.b16 %v1180
      %v1891 = vunpack.c.l.b16 %v1190
      %v1892 = vunpack.c.l.b16 %v1204
      %v1893 = vunpack.c.l.b16 %v1214
      %v1894 = vunpack.c.l.b16 %v1228
      %v1895 = vunpack.c.l.b16 %v1238
      %v1896 = vunpack.c.l.b16 %v1252
      %v1897 = vunpack.c.l.b16 %v1262
      %v1898 = vunpack.c.l.b16 %v1276
      %v1899 = vunpack.c.l.b16 %v1286
      %v1900 = vunpack.c.l.b16 %v1300
      %v1901 = vunpack.c.l.b16 %v1310
      %v1902 = vunpack.c.l.b16 %v1324
      %v1903 = vunpack.c.l.b16 %v1334
      %v1904 = vpack.c.b16 %v1889, %v1888
      %v1905 = vpack.c.b16 %v1891, %v1890
      %v1906 = vpack.c.b16 %v1893, %v1892
      %v1907 = vpack.c.b16 %v1895, %v1894
      %v1908 = vpack.c.b16 %v1897, %v1896
      %v1909 = vpack.c.b16 %v1899, %v1898
      %v1910 = vpack.c.b16 %v1901, %v1900
      %v1911 = vpack.c.b16 %v1903, %v1902
      %1912 = vrot.lane.b32.xlu0 %v1904, 16
      %v1913 = vpop.permute.xlu0 %1912
      %1914 = vrot.lane.b32.xlu0 %v1905, 16
      %v1915 = vpop.permute.xlu0 %1914
      %1916 = vrot.lane.b32.xlu0 %v1906, 16
      %v1917 = vpop.permute.xlu0 %1916
      %1918 = vrot.lane.b32.xlu0 %v1907, 16
      %v1919 = vpop.permute.xlu0 %1918
      %1920 = vrot.lane.b32.xlu0 %v1908, 16
      %v1921 = vpop.permute.xlu0 %1920
      %1922 = vrot.lane.b32.xlu0 %v1909, 16
      %v1923 = vpop.permute.xlu0 %1922
      %1924 = vrot.lane.b32.xlu0 %v1910, 16
      %v1925 = vpop.permute.xlu0 %1924
      %1926 = vrot.lane.b32.xlu0 %v1911, 16
      %v1927 = vpop.permute.xlu0 %1926
      %v1928 = vunpack.c.l.b16 %v1370
      %v1929 = vunpack.c.l.b16 %v1373
      %v1930 = vunpack.c.l.b16 %v1377
      %v1931 = vunpack.c.l.b16 %v1380
      %v1932 = vunpack.c.l.b16 %v1384
      %v1933 = vunpack.c.l.b16 %v1387
      %v1934 = vunpack.c.l.b16 %v1391
      %v1935 = vunpack.c.l.b16 %v1394
      %v1936 = vunpack.c.l.b16 %v1398
      %v1937 = vunpack.c.l.b16 %v1401
      %v1938 = vunpack.c.l.b16 %v1405
      %v1939 = vunpack.c.l.b16 %v1408
      %v1940 = vunpack.c.l.b16 %v1412
      %v1941 = vunpack.c.l.b16 %v1415
      %v1942 = vunpack.c.l.b16 %v1419
      %v1943 = vunpack.c.l.b16 %v1422
      %v1944 = vpack.c.b16 %v1929, %v1928
      %v1945 = vpack.c.b16 %v1931, %v1930
      %v1946 = vpack.c.b16 %v1933, %v1932
      %v1947 = vpack.c.b16 %v1935, %v1934
      %v1948 = vpack.c.b16 %v1937, %v1936
      %v1949 = vpack.c.b16 %v1939, %v1938
      %v1950 = vpack.c.b16 %v1941, %v1940
      %v1951 = vpack.c.b16 %v1943, %v1942
      %1952 = vrot.lane.b32.xlu0 %v1944, 20
      %v1953 = vpop.permute.xlu0 %1952
      %1954 = vrot.lane.b32.xlu0 %v1945, 20
      %v1955 = vpop.permute.xlu0 %1954
      %1956 = vrot.lane.b32.xlu0 %v1946, 20
      %v1957 = vpop.permute.xlu0 %1956
      %1958 = vrot.lane.b32.xlu0 %v1947, 20
      %v1959 = vpop.permute.xlu0 %1958
      %1960 = vrot.lane.b32.xlu0 %v1948, 20
      %v1961 = vpop.permute.xlu0 %1960
      %1962 = vrot.lane.b32.xlu0 %v1949, 20
      %v1963 = vpop.permute.xlu0 %1962
      %1964 = vrot.lane.b32.xlu0 %v1950, 20
      %v1965 = vpop.permute.xlu0 %1964
      %1966 = vrot.lane.b32.xlu0 %v1951, 20
      %v1967 = vpop.permute.xlu0 %1966
      %v1976 = vunpack.c.l.b16 %v1424
      %v1977 = vunpack.c.l.b16 %v1425
      %v1978 = vunpack.c.l.b16 %v1426
      %v1979 = vunpack.c.l.b16 %v1427
      %v1980 = vunpack.c.l.b16 %v1428
      %v1981 = vunpack.c.l.b16 %v1429
      %v1982 = vunpack.c.l.b16 %v1430
      %v1983 = vunpack.c.l.b16 %v1431
      %v1984 = vunpack.c.l.b16 %v1432
      %v1985 = vunpack.c.l.b16 %v1433
      %v1986 = vunpack.c.l.b16 %v1434
      %v1987 = vunpack.c.l.b16 %v1435
      %v1988 = vunpack.c.l.b16 %v1436
      %v1989 = vunpack.c.l.b16 %v1437
      %v1990 = vunpack.c.l.b16 %v1438
      %v1991 = vunpack.c.l.b16 %v1439
      %v1992 = vpack.c.b16 %v1977, %v1976
      %v1993 = vpack.c.b16 %v1979, %v1978
      %v1994 = vpack.c.b16 %v1981, %v1980
      %v1995 = vpack.c.b16 %v1983, %v1982
      %v1996 = vpack.c.b16 %v1985, %v1984
      %v1997 = vpack.c.b16 %v1987, %v1986
      %v1998 = vpack.c.b16 %v1989, %v1988
      %v1999 = vpack.c.b16 %v1991, %v1990
      %2000 = vrot.lane.b32.xlu0 %v1992, 24
      %v2001 = vpop.permute.xlu0 %2000
      %2002 = vrot.lane.b32.xlu0 %v1993, 24
      %v2003 = vpop.permute.xlu0 %2002
      %2004 = vrot.lane.b32.xlu0 %v1994, 24
      %v2005 = vpop.permute.xlu0 %2004
      %2006 = vrot.lane.b32.xlu0 %v1995, 24
      %v2007 = vpop.permute.xlu0 %2006
      %2008 = vrot.lane.b32.xlu0 %v1996, 24
      %v2009 = vpop.permute.xlu0 %2008
      %2010 = vrot.lane.b32.xlu0 %v1997, 24
      %v2011 = vpop.permute.xlu0 %2010
      %2012 = vrot.lane.b32.xlu0 %v1998, 24
      %v2013 = vpop.permute.xlu0 %2012
      %2014 = vrot.lane.b32.xlu0 %v1999, 24
      %v2015 = vpop.permute.xlu0 %2014
      %v2016 = vunpack.c.l.b16 %v1461
      %v2017 = vunpack.c.l.b16 %v1471
      %v2018 = vunpack.c.l.b16 %v1485
      %v2019 = vunpack.c.l.b16 %v1495
      %v2020 = vunpack.c.l.b16 %v1509
      %v2021 = vunpack.c.l.b16 %v1519
      %v2022 = vunpack.c.l.b16 %v1533
      %v2023 = vunpack.c.l.b16 %v1543
      %v2024 = vunpack.c.l.b16 %v1557
      %v2025 = vunpack.c.l.b16 %v1567
      %v2026 = vunpack.c.l.b16 %v1581
      %v2027 = vunpack.c.l.b16 %v1591
      %v2028 = vunpack.c.l.b16 %v1605
      %v2029 = vunpack.c.l.b16 %v1615
      %v2030 = vunpack.c.l.b16 %v1629
      %v2031 = vunpack.c.l.b16 %v1639
      %v2032 = vpack.c.b16 %v2017, %v2016
      %v2033 = vpack.c.b16 %v2019, %v2018
      %v2034 = vpack.c.b16 %v2021, %v2020
      %v2035 = vpack.c.b16 %v2023, %v2022
      %v2036 = vpack.c.b16 %v2025, %v2024
      %v2037 = vpack.c.b16 %v2027, %v2026
      %v2038 = vpack.c.b16 %v2029, %v2028
      %v2039 = vpack.c.b16 %v2031, %v2030
      %2040 = vrot.lane.b32.xlu0 %v2032, 28
      %v2041 = vpop.permute.xlu0 %2040
      %2042 = vrot.lane.b32.xlu0 %v2033, 28
      %v2043 = vpop.permute.xlu0 %2042
      %2044 = vrot.lane.b32.xlu0 %v2034, 28
      %v2045 = vpop.permute.xlu0 %2044
      %2046 = vrot.lane.b32.xlu0 %v2035, 28
      %v2047 = vpop.permute.xlu0 %2046
      %2048 = vrot.lane.b32.xlu0 %v2036, 28
      %v2049 = vpop.permute.xlu0 %2048
      %2050 = vrot.lane.b32.xlu0 %v2037, 28
      %v2051 = vpop.permute.xlu0 %2050
      %2052 = vrot.lane.b32.xlu0 %v2038, 28
      %v2053 = vpop.permute.xlu0 %2052
      %2054 = vrot.lane.b32.xlu0 %v2039, 28
      %v2055 = vpop.permute.xlu0 %2054
      %v2056 = vunpack.c.l.b16 %v1675
      %v2057 = vunpack.c.l.b16 %v1678
      %v2058 = vunpack.c.l.b16 %v1682
      %v2059 = vunpack.c.l.b16 %v1685
      %v2060 = vunpack.c.l.b16 %v1689
      %v2061 = vunpack.c.l.b16 %v1692
      %v2062 = vunpack.c.l.b16 %v1696
      %v2063 = vunpack.c.l.b16 %v1699
      %v2064 = vunpack.c.l.b16 %v1703
      %v2065 = vunpack.c.l.b16 %v1706
      %v2066 = vunpack.c.l.b16 %v1710
      %v2067 = vunpack.c.l.b16 %v1713
      %v2068 = vunpack.c.l.b16 %v1717
      %v2069 = vunpack.c.l.b16 %v1720
      %v2070 = vunpack.c.l.b16 %v1724
      %v2071 = vunpack.c.l.b16 %v1727
      %v2072 = vpack.c.b16 %v2057, %v2056
      %v2073 = vpack.c.b16 %v2059, %v2058
      %v2074 = vpack.c.b16 %v2061, %v2060
      %v2075 = vpack.c.b16 %v2063, %v2062
      %v2076 = vpack.c.b16 %v2065, %v2064
      %v2077 = vpack.c.b16 %v2067, %v2066
      %v2078 = vpack.c.b16 %v2069, %v2068
      %v2079 = vpack.c.b16 %v2071, %v2070
      %2080 = vrot.lane.b32.xlu0 %v2072, 32
      %v2081 = vpop.permute.xlu0 %2080
      %2082 = vrot.lane.b32.xlu0 %v2073, 32
      %v2083 = vpop.permute.xlu0 %2082
      %2084 = vrot.lane.b32.xlu0 %v2074, 32
      %v2085 = vpop.permute.xlu0 %2084
      %2086 = vrot.lane.b32.xlu0 %v2075, 32
      %v2087 = vpop.permute.xlu0 %2086
      %2088 = vrot.lane.b32.xlu0 %v2076, 32
      %v2089 = vpop.permute.xlu0 %2088
      %2090 = vrot.lane.b32.xlu0 %v2077, 32
      %v2091 = vpop.permute.xlu0 %2090
      %2092 = vrot.lane.b32.xlu0 %v2078, 32
      %v2093 = vpop.permute.xlu0 %2092
      %2094 = vrot.lane.b32.xlu0 %v2079, 32
      %v2095 = vpop.permute.xlu0 %2094
      %vm2096 = vcmask 31744
      %v2099 = vsel %vm2096, %v1752, %v1785
      %v2102 = vsel %vm2096, %v1753, %v1787
      %v2105 = vsel %vm2096, %v1754, %v1789
      %v2108 = vsel %vm2096, %v1755, %v1791
      %v2111 = vsel %vm2096, %v1756, %v1793
      %v2114 = vsel %vm2096, %v1757, %v1795
      %v2117 = vsel %vm2096, %v1758, %v1797
      %v2120 = vsel %vm2096, %v1759, %v1799
      %vm2121 = vcmask 64512
      %v2123 = vsel %vm2121, %v2099, %v1825
      %v2125 = vsel %vm2121, %v2102, %v1827
      %v2127 = vsel %vm2121, %v2105, %v1829
      %v2129 = vsel %vm2121, %v2108, %v1831
      %v2131 = vsel %vm2121, %v2111, %v1833
      %v2133 = vsel %vm2121, %v2114, %v1835
      %v2135 = vsel %vm2121, %v2117, %v1837
      %v2137 = vsel %vm2121, %v2120, %v1839
      %vm2138 = vcmask 97280
      %v2140 = vsel %vm2138, %v2123, %v1873
      %v2142 = vsel %vm2138, %v2125, %v1875
      %v2144 = vsel %vm2138, %v2127, %v1877
      %v2146 = vsel %vm2138, %v2129, %v1879
      %v2148 = vsel %vm2138, %v2131, %v1881
      %v2150 = vsel %vm2138, %v2133, %v1883
      %v2152 = vsel %vm2138, %v2135, %v1885
      %v2154 = vsel %vm2138, %v2137, %v1887
      %vm2155 = vcmask 130048
      %v2157 = vsel %vm2155, %v2140, %v1913
      %v2159 = vsel %vm2155, %v2142, %v1915
      %v2161 = vsel %vm2155, %v2144, %v1917
      %v2163 = vsel %vm2155, %v2146, %v1919
      %v2165 = vsel %vm2155, %v2148, %v1921
      %v2167 = vsel %vm2155, %v2150, %v1923
      %v2169 = vsel %vm2155, %v2152, %v1925
      %v2171 = vsel %vm2155, %v2154, %v1927
      %vm2172 = vcmask 162816
      %v2174 = vsel %vm2172, %v2157, %v1953
      %v2176 = vsel %vm2172, %v2159, %v1955
      %v2178 = vsel %vm2172, %v2161, %v1957
      %v2180 = vsel %vm2172, %v2163, %v1959
      %v2182 = vsel %vm2172, %v2165, %v1961
      %v2184 = vsel %vm2172, %v2167, %v1963
      %v2186 = vsel %vm2172, %v2169, %v1965
      %v2188 = vsel %vm2172, %v2171, %v1967
      %vm2189 = vcmask 195584
      %v2191 = vsel %vm2189, %v2174, %v2001
      %v2193 = vsel %vm2189, %v2176, %v2003
      %v2195 = vsel %vm2189, %v2178, %v2005
      %v2197 = vsel %vm2189, %v2180, %v2007
      %v2199 = vsel %vm2189, %v2182, %v2009
      %v2201 = vsel %vm2189, %v2184, %v2011
      %v2203 = vsel %vm2189, %v2186, %v2013
      %v2205 = vsel %vm2189, %v2188, %v2015
      %vm2206 = vcmask 228352
      %v2208 = vsel %vm2206, %v2191, %v2041
      %v2210 = vsel %vm2206, %v2193, %v2043
      %v2212 = vsel %vm2206, %v2195, %v2045
      %v2214 = vsel %vm2206, %v2197, %v2047
      %v2216 = vsel %vm2206, %v2199, %v2049
      %v2218 = vsel %vm2206, %v2201, %v2051
      %v2220 = vsel %vm2206, %v2203, %v2053
      %v2222 = vsel %vm2206, %v2205, %v2055
      %vm2223 = vcmask 261120
      %v2225 = vsel %vm2223, %v2208, %v2081
      %v2227 = vsel %vm2223, %v2210, %v2083
      %v2229 = vsel %vm2223, %v2212, %v2085
      %v2231 = vsel %vm2223, %v2214, %v2087
      %v2233 = vsel %vm2223, %v2216, %v2089
      %v2235 = vsel %vm2223, %v2218, %v2091
      %v2237 = vsel %vm2223, %v2220, %v2093
      %v2239 = vsel %vm2223, %v2222, %v2095
      %v2240 = vld [vmem:[%s3] sm:$0xf]
      %v2241 = vld [vmem:[%s3 + $0x4] sm:$0xf]
      %v2242 = vld [vmem:[%s3 + $0x8] sm:$0xf]
      %v2243 = vld [vmem:[%s3 + $0xc] sm:$0xf]
      %v2244 = vld [vmem:[%s3 + $0x10] sm:$0x3]
      %v2250 = vunpack.c.l.b16 %v2240
      %v2251 = vunpack.c.l.b16 %v2241
      %v2252 = vunpack.c.l.b16 %v2242
      %v2253 = vunpack.c.l.b16 %v2243
      %v2254 = vunpack.c.l.b16 %v2244
      %v2255 = vpack.c.b16 %v2251, %v2250
      %v2256 = vpack.c.b16 %v2253, %v2252
      %v2257 = vpack.c.b16 %v2254, %v2254
      %vm2260 = vcmask 293888
      %v2261 = vsel %vm2260, %v2225, 0
      %v2263 = vsel %vm2260, %v2227, 0
      %v2265 = vsel %vm2260, %v2229, 0
      %v2267 = vsel %vm2260, %v2231, 0
      %v2269 = vsel %vm2260, %v2233, 0
      %v2271 = vsel %vm2260, %v2235, 0
      %v2273 = vsel %vm2260, %v2237, 0
      %v2275 = vsel %vm2260, %v2239, 0
      %vm2277 = vcmask 1041408
      %v2279 = vsel %vm2277, %v2257, 0
      %2281 = vmatprep.subr.bf16.mxu0 0
      %2282 = vmatpush1.bf16.msra.mxu0 %v2255
      %2283 = vmatprep.subr.bf16.mxu0 0
      %2284 = vmatpush1.bf16.msra.mxu0 %v2256
      %2285 = vmatprep.subr.bf16.mxu0 0
      %2286 = vmatpush1.bf16.msra.mxu0 %v2279
      %2287 = vmatprep.subr.bf16.mxu0 0
      %2288 = vmatpush1.bf16.msra.mxu0 0
      %2289 = vmatprep.subr.bf16.mxu0 0
      %2290 = vmatpush1.bf16.msra.mxu0 0
      %2291 = vmatprep.subr.bf16.mxu0 0
      %2292 = vmatpush1.bf16.msra.mxu0 0
      %2293 = vmatprep.subr.bf16.mxu0 0
      %2294 = vmatpush1.bf16.msra.mxu0 0
      %2295 = vmatprep.subr.bf16.mxu0 0
      %2296 = vmatpush1.bf16.msra.mxu0 0
      %2297 = vmatprep.subr.bf16.mxu0 0
      %2298 = vmatpush1.bf16.msra.mxu0 0
      %2299 = vmatprep.subr.bf16.mxu0 0
      %2300 = vmatpush1.bf16.msra.mxu0 0
      %2301 = vmatprep.subr.bf16.mxu0 0
      %2302 = vmatpush1.bf16.msra.mxu0 0
      %2303 = vmatprep.subr.bf16.mxu0 0
      %2304 = vmatpush1.bf16.msra.mxu0 0
      %2305 = vmatprep.subr.bf16.mxu0 0
      %2306 = vmatpush1.bf16.msra.mxu0 0
      %2307 = vmatprep.subr.bf16.mxu0 0
      %2308 = vmatpush1.bf16.msra.mxu0 0
      %2309 = vmatprep.subr.bf16.mxu0 0
      %2310 = vmatpush1.bf16.msra.mxu0 0
      %2311 = vmatprep.subr.bf16.mxu0 0
      %2312 = vmatpush1.bf16.msra.mxu0 0
      %2313 = vmatprep.mubr.bf16.mxu0 0
      %2314 = vmatmul.mubr.bf16.gmra.mrb[0].mxu0 %v2261
      %v2315 = vpop.f32.mrb[0].mxu0
      %v2316 = vadd.f32 0.0, %v2315
      %v2317 = vpop.f32.mrb[0].mxu0
      %v2318 = vpop.f32.mrb[0].mxu0
      %v2319 = vadd.f32 0.0, %v2318
      %v2320 = vpop.f32.mrb[0].mxu0
      %2321 = vmatprep.mubr.bf16.mxu0 0
      %2322 = vmatmul.mubr.bf16.gmra.mrb[0].mxu0 %v2263
      %v2323 = vpop.f32.mrb[0].mxu0
      %v2324 = vadd.f32 0.0, %v2323
      %v2325 = vpop.f32.mrb[0].mxu0
      %v2326 = vpop.f32.mrb[0].mxu0
      %v2327 = vadd.f32 0.0, %v2326
      %v2328 = vpop.f32.mrb[0].mxu0
      %2329 = vmatprep.mubr.bf16.mxu0 0
      %2330 = vmatmul.mubr.bf16.gmra.mrb[0].mxu0 %v2265
      %v2331 = vpop.f32.mrb[0].mxu0
      %v2332 = vadd.f32 0.0, %v2331
      %v2333 = vpop.f32.mrb[0].mxu0
      %v2334 = vpop.f32.mrb[0].mxu0
      %v2335 = vadd.f32 0.0, %v2334
      %v2336 = vpop.f32.mrb[0].mxu0
      %2337 = vmatprep.mubr.bf16.mxu0 0
      %2338 = vmatmul.mubr.bf16.gmra.mrb[0].mxu0 %v2267
      %v2339 = vpop.f32.mrb[0].mxu0
      %v2340 = vadd.f32 0.0, %v2339
      %v2341 = vpop.f32.mrb[0].mxu0
      %v2342 = vpop.f32.mrb[0].mxu0
      %v2343 = vadd.f32 0.0, %v2342
      %v2344 = vpop.f32.mrb[0].mxu0
      %2345 = vmatprep.mubr.bf16.mxu0 0
      %2346 = vmatmul.mubr.bf16.gmra.mrb[0].mxu0 %v2269
      %v2347 = vpop.f32.mrb[0].mxu0
      %v2348 = vadd.f32 0.0, %v2347
      %v2349 = vpop.f32.mrb[0].mxu0
      %v2350 = vpop.f32.mrb[0].mxu0
      %v2351 = vadd.f32 0.0, %v2350
      %v2352 = vpop.f32.mrb[0].mxu0
      %2353 = vmatprep.mubr.bf16.mxu0 0
      %2354 = vmatmul.mubr.bf16.gmra.mrb[0].mxu0 %v2271
      %v2355 = vpop.f32.mrb[0].mxu0
      %v2356 = vadd.f32 0.0, %v2355
      %v2357 = vpop.f32.mrb[0].mxu0
      %v2358 = vpop.f32.mrb[0].mxu0
      %v2359 = vadd.f32 0.0, %v2358
      %v2360 = vpop.f32.mrb[0].mxu0
      %2361 = vmatprep.mubr.bf16.mxu0 0
      %2362 = vmatmul.mubr.bf16.gmra.mrb[0].mxu0 %v2273
      %v2363 = vpop.f32.mrb[0].mxu0
      %v2364 = vadd.f32 0.0, %v2363
      %v2365 = vpop.f32.mrb[0].mxu0
      %v2366 = vpop.f32.mrb[0].mxu0
      %v2367 = vadd.f32 0.0, %v2366
      %v2368 = vpop.f32.mrb[0].mxu0
      %2369 = vmatprep.mubr.bf16.mxu0 0
      %2370 = vmatmul.mubr.bf16.gmra.mrb[0].mxu0 %v2275
      %v2371 = vpop.f32.mrb[0].mxu0
      %v2372 = vadd.f32 0.0, %v2371
      %v2373 = vpop.f32.mrb[0].mxu0
      %v2374 = vpop.f32.mrb[0].mxu0
      %v2375 = vadd.f32 0.0, %v2374
      %v2376 = vpop.f32.mrb[0].mxu0
      %2377 = vdwg.mxu0
      %2378 = vst.msk [vmem:[%s458] sm:$0xff] %vm2121, %v2316
      %2379 = vst.msk [vmem:[%s458 + $0x8] sm:$0xff] %vm2121, %v2319
      %2380 = vst.msk [vmem:[%s458 + $0x10] sm:$0xff] %vm2121, %v2324
      %2381 = vst.msk [vmem:[%s458 + $0x18] sm:$0xff] %vm2121, %v2327
      %2382 = vst.msk [vmem:[%s458 + $0x20] sm:$0xff] %vm2121, %v2332
      %2383 = vst.msk [vmem:[%s458 + $0x28] sm:$0xff] %vm2121, %v2335
      %2384 = vst.msk [vmem:[%s458 + $0x30] sm:$0xff] %vm2121, %v2340
      %2385 = vst.msk [vmem:[%s458 + $0x38] sm:$0xff] %vm2121, %v2343
      %2386 = vst.msk [vmem:[%s458 + $0x40] sm:$0xff] %vm2121, %v2348
      %2387 = vst.msk [vmem:[%s458 + $0x48] sm:$0xff] %vm2121, %v2351
      %2388 = vst.msk [vmem:[%s458 + $0x50] sm:$0xff] %vm2121, %v2356
      %2389 = vst.msk [vmem:[%s458 + $0x58] sm:$0xff] %vm2121, %v2359
      %2390 = vst.msk [vmem:[%s458 + $0x60] sm:$0xff] %vm2121, %v2364
      %2391 = vst.msk [vmem:[%s458 + $0x68] sm:$0xff] %vm2121, %v2367
      %2392 = vst.msk [vmem:[%s458 + $0x70] sm:$0xff] %vm2121, %v2372
      %2393 = vst.msk [vmem:[%s458 + $0x78] sm:$0xff] %vm2121, %v2375
      %v2394 = vsel %vm2121, %v2316, 0.0
      %v2395 = vsel %vm2121, %v2319, 0.0
      %v2396 = vadd.f32 %v2394, %v2395
      %v2397 = vsel %vm2121, %v2324, 0.0
      %v2398 = vadd.f32 %v2396, %v2397
      %v2399 = vsel %vm2121, %v2327, 0.0
      %v2400 = vadd.f32 %v2398, %v2399
      %v2401 = vsel %vm2121, %v2332, 0.0
      %v2402 = vadd.f32 %v2400, %v2401
      %v2403 = vsel %vm2121, %v2335, 0.0
      %v2404 = vadd.f32 %v2402, %v2403
      %v2405 = vsel %vm2121, %v2340, 0.0
      %v2406 = vadd.f32 %v2404, %v2405
      %v2407 = vsel %vm2121, %v2343, 0.0
      %v2408 = vadd.f32 %v2406, %v2407
      %v2409 = vsel %vm2121, %v2348, 0.0
      %v2410 = vadd.f32 %v2408, %v2409
      %v2411 = vsel %vm2121, %v2351, 0.0
      %v2412 = vadd.f32 %v2410, %v2411
      %v2413 = vsel %vm2121, %v2356, 0.0
      %v2414 = vadd.f32 %v2412, %v2413
      %v2415 = vsel %vm2121, %v2359, 0.0
      %v2416 = vadd.f32 %v2414, %v2415
      %v2417 = vsel %vm2121, %v2364, 0.0
      %v2418 = vadd.f32 %v2416, %v2417
      %v2419 = vsel %vm2121, %v2367, 0.0
      %v2420 = vadd.f32 %v2418, %v2419
      %v2421 = vsel %vm2121, %v2372, 0.0
      %v2422 = vadd.f32 %v2420, %v2421
      %v2423 = vsel %vm2121, %v2375, 0.0
      %v2424 = vadd.f32 %v2422, %v2423
      %v2425 = vrot.slane %v2424, 4
      %v2426 = vadd.f32 %v2424, %v2425
      %v2427 = vrot.slane %v2426, 2
      %v2428 = vadd.f32 %v2426, %v2427
      %v2429 = vrot.slane %v2428, 1
      %v2430 = vadd.f32 %v2428, %v2429
      %vm2431 = vcmask 57344
      %2432 = vst.msk [vmem:[%s467] sm:$0x1] %vm2431, %v2430
      %v2433 = vmul.f32 %v2316, %v2316
      %v2434 = vmul.f32 %v2319, %v2319
      %v2435 = vmul.f32 %v2324, %v2324
      %v2436 = vmul.f32 %v2327, %v2327
      %v2437 = vmul.f32 %v2332, %v2332
      %v2438 = vmul.f32 %v2335, %v2335
      %v2439 = vmul.f32 %v2340, %v2340
      %v2440 = vmul.f32 %v2343, %v2343
      %v2441 = vmul.f32 %v2348, %v2348
      %v2442 = vmul.f32 %v2351, %v2351
      %v2443 = vmul.f32 %v2356, %v2356
      %v2444 = vmul.f32 %v2359, %v2359
      %v2445 = vmul.f32 %v2364, %v2364
      %v2446 = vmul.f32 %v2367, %v2367
      %v2447 = vmul.f32 %v2372, %v2372
      %v2448 = vmul.f32 %v2375, %v2375
      %v2449 = vsel %vm2121, %v2433, 0.0
      %v2450 = vsel %vm2121, %v2434, 0.0
      %v2451 = vadd.f32 %v2449, %v2450
      %v2452 = vsel %vm2121, %v2435, 0.0
      %v2453 = vadd.f32 %v2451, %v2452
      %v2454 = vsel %vm2121, %v2436, 0.0
      %v2455 = vadd.f32 %v2453, %v2454
      %v2456 = vsel %vm2121, %v2437, 0.0
      %v2457 = vadd.f32 %v2455, %v2456
      %v2458 = vsel %vm2121, %v2438, 0.0
      %v2459 = vadd.f32 %v2457, %v2458
      %v2460 = vsel %vm2121, %v2439, 0.0
      %v2461 = vadd.f32 %v2459, %v2460
      %v2462 = vsel %vm2121, %v2440, 0.0
      %v2463 = vadd.f32 %v2461, %v2462
      %v2464 = vsel %vm2121, %v2441, 0.0
      %v2465 = vadd.f32 %v2463, %v2464
      %v2466 = vsel %vm2121, %v2442, 0.0
      %v2467 = vadd.f32 %v2465, %v2466
      %v2468 = vsel %vm2121, %v2443, 0.0
      %v2469 = vadd.f32 %v2467, %v2468
      %v2470 = vsel %vm2121, %v2444, 0.0
      %v2471 = vadd.f32 %v2469, %v2470
      %v2472 = vsel %vm2121, %v2445, 0.0
      %v2473 = vadd.f32 %v2471, %v2472
      %v2474 = vsel %vm2121, %v2446, 0.0
      %v2475 = vadd.f32 %v2473, %v2474
      %v2476 = vsel %vm2121, %v2447, 0.0
      %v2477 = vadd.f32 %v2475, %v2476
      %v2478 = vsel %vm2121, %v2448, 0.0
      %v2479 = vadd.f32 %v2477, %v2478
      %v2480 = vrot.slane %v2479, 4
      %v2481 = vadd.f32 %v2479, %v2480
      %v2482 = vrot.slane %v2481, 2
      %v2483 = vadd.f32 %v2481, %v2482
      %v2484 = vrot.slane %v2483, 1
      %v2485 = vadd.f32 %v2483, %v2484
      %2486 = vst.msk [vmem:[%s467 + $0x1] sm:$0x1] %vm2431, %v2485
      %s2487 = smul.u32 8, %s24
      %p2488 = scmp.lt.s32.totalorder %s23, 1
      %s2489 = scalar_select %p2488, %s23, 1
      %p2490 = scmp.lt.s32.totalorder %s2487, 15
      %s2491 = scalar_select %p2490, %s2487, 15
      %s2492 = smul.addr %s2491, 2
      %s2493 = smul.addr %s2489, 32
      %s2494 = sadd.s32 %s2492, %s2493
      %s2495 = smul.addr %s2494, 8
      %s2496 = scalar_lea.vmem %s6, %s2495
      %p2497 = scmp.lt.s32.totalorder %s23, 1
      %s2498 = scalar_select %p2497, %s23, 1
      %p2499 = scmp.lt.s32.totalorder %s24, 1
      %s2500 = scalar_select %p2499, %s24, 1
      %s2501 = smul.addr %s2498, 2
      %s2502 = sadd.s32 %s2500, %s2501
      %s2503 = smul.addr %s2502, 2
      %s2504 = scalar_lea.vmem %s7, %s2503
      // Predicated region
      $region53: #{conv_block_forward.3} parent=43 // pred_check
        %p2505 = pneg %p214
      $region54: #{conv_block_forward.3} parent=43 // pred_check_branch
        %2507 = sbr.rel (%p2505) target = $region56
      $region55: #{conv_block_forward.3} parent=43 // pred_region
        %s2508 = smul.u32 8, %s24
      $region56: #{conv_block_forward.3} parent=43 // pred_fallthru
        _
      // Predicated region
      $region57: #{conv_block_forward.3} parent=43 // pred_check
        %p2509 = pneg %p242
      $region58: #{conv_block_forward.3} parent=43 // pred_check_branch
        %2511 = sbr.rel (%p2509) target = $region60
      $region59: #{conv_block_forward.3} parent=43 // pred_region
        _
      $region60: #{conv_block_forward.3} parent=43 // pred_fallthru
        _
    $region44: #{conv_block_forward.3} parent=5 // pred_fallthru
      _
    %p2512 = scmp.le.s32.totalorder 2, %s14
    // Predicated region
    $region61: #{conv_block_forward.3} parent=5 // pred_check
      %p2513 = pneg %p2512
    $region62: #{conv_block_forward.3} parent=5 // pred_check_branch
      %2515 = sbr.rel (%p2513) target = $region64
    $region63: #{conv_block_forward.3} parent=5 // pred_region
      %s2516 = ssub.s32 %s14, 2
      // Predicated region
      $region65: #{conv_block_forward.3} parent=63 // pred_check
        %p2517 = pneg %p220
      $region66: #{conv_block_forward.3} parent=63 // pred_check_branch
        %2519 = sbr.rel (%p2517) target = $region68
      $region67: #{conv_block_forward.3} parent=63 // pred_region
        %s2520 = smul.u32 8, %s26
        %p2521 = scmp.lt.s32.totalorder %s25, 1
        %s2522 = scalar_select %p2521, %s25, 1
        %p2523 = scmp.lt.s32.totalorder %s2520, 15
        %s2524 = scalar_select %p2523, %s2520, 15
        %s2525 = smul.addr %s2524, 2
        %s2526 = smul.addr %s2522, 32
        %s2527 = sadd.s32 %s2525, %s2526
        %s2528 = smul.addr %s2527, 8
        %s2529 = scalar_lea.vmem %s6, %s2528
      $region68: #{conv_block_forward.3} parent=63 // pred_fallthru
        _
      // Predicated region
      $region69: #{conv_block_forward.3} parent=63 // pred_check
        %p2530 = pneg %p248
      $region70: #{conv_block_forward.3} parent=63 // pred_check_branch
        %2532 = sbr.rel (%p2530) target = $region72
      $region71: #{conv_block_forward.3} parent=63 // pred_region
        %p2533 = scmp.lt.s32.totalorder %s25, 1
        %s2534 = scalar_select %p2533, %s25, 1
        %p2535 = scmp.lt.s32.totalorder %s26, 1
        %s2536 = scalar_select %p2535, %s26, 1
        %s2537 = smul.addr %s2534, 2
        %s2538 = sadd.s32 %s2536, %s2537
        %s2539 = smul.addr %s2538, 2
        %s2540 = scalar_lea.vmem %s7, %s2539
      $region72: #{conv_block_forward.3} parent=63 // pred_fallthru
        _
    $region64: #{conv_block_forward.3} parent=5 // pred_fallthru
      _
  $region6: #{conv_block_forward.3} parent=0 // loop_footer
    %s18 = sadd.s32 1, %s14
  $region7: #{conv_block_forward.3} parent=0 // loop_footer_branch
    %13 = sbr.rel target = $region3
  $region8: #{conv_block_forward.3} parent=0 // loop_exit
    _

// kernel: conv_block_forward.4
$region0: #{conv_block_forward.4}
  #allocation0 [shape = 'u32[]', space=smem, size = 0x4, offset = 0x4, fixed_abs, tag = 'smem constant byte address 0x4 - core index']
  #allocation1 [shape = 'u32[144,128]{1,0:T(1,128)}', space=vmem, size = 0x12000, scoped, tag = 'internal scratch']
  #allocation2 [shape = 'bf16[10,18,8]{2,1,0:T(8,128)(2,1)}', space=vmem, size = 0xf000, scoped, tag = 'scratch operand']
  %s0 = inlined_call_operand.vmem [shape: f32[2,16,16,8], index: 0, kind: input, shape index: {}, may-alias: {0,1,2}]
  %s1 = inlined_call_operand.vmem [shape: f32[2,16,16,8], index: 1, kind: input, shape index: {}, may-alias: {0,1,2}]
  %s2 = inlined_call_operand.vmem [shape: f32[2,16,16,8], index: 2, kind: input, shape index: {}, may-alias: {0,1,2}]
  %s3 = inlined_call_operand.vmem [shape: bf16[72,8], index: 3, kind: input, shape index: {}]
  %s4 = inlined_call_operand.vmem [shape: f32[1,8], index: 4, kind: input, shape index: {}]
  %s5 = inlined_call_operand.vmem [shape: f32[1,8], index: 5, kind: input, shape index: {}]
  %s6 = inlined_call_operand.vmem [shape: f32[2,16,16,8], index: 6, kind: output, shape index: {0}]
  %s7 = inlined_call_operand.vmem [shape: f32[2,2,2,8], index: 7, kind: output, shape index: {1}]
  %8 = xla_tuple %s6, %s7
  %s9 = sld [smem:[#allocation0]]
  $region73: #{conv_block_forward.4} parent=0
    _
  %s11 = ssub.s32 1, %s9
  %s12 = scalar_select 0, %s11, %s9
  loop: start=0, step=1, limit=6
  $region2: #{conv_block_forward.4} parent=0 // loop_pre_header
    _
  $region3: #{conv_block_forward.4} parent=0 // loop_header
    %s14 = sphi 0, %s18
    %p15 = scmp.ge.s32.totalorder %s14, 6
    %s21 = sphi 0, %s33
    %s22 = sphi 0, %s29
    %s23 = sphi 0, %s21
    %s24 = sphi 0, %s22
    %s25 = sphi 0, %s23
    %s26 = sphi 0, %s24
    %s38 = sphi 0, %s40
    %s41 = sphi 0, %s38
    %s42 = sphi 0, %s41
    %s58 = sphi 0, %s42
    %s74 = sphi 0, %s76
    %s77 = sphi 0, %s74
    %s78 = sphi 0, %s77
    %s94 = sphi 0, %s78
    %s110 = sphi 0, %s112
    %s113 = sphi 0, %s110
    %s114 = sphi 0, %s113
    %s130 = sphi 0, %s114
    %s134 = sphi 0, %s134
    %s136 = sphi 0, %s134
    %s137 = sphi 0, %s136
    %s151 = sphi 0, %s137
    %s155 = sphi 0, %s155
    %s157 = sphi 0, %s155
    %s158 = sphi 0, %s157
    %s172 = sphi 0, %s158
    %s176 = sphi 0, %s176
    %s178 = sphi 0, %s176
    %s179 = sphi 0, %s178
    %s193 = sphi 0, %s179
    %s201 = sphi 0, %s203
    %s204 = sphi 0, %s201
    %s205 = sphi 0, %s204
    %s221 = sphi 0, %s205
    %s229 = sphi 0, %s231
    %s232 = sphi 0, %s229
    %s233 = sphi 0, %s232
    %s249 = sphi 0, %s233
  $region4: #{conv_block_forward.4} parent=0 // loop_header_branch
    %17 = sbr.rel (%p15) target = $region8
  $region5: #{conv_block_forward.4} parent=0 // loop_body
    %s19 = ssub.s32 %s14, 1
    %s20 = ssub.s32 %s14, 2
    %s27 = sadd.s32 1, %s22
    %p28 = scmp.ge.s32.totalorder %s27, 2
    %s29 = scalar_select %p28, 0, %s27
    %s30 = sadd.s32 1, %s21
    %s31 = scalar_select %p28, %s30, %s21
    %p32 = scmp.ge.s32.totalorder %s31, 2
    %s33 = scalar_select %p32, 0, %s31
    %s34 = ssub.s32 %s21, %s33
    %s35 = ssub.s32 %s22, %s29
    %s36 = sor.u32 %s34, %s35
    %p37 = scmp.eq.s32.totalorder %s36, 0
    %s39 = sadd.s32 %s38, 1
    %s40 = scalar_select %p37, %s38, %s39
    %p43 = pneg %p37
    %p44 = scmp.eq.s32.totalorder %s14, 3
    %p45 = por %p43, %p44
    %p46 = scmp.ne.s32.totalorder %s38, %s41
    %p47 = scmp.eq.s32.totalorder %s14, 0
    %p48 = por %p46, %p47
    %p49 = scmp.ne.s32.totalorder %s38, %s41
    %p50 = scmp.eq.s32.totalorder %s19, 3
    %p51 = por %p49, %p50
    %p52 = scmp.ne.s32.totalorder %s41, %s42
    %p53 = scmp.eq.s32.totalorder %s19, 0
    %p54 = por %p52, %p53
    %p55 = scmp.ne.s32.totalorder %s41, %s42
    %p56 = scmp.eq.s32.totalorder %s20, 3
    %p57 = por %p55, %p56
    %p59 = scmp.ne.s32.totalorder %s42, %s58
    %p60 = scmp.eq.s32.totalorder %s20, 0
    %p61 = por %p59, %p60
    %s62 = smul.u32 %s22, 8
    %s63 = ssub.s32 %s62, 1
    %p64 = scmp.gt.s32.totalorder %s63, 0
    %s65 = scalar_select %p64, %s63, 0
    %s66 = smul.u32 %s29, 8
    %s67 = ssub.s32 %s66, 1
    %p68 = scmp.gt.s32.totalorder %s67, 0
    %s69 = scalar_select %p68, %s67, 0
    %s70 = ssub.s32 %s21, %s33
    %s71 = ssub.s32 %s65, %s69
    %s72 = sor.u32 %s70, %s71
    %p73 = scmp.eq.s32.totalorder %s72, 0
    %s75 = sadd.s32 %s74, 1
    %s76 = scalar_select %p73, %s74, %s75
    %p79 = pneg %p73
    %p80 = scmp.eq.s32.totalorder %s14, 3
    %p81 = por %p79, %p80
    %p82 = scmp.ne.s32.totalorder %s74, %s77
    %p83 = scmp.eq.s32.totalorder %s14, 0
    %p84 = por %p82, %p83
    %p85 = scmp.ne.s32.totalorder %s74, %s77
    %p86 = scmp.eq.s32.totalorder %s19, 3
    %p87 = por %p85, %p86
    %p88 = scmp.ne.s32.totalorder %s77, %s78
    %p89 = scmp.eq.s32.totalorder %s19, 0
    %p90 = por %p88, %p89
    %p91 = scmp.ne.s32.totalorder %s77, %s78
    %p92 = scmp.eq.s32.totalorder %s20, 3
    %p93 = por %p91, %p92
    %p95 = scmp.ne.s32.totalorder %s78, %s94
    %p96 = scmp.eq.s32.totalorder %s20, 0
    %p97 = por %p95, %p96
    %s98 = sadd.s32 %s22, 1
    %s99 = smul.u32 %s98, 8
    %p100 = scmp.lt.s32.totalorder %s99, 15
    %s101 = scalar_select %p100, %s99, 15
    %s102 = sadd.s32 %s29, 1
    %s103 = smul.u32 %s102, 8
    %p104 = scmp.lt.s32.totalorder %s103, 15
    %s105 = scalar_select %p104, %s103, 15
    %s106 = ssub.s32 %s21, %s33
    %s107 = ssub.s32 %s101, %s105
    %s108 = sor.u32 %s106, %s107
    %p109 = scmp.eq.s32.totalorder %s108, 0
    %s111 = sadd.s32 %s110, 1
    %s112 = scalar_select %p109, %s110, %s111
    %p115 = pneg %p109
    %p116 = scmp.eq.s32.totalorder %s14, 3
    %p117 = por %p115, %p116
    %p118 = scmp.ne.s32.totalorder %s110, %s113
    %p119 = scmp.eq.s32.totalorder %s14, 0
    %p120 = por %p118, %p119
    %p121 = scmp.ne.s32.totalorder %s110, %s113
    %p122 = scmp.eq.s32.totalorder %s19, 3
    %p123 = por %p121, %p122
    %p124 = scmp.ne.s32.totalorder %s113, %s114
    %p125 = scmp.eq.s32.totalorder %s19, 0
    %p126 = por %p124, %p125
    %p127 = scmp.ne.s32.totalorder %s113, %s114
    %p128 = scmp.eq.s32.totalorder %s20, 3
    %p129 = por %p127, %p128
    %p131 = scmp.ne.s32.totalorder %s114, %s130
    %p132 = scmp.eq.s32.totalorder %s20, 0
    %p133 = por %p131, %p132
    %s135 = sadd.s32 %s134, 1
    %p138 = scmp.eq.s32.totalorder %s14, 3
    %p139 = scmp.ne.s32.totalorder %s134, %s136
    %p140 = scmp.eq.s32.totalorder %s14, 0
    %p141 = por %p139, %p140
    %p142 = scmp.ne.s32.totalorder %s134, %s136
    %p143 = scmp.eq.s32.totalorder %s19, 3
    %p144 = por %p142, %p143
    %p145 = scmp.ne.s32.totalorder %s136, %s137
    %p146 = scmp.eq.s32.totalorder %s19, 0
    %p147 = por %p145, %p146
    %p148 = scmp.ne.s32.totalorder %s136, %s137
    %p149 = scmp.eq.s32.totalorder %s20, 3
    %p150 = por %p148, %p149
    %p152 = scmp.ne.s32.totalorder %s137, %s151
    %p153 = scmp.eq.s32.totalorder %s20, 0
    %p154 = por %p152, %p153
    %s156 = sadd.s32 %s155, 1
    %p159 = scmp.eq.s32.totalorder %s14, 3
    %p160 = scmp.ne.s32.totalorder %s155, %s157
    %p161 = scmp.eq.s32.totalorder %s14, 0
    %p162 = por %p160, %p161
    %p163 = scmp.ne.s32.totalorder %s155, %s157
    %p164 = scmp.eq.s32.totalorder %s19, 3
    %p165 = por %p163, %p164
    %p166 = scmp.ne.s32.totalorder %s157, %s158
    %p167 = scmp.eq.s32.totalorder %s19, 0
    %p168 = por %p166, %p167
    %p169 = scmp.ne.s32.totalorder %s157, %s158
    %p170 = scmp.eq.s32.totalorder %s20, 3
    %p171 = por %p169, %p170
    %p173 = scmp.ne.s32.totalorder %s158, %s172
    %p174 = scmp.eq.s32.totalorder %s20, 0
    %p175 = por %p173, %p174
    %s177 = sadd.s32 %s176, 1
    %p180 = scmp.eq.s32.totalorder %s14, 3
    %p181 = scmp.ne.s32.totalorder %s176, %s178
    %p182 = scmp.eq.s32.totalorder %s14, 0
    %p183 = por %p181, %p182
    %p184 = scmp.ne.s32.totalorder %s176, %s178
    %p185 = scmp.eq.s32.totalorder %s19, 3
    %p186 = por %p184, %p185
    %p187 = scmp.ne.s32.totalorder %s178, %s179
    %p188 = scmp.eq.s32.totalorder %s19, 0
    %p189 = por %p187, %p188
    %p190 = scmp.ne.s32.totalorder %s178, %s179
    %p191 = scmp.eq.s32.totalorder %s20, 3
    %p192 = por %p190, %p191
    %p194 = scmp.ne.s32.totalorder %s179, %s193
    %p195 = scmp.eq.s32.totalorder %s20, 0
    %p196 = por %p194, %p195
    %s197 = ssub.s32 %s21, %s33
    %s198 = ssub.s32 %s22, %s29
    %s199 = sor.u32 %s197, %s198
    %p200 = scmp.eq.s32.totalorder %s199, 0
    %s202 = sadd.s32 %s201, 1
    %s203 = scalar_select %p200, %s201, %s202
    %p206 = pneg %p200
    %p207 = scmp.eq.s32.totalorder %s14, 3
    %p208 = por %p206, %p207
    %p209 = scmp.ne.s32.totalorder %s201, %s204
    %p210 = scmp.eq.s32.totalorder %s14, 0
    %p211 = por %p209, %p210
    %p212 = scmp.ne.s32.totalorder %s201, %s204
    %p213 = scmp.eq.s32.totalorder %s19, 3
    %p214 = por %p212, %p213
    %p215 = scmp.ne.s32.totalorder %s204, %s205
    %p216 = scmp.eq.s32.totalorder %s19, 0
    %p217 = por %p215, %p216
    %p218 = scmp.ne.s32.totalorder %s204, %s205
    %p219 = scmp.eq.s32.totalorder %s20, 3
    %p220 = por %p218, %p219
    %p222 = scmp.ne.s32.totalorder %s205, %s221
    %p223 = scmp.eq.s32.totalorder %s20, 0
    %p224 = por %p222, %p223
    %s225 = ssub.s32 %s21, %s33
    %s226 = ssub.s32 %s22, %s29
    %s227 = sor.u32 %s225, %s226
    %p228 = scmp.eq.s32.totalorder %s227, 0
    %s230 = sadd.s32 %s229, 1
    %s231 = scalar_select %p228, %s229, %s230
    %p234 = pneg %p228
    %p235 = scmp.eq.s32.totalorder %s14, 3
    %p236 = por %p234, %p235
    %p237 = scmp.ne.s32.totalorder %s229, %s232
    %p238 = scmp.eq.s32.totalorder %s14, 0
    %p239 = por %p237, %p238
    %p240 = scmp.ne.s32.totalorder %s229, %s232
    %p241 = scmp.eq.s32.totalorder %s19, 3
    %p242 = por %p240, %p241
    %p243 = scmp.ne.s32.totalorder %s232, %s233
    %p244 = scmp.eq.s32.totalorder %s19, 0
    %p245 = por %p243, %p244
    %p246 = scmp.ne.s32.totalorder %s232, %s233
    %p247 = scmp.eq.s32.totalorder %s20, 3
    %p248 = por %p246, %p247
    %p250 = scmp.ne.s32.totalorder %s233, %s249
    %p251 = scmp.eq.s32.totalorder %s20, 0
    %p252 = por %p250, %p251
    %p253 = scmp.le.s32.totalorder 1, %s14
    %p254 = scmp.lt.s32.totalorder %s14, 5
    %p255 = pnand %p253, %p254
    %p256 = pneg %p255
    // Predicated region
    $region9: #{conv_block_forward.4} parent=5 // pred_check
      _
    $region10: #{conv_block_forward.4} parent=5 // pred_check_branch
      %258 = sbr.rel (%p255) target = $region12
    $region11: #{conv_block_forward.4} parent=5 // pred_region
      %s259 = ssub.s32 %s14, 1
      // Predicated region
      $region13: #{conv_block_forward.4} parent=11 // pred_check
        %p260 = pneg %p147
      $region14: #{conv_block_forward.4} parent=11 // pred_check_branch
        %262 = sbr.rel (%p260) target = $region16
      $region15: #{conv_block_forward.4} parent=11 // pred_region
        _
      $region16: #{conv_block_forward.4} parent=11 // pred_fallthru
        _
      // Predicated region
      $region17: #{conv_block_forward.4} parent=11 // pred_check
        %p263 = pneg %p168
      $region18: #{conv_block_forward.4} parent=11 // pred_check_branch
        %265 = sbr.rel (%p263) target = $region20
      $region19: #{conv_block_forward.4} parent=11 // pred_region
        _
      $region20: #{conv_block_forward.4} parent=11 // pred_fallthru
        _
      // Predicated region
      $region21: #{conv_block_forward.4} parent=11 // pred_check
        %p266 = pneg %p189
      $region22: #{conv_block_forward.4} parent=11 // pred_check_branch
        %268 = sbr.rel (%p266) target = $region24
      $region23: #{conv_block_forward.4} parent=11 // pred_region
        _
      $region24: #{conv_block_forward.4} parent=11 // pred_fallthru
        _
    $region12: #{conv_block_forward.4} parent=5 // pred_fallthru
      _
    %p269 = scmp.lt.s32.totalorder %s14, 4
    // Predicated region
    $region25: #{conv_block_forward.4} parent=5 // pred_check
      %p270 = pneg %p269
    $region26: #{conv_block_forward.4} parent=5 // pred_check_branch
      %272 = sbr.rel (%p270) target = $region28
    $region27: #{conv_block_forward.4} parent=5 // pred_region
      // Predicated region
      $region29: #{conv_block_forward.4} parent=27 // pred_check
        %p273 = pneg %p48
      $region30: #{conv_block_forward.4} parent=27 // pred_check_branch
        %275 = sbr.rel (%p273) target = $region32
      $region31: #{conv_block_forward.4} parent=27 // pred_region
        %s276 = smul.u32 8, %s22
        %p277 = scmp.lt.s32.totalorder %s21, 1
        %s278 = scalar_select %p277, %s21, 1
        %p279 = scmp.lt.s32.totalorder %s276, 15
        %s280 = scalar_select %p279, %s276, 15
        %s281 = smul.addr %s280, 2
        %s282 = smul.addr %s278, 32
        %s283 = sadd.s32 %s281, %s282
        %s284 = smul.addr %s283, 8
        %s285 = scalar_lea.vmem %s0, %s284
        %s286 = smul.u32 8, %s22
      $region32: #{conv_block_forward.4} parent=27 // pred_fallthru
        _
      // Predicated region
      $region33: #{conv_block_forward.4} parent=27 // pred_check
        %p287 = pneg %p84
      $region34: #{conv_block_forward.4} parent=27 // pred_check_branch
        %289 = sbr.rel (%p287) target = $region36
      $region35: #{conv_block_forward.4} parent=27 // pred_region
        %s290 = smul.u32 %s22, 8
        %s291 = ssub.s32 %s290, 1
        %p292 = scmp.gt.s32.totalorder %s291, 0
        %s293 = scalar_select %p292, %s291, 0
        %p294 = scmp.lt.s32.totalorder %s21, 1
        %s295 = scalar_select %p294, %s21, 1
        %p296 = scmp.lt.s32.totalorder %s293, 15
        %s297 = scalar_select %p296, %s293, 15
        %s298 = smul.addr %s297, 2
        %s299 = smul.addr %s295, 32
        %s300 = sadd.s32 %s298, %s299
        %s301 = smul.addr %s300, 8
        %s302 = scalar_lea.vmem %s1, %s301
        %s303 = smul.u32 %s22, 8
        %s304 = ssub.s32 %s303, 1
        %p305 = scmp.gt.s32.totalorder %s304, 0
        %s306 = scalar_select %p305, %s304, 0
      $region36: #{conv_block_forward.4} parent=27 // pred_fallthru
        _
      // Predicated region
      $region37: #{conv_block_forward.4} parent=27 // pred_check
        %p307 = pneg %p120
      $region38: #{conv_block_forward.4} parent=27 // pred_check_branch
        %309 = sbr.rel (%p307) target = $region40
      $region39: #{conv_block_forward.4} parent=27 // pred_region
        %s310 = sadd.s32 %s22, 1
        %s311 = smul.u32 %s310, 8
        %p312 = scmp.lt.s32.totalorder %s311, 15
        %s313 = scalar_select %p312, %s311, 15
        %p314 = scmp.lt.s32.totalorder %s21, 1
        %s315 = scalar_select %p314, %s21, 1
        %p316 = scmp.lt.s32.totalorder %s313, 15
        %s317 = scalar_select %p316, %s313, 15
        %s318 = smul.addr %s317, 2
        %s319 = smul.addr %s315, 32
        %s320 = sadd.s32 %s318, %s319
        %s321 = smul.addr %s320, 8
        %s322 = scalar_lea.vmem %s2, %s321
        %s323 = sadd.s32 %s22, 1
        %s324 = smul.u32 %s323, 8
        %p325 = scmp.lt.s32.totalorder %s324, 15
        %s326 = scalar_select %p325, %s324, 15
      $region40: #{conv_block_forward.4} parent=27 // pred_fallthru
        _
    $region28: #{conv_block_forward.4} parent=5 // pred_fallthru
      _
    %p327 = scmp.le.s32.totalorder 1, %s14
    %p328 = scmp.lt.s32.totalorder %s14, 5
    %p329 = pnand %p327, %p328
    %p330 = pneg %p329
    // Predicated region
    $region41: #{conv_block_forward.4} parent=5 // pred_check
      _
    $region42: #{conv_block_forward.4} parent=5 // pred_check_branch
      %332 = sbr.rel (%p329) target = $region44
    $region43: #{conv_block_forward.4} parent=5 // pred_region
      %s333 = ssub.s32 %s14, 1
      %s334 = smul.u32 8, %s24
      %p335 = scmp.lt.s32.totalorder %s23, 1
      %s336 = scalar_select %p335, %s23, 1
      %p337 = scmp.lt.s32.totalorder %s334, 15
      %s338 = scalar_select %p337, %s334, 15
      %s339 = smul.addr %s338, 2
      %s340 = smul.addr %s336, 32
      %s341 = sadd.s32 %s339, %s340
      %s342 = smul.addr %s341, 8
      %s343 = scalar_lea.vmem %s0, %s342
      %p344 = pneg %p54
      %p345 = pneg %p51
      %s346 = smul.u32 %s24, 8
      %s347 = ssub.s32 %s346, 1
      %p348 = scmp.gt.s32.totalorder %s347, 0
      %s349 = scalar_select %p348, %s347, 0
      %p350 = scmp.lt.s32.totalorder %s23, 1
      %s351 = scalar_select %p350, %s23, 1
      %p352 = scmp.lt.s32.totalorder %s349, 15
      %s353 = scalar_select %p352, %s349, 15
      %s354 = smul.addr %s353, 2
      %s355 = smul.addr %s351, 32
      %s356 = sadd.s32 %s354, %s355
      %s357 = smul.addr %s356, 8
      %s358 = scalar_lea.vmem %s1, %s357
      %p359 = pneg %p90
      %p360 = pneg %p87
      %s361 = sadd.s32 %s24, 1
      %s362 = smul.u32 %s361, 8
      %p363 = scmp.lt.s32.totalorder %s362, 15
      %s364 = scalar_select %p363, %s362, 15
      %p365 = scmp.lt.s32.totalorder %s23, 1
      %s366 = scalar_select %p365, %s23, 1
      %p367 = scmp.lt.s32.totalorder %s364, 15
      %s368 = scalar_select %p367, %s364, 15
      %s369 = smul.addr %s368, 2
      %s370 = smul.addr %s366, 32
      %s371 = sadd.s32 %s369, %s370
      %s372 = smul.addr %s371, 8
      %s373 = scalar_lea.vmem %s2, %s372
      %p374 = pneg %p126
      %p375 = pneg %p123
      %p376 = pneg %p147
      %p377 = pneg %p144
      %p378 = pneg %p168
      %p379 = pneg %p165
      %p380 = pneg %p189
      %p381 = pneg %p186
      %p382 = pneg %p217
      %p383 = pneg %p214
      %s384 = smul.u32 8, %s24
      %p385 = scmp.lt.s32.totalorder %s23, 1
      %s386 = scalar_select %p385, %s23, 1
      %p387 = scmp.lt.s32.totalorder %s384, 15
      %s388 = scalar_select %p387, %s384, 15
      %s389 = smul.addr %s388, 2
      %s390 = smul.addr %s386, 32
      %s391 = sadd.s32 %s389, %s390
      %s392 = smul.addr %s391, 8
      %s393 = scalar_lea.vmem %s6, %s392
      %p394 = pneg %p245
      %p395 = pneg %p242
      %p396 = scmp.lt.s32.totalorder %s23, 1
      %s397 = scalar_select %p396, %s23, 1
      %p398 = scmp.lt.s32.totalorder %s24, 1
      %s399 = scalar_select %p398, %s24, 1
      %s400 = smul.addr %s397, 2
      %s401 = sadd.s32 %s399, %s400
      %s402 = smul.addr %s401, 2
      %s403 = scalar_lea.vmem %s7, %s402
      %s404 = smul.u32 8, %s24
      %p405 = scmp.lt.s32.totalorder %s23, 1
      %s406 = scalar_select %p405, %s23, 1
      %p407 = scmp.lt.s32.totalorder %s404, 15
      %s408 = scalar_select %p407, %s404, 15
      %s409 = smul.addr %s408, 2
      %s410 = smul.addr %s406, 32
      %s411 = sadd.s32 %s409, %s410
      %s412 = smul.addr %s411, 8
      %s413 = scalar_lea.vmem %s0, %s412
      %s414 = smul.u32 8, %s24
      %s415 = smul.u32 %s24, 8
      %s416 = ssub.s32 %s415, 1
      %p417 = scmp.gt.s32.totalorder %s416, 0
      %s418 = scalar_select %p417, %s416, 0
      %p419 = scmp.lt.s32.totalorder %s23, 1
      %s420 = scalar_select %p419, %s23, 1
      %p421 = scmp.lt.s32.totalorder %s418, 15
      %s422 = scalar_select %p421, %s418, 15
      %s423 = smul.addr %s422, 2
      %s424 = smul.addr %s420, 32
      %s425 = sadd.s32 %s423, %s424
      %s426 = smul.addr %s425, 8
      %s427 = scalar_lea.vmem %s1, %s426
      %s428 = smul.u32 %s24, 8
      %s429 = ssub.s32 %s428, 1
      %p430 = scmp.gt.s32.totalorder %s429, 0
      %s431 = scalar_select %p430, %s429, 0
      %s432 = sadd.s32 %s24, 1
      %s433 = smul.u32 %s432, 8
      %p434 = scmp.lt.s32.totalorder %s433, 15
      %s435 = scalar_select %p434, %s433, 15
      %p436 = scmp.lt.s32.totalorder %s23, 1
      %s437 = scalar_select %p436, %s23, 1
      %p438 = scmp.lt.s32.totalorder %s435, 15
      %s439 = scalar_select %p438, %s435, 15
      %s440 = smul.addr %s439, 2
      %s441 = smul.addr %s437, 32
      %s442 = sadd.s32 %s440, %s441
      %s443 = smul.addr %s442, 8
      %s444 = scalar_lea.vmem %s2, %s443
      %s445 = sadd.s32 %s24, 1
      %s446 = smul.u32 %s445, 8
      %p447 = scmp.lt.s32.totalorder %s446, 15
      %s448 = scalar_select %p447, %s446, 15
      %s449 = smul.u32 8, %s24
      %p450 = scmp.lt.s32.totalorder %s23, 1
      %s451 = scalar_select %p450, %s23, 1
      %p452 = scmp.lt.s32.totalorder %s449, 15
      %s453 = scalar_select %p452, %s449, 15
      %s454 = smul.addr %s453, 2
      %s455 = smul.addr %s451, 32
      %s456 = sadd.s32 %s454, %s455
      %s457 = smul.addr %s456, 8
      %s458 = scalar_lea.vmem %s6, %s457
      %s459 = smul.u32 8, %s24
      %p460 = scmp.lt.s32.totalorder %s23, 1
      %s461 = scalar_select %p460, %s23, 1
      %p462 = scmp.lt.s32.totalorder %s24, 1
      %s463 = scalar_select %p462, %s24, 1
      %s464 = smul.addr %s461, 2
      %s465 = sadd.s32 %s463, %s464
      %s466 = smul.addr %s465, 2
      %s467 = scalar_lea.vmem %s7, %s466
      %vm469 = vcmask 60416
      %470 = vst.msk [vmem:[#allocation2] sm:$0xf] %vm469, 0
      %471 = vst.msk [vmem:[#allocation2 + $0x4] sm:$0xf] %vm469, 0
      %vm472 = vcmask 57344
      %473 = vst.msk [vmem:[#allocation2 + $0x8] sm:$0x1] %vm472, 0
      %474 = vst.msk [vmem:[#allocation2 + $0xc] sm:$0xf] %vm469, 0
      %475 = vst.msk [vmem:[#allocation2 + $0x10] sm:$0xf] %vm469, 0
      %476 = vst.msk [vmem:[#allocation2 + $0x14] sm:$0x1] %vm472, 0
      %477 = vst.msk [vmem:[#allocation2 + $0x18] sm:$0xf] %vm469, 0
      %478 = vst.msk [vmem:[#allocation2 + $0x1c] sm:$0xf] %vm469, 0
      %479 = vst.msk [vmem:[#allocation2 + $0x20] sm:$0x1] %vm472, 0
      %480 = vst.msk [vmem:[#allocation2 + $0x24] sm:$0xf] %vm469, 0
      %481 = vst.msk [vmem:[#allocation2 + $0x28] sm:$0xf] %vm469, 0
      %482 = vst.msk [vmem:[#allocation2 + $0x2c] sm:$0x1] %vm472, 0
      %483 = vst.msk [vmem:[#allocation2 + $0x30] sm:$0xf] %vm469, 0
      %484 = vst.msk [vmem:[#allocation2 + $0x34] sm:$0xf] %vm469, 0
      %485 = vst.msk [vmem:[#allocation2 + $0x38] sm:$0x1] %vm472, 0
      %486 = vst.msk [vmem:[#allocation2 + $0x3c] sm:$0xf] %vm469, 0
      %487 = vst.msk [vmem:[#allocation2 + $0x40] sm:$0xf] %vm469, 0
      %488 = vst.msk [vmem:[#allocation2 + $0x44] sm:$0x1] %vm472, 0
      %489 = vst.msk [vmem:[#allocation2 + $0x48] sm:$0xf] %vm469, 0
      %490 = vst.msk [vmem:[#allocation2 + $0x4c] sm:$0xf] %vm469, 0
      %491 = vst.msk [vmem:[#allocation2 + $0x50] sm:$0x1] %vm472, 0
      %492 = vst.msk [vmem:[#allocation2 + $0x54] sm:$0xf] %vm469, 0
      %493 = vst.msk [vmem:[#allocation2 + $0x58] sm:$0xf] %vm469, 0
      %494 = vst.msk [vmem:[#allocation2 + $0x5c] sm:$0x1] %vm472, 0
      %495 = vst.msk [vmem:[#allocation2 + $0x60] sm:$0xf] %vm469, 0
      %496 = vst.msk [vmem:[#allocation2 + $0x64] sm:$0xf] %vm469, 0
      %497 = vst.msk [vmem:[#allocation2 + $0x68] sm:$0x1] %vm472, 0
      %498 = vst.msk [vmem:[#allocation2 + $0x6c] sm:$0xf] %vm469, 0
      %499 = vst.msk [vmem:[#allocation2 + $0x70] sm:$0xf] %vm469, 0
      %500 = vst.msk [vmem:[#allocation2 + $0x74] sm:$0x1] %vm472, 0
      %v501 = vld [vmem:[%s413] sm:$0xff]
      %v502 = vld [vmem:[%s413 + $0x8] sm:$0xff]
      %v503 = vld [vmem:[%s413 + $0x10] sm:$0xff]
      %v504 = vld [vmem:[%s413 + $0x18] sm:$0xff]
      %v505 = vld [vmem:[%s413 + $0x20] sm:$0xff]
      %v506 = vld [vmem:[%s413 + $0x28] sm:$0xff]
      %v507 = vld [vmem:[%s413 + $0x30] sm:$0xff]
      %v508 = vld [vmem:[%s413 + $0x38] sm:$0xff]
      %v509 = vld [vmem:[%s413 + $0x40] sm:$0xff]
      %v510 = vld [vmem:[%s413 + $0x48] sm:$0xff]
      %v511 = vld [vmem:[%s413 + $0x50] sm:$0xff]
      %v512 = vld [vmem:[%s413 + $0x58] sm:$0xff]
      %v513 = vld [vmem:[%s413 + $0x60] sm:$0xff]
      %v514 = vld [vmem:[%s413 + $0x68] sm:$0xff]
      %v515 = vld [vmem:[%s413 + $0x70] sm:$0xff]
      %v516 = vld [vmem:[%s413 + $0x78] sm:$0xff]
      %v517 = vld [vmem:[%s4] sm:$0x1]
      %v519 = vlaneseq
      %v520 = vshrl.u32 %v519, 7
      %v521 = vsub.s32 0, %v520
      %v522 = vrot.slane %v517, %v521
      %v524 = vmul.f32 %v501, %v522
      %v525 = vmul.f32 %v502, %v522
      %v526 = vmul.f32 %v503, %v522
      %v527 = vmul.f32 %v504, %v522
      %v528 = vmul.f32 %v505, %v522
      %v529 = vmul.f32 %v506, %v522
      %v530 = vmul.f32 %v507, %v522
      %v531 = vmul.f32 %v508, %v522
      %v532 = vmul.f32 %v509, %v522
      %v533 = vmul.f32 %v510, %v522
      %v534 = vmul.f32 %v511, %v522
      %v535 = vmul.f32 %v512, %v522
      %v536 = vmul.f32 %v513, %v522
      %v537 = vmul.f32 %v514, %v522
      %v538 = vmul.f32 %v515, %v522
      %v539 = vmul.f32 %v516, %v522
      %v540 = vld [vmem:[%s5] sm:$0x1]
      %v542 = vlaneseq
      %v543 = vshrl.u32 %v542, 7
      %v544 = vsub.s32 0, %v543
      %v545 = vrot.slane %v540, %v544
      %v547 = vadd.f32 %v524, %v545
      %v548 = vadd.f32 %v525, %v545
      %v549 = vadd.f32 %v526, %v545
      %v550 = vadd.f32 %v527, %v545
      %v551 = vadd.f32 %v528, %v545
      %v552 = vadd.f32 %v529, %v545
      %v553 = vadd.f32 %v530, %v545
      %v554 = vadd.f32 %v531, %v545
      %v555 = vadd.f32 %v532, %v545
      %v556 = vadd.f32 %v533, %v545
      %v557 = vadd.f32 %v534, %v545
      %v558 = vadd.f32 %v535, %v545
      %v559 = vadd.f32 %v536, %v545
      %v560 = vadd.f32 %v537, %v545
      %v561 = vadd.f32 %v538, %v545
      %v562 = vadd.f32 %v539, %v545
      %v563 = vmax.f32 %v547, 0.0
      %v564 = vmax.f32 %v548, 0.0
      %v565 = vmax.f32 %v549, 0.0
      %v566 = vmax.f32 %v550, 0.0
      %v567 = vmax.f32 %v551, 0.0
      %v568 = vmax.f32 %v552, 0.0
      %v569 = vmax.f32 %v553, 0.0
      %v570 = vmax.f32 %v554, 0.0
      %v571 = vmax.f32 %v555, 0.0
      %v572 = vmax.f32 %v556, 0.0
      %v573 = vmax.f32 %v557, 0.0
      %v574 = vmax.f32 %v558, 0.0
      %v575 = vmax.f32 %v559, 0.0
      %v576 = vmax.f32 %v560, 0.0
      %v577 = vmax.f32 %v561, 0.0
      %v578 = vmax.f32 %v562, 0.0
      %v579 = vpack.c.bf16 %v564, %v563
      %v580 = vpack.c.bf16 %v566, %v565
      %v581 = vpack.c.bf16 %v568, %v567
      %v582 = vpack.c.bf16 %v570, %v569
      %v583 = vpack.c.bf16 %v572, %v571
      %v584 = vpack.c.bf16 %v574, %v573
      %v585 = vpack.c.bf16 %v576, %v575
      %v586 = vpack.c.bf16 %v578, %v577
      %v595 = vunpack.c.l.b16 %v579
      %v596 = vunpack.c.h.b16 %v579
      %v597 = vunpack.c.l.b16 %v580
      %v598 = vunpack.c.h.b16 %v580
      %v599 = vunpack.c.l.b16 %v581
      %v600 = vunpack.c.h.b16 %v581
      %v601 = vunpack.c.l.b16 %v582
      %v602 = vunpack.c.h.b16 %v582
      %v603 = vunpack.c.l.b16 %v583
      %v604 = vunpack.c.h.b16 %v583
      %v605 = vunpack.c.l.b16 %v584
      %v606 = vunpack.c.h.b16 %v584
      %v607 = vunpack.c.l.b16 %v585
      %v608 = vunpack.c.h.b16 %v585
      %v609 = vunpack.c.l.b16 %v586
      %v610 = vunpack.c.h.b16 %v586
      %v611 = vpack.c.b16 %v595, %v595
      %v612 = vpack.c.b16 %v596, %v596
      %v613 = vpack.c.b16 %v597, %v597
      %v614 = vpack.c.b16 %v598, %v598
      %v615 = vpack.c.b16 %v599, %v599
      %v616 = vpack.c.b16 %v600, %v600
      %v617 = vpack.c.b16 %v601, %v601
      %v618 = vpack.c.b16 %v602, %v602
      %v619 = vpack.c.b16 %v603, %v603
      %v620 = vpack.c.b16 %v604, %v604
      %v621 = vpack.c.b16 %v605, %v605
      %v622 = vpack.c.b16 %v606, %v606
      %v623 = vpack.c.b16 %v607, %v607
      %v624 = vpack.c.b16 %v608, %v608
      %v625 = vpack.c.b16 %v609, %v609
      %v626 = vpack.c.b16 %v610, %v610
      %vm627 = vsmask.f32 256
      %vm628 = vsmask.f32 4368
      %vm629 = vmor %vm627, %vm628
      %v631 = vshrl.u32 %v611, 16
      %v633 = vrot.slane %v631, 7
      %v634 = vshll.u32 %v611, 16
      %v636 = vor.u32 %v633, %v634
      %v637 = vrot.slane %v633, 4
      %v639 = vshrl.u32 %v612, 16
      %v641 = vrot.slane %v639, 7
      %v642 = vshll.u32 %v612, 16
      %v644 = vor.u32 %v641, %v642
      %v645 = vsel %vm629, %v637, %v644
      %v646 = vrot.slane %v641, 4
      %v648 = vshrl.u32 %v613, 16
      %v650 = vrot.slane %v648, 7
      %v651 = vshll.u32 %v613, 16
      %v653 = vor.u32 %v650, %v651
      %v654 = vrot.slane %v650, 4
      %v656 = vshrl.u32 %v614, 16
      %v658 = vrot.slane %v656, 7
      %v659 = vshll.u32 %v614, 16
      %v661 = vor.u32 %v658, %v659
      %v662 = vsel %vm629, %v654, %v661
      %v663 = vrot.slane %v658, 4
      %v665 = vshrl.u32 %v615, 16
      %v667 = vrot.slane %v665, 7
      %v668 = vshll.u32 %v615, 16
      %v670 = vor.u32 %v667, %v668
      %v671 = vrot.slane %v667, 4
      %v673 = vshrl.u32 %v616, 16
      %v675 = vrot.slane %v673, 7
      %v676 = vshll.u32 %v616, 16
      %v678 = vor.u32 %v675, %v676
      %v679 = vsel %vm629, %v671, %v678
      %v680 = vrot.slane %v675, 4
      %v682 = vshrl.u32 %v617, 16
      %v684 = vrot.slane %v682, 7
      %v685 = vshll.u32 %v617, 16
      %v687 = vor.u32 %v684, %v685
      %v688 = vrot.slane %v684, 4
      %v690 = vshrl.u32 %v618, 16
      %v692 = vrot.slane %v690, 7
      %v693 = vshll.u32 %v618, 16
      %v695 = vor.u32 %v692, %v693
      %v696 = vsel %vm629, %v688, %v695
      %v697 = vrot.slane %v692, 4
      %v699 = vshrl.u32 %v619, 16
      %v701 = vrot.slane %v699, 7
      %v702 = vshll.u32 %v619, 16
      %v704 = vor.u32 %v701, %v702
      %v705 = vrot.slane %v701, 4
      %v707 = vshrl.u32 %v620, 16
      %v709 = vrot.slane %v707, 7
      %v710 = vshll.u32 %v620, 16
      %v712 = vor.u32 %v709, %v710
      %v713 = vsel %vm629, %v705, %v712
      %v714 = vrot.slane %v709, 4
      %v716 = vshrl.u32 %v621, 16
      %v718 = vrot.slane %v716, 7
      %v719 = vshll.u32 %v621, 16
      %v721 = vor.u32 %v718, %v719
      %v722 = vrot.slane %v718, 4
      %v724 = vshrl.u32 %v622, 16
      %v726 = vrot.slane %v724, 7
      %v727 = vshll.u32 %v622, 16
      %v729 = vor.u32 %v726, %v727
      %v730 = vsel %vm629, %v722, %v729
      %v731 = vrot.slane %v726, 4
      %v733 = vshrl.u32 %v623, 16
      %v735 = vrot.slane %v733, 7
      %v736 = vshll.u32 %v623, 16
      %v738 = vor.u32 %v735, %v736
      %v739 = vrot.slane %v735, 4
      %v741 = vshrl.u32 %v624, 16
      %v743 = vrot.slane %v741, 7
      %v744 = vshll.u32 %v624, 16
      %v746 = vor.u32 %v743, %v744
      %v747 = vsel %vm629, %v739, %v746
      %v748 = vrot.slane %v743, 4
      %v750 = vshrl.u32 %v625, 16
      %v752 = vrot.slane %v750, 7
      %v753 = vshll.u32 %v625, 16
      %v755 = vor.u32 %v752, %v753
      %v756 = vrot.slane %v752, 4
      %v758 = vshrl.u32 %v626, 16
      %v760 = vrot.slane %v758, 7
      %v761 = vshll.u32 %v626, 16
      %v763 = vor.u32 %v760, %v761
      %v764 = vsel %vm629, %v756, %v763
      %v765 = vrot.slane %v760, 4
      %s790 = scalar_lea.vmem [#allocation2], 12
      %vm791 = vcmask 60416
      %vm792 = vsmask.f32 7938
      %vm793 = vmand %vm791, %vm792
      %v794 = vld [vmem:[%s790] sm:$0xf]
      %v795 = vsel %vm793, %v636, %v794
      %796 = vst [vmem:[%s790] sm:$0xf] %v795
      %797 = vst.msk [vmem:[%s790 + $0x4] sm:$0xf] %vm469, %v645
      %vm798 = vcmask 57344
      %vm799 = vmand %vm798, %vm627
      %v800 = vld [vmem:[%s790 + $0x8] sm:$0x1]
      %v801 = vsel %vm799, %v646, %v800
      %802 = vst [vmem:[%s790 + $0x8] sm:$0x1] %v801
      %v803 = vld [vmem:[%s790 + $0xc] sm:$0xf]
      %v804 = vsel %vm793, %v653, %v803
      %805 = vst [vmem:[%s790 + $0xc] sm:$0xf] %v804
      %806 = vst.msk [vmem:[%s790 + $0x10] sm:$0xf] %vm469, %v662
      %v807 = vld [vmem:[%s790 + $0x14] sm:$0x1]
      %v808 = vsel %vm799, %v663, %v807
      %809 = vst [vmem:[%s790 + $0x14] sm:$0x1] %v808
      %v810 = vld [vmem:[%s790 + $0x18] sm:$0xf]
      %v811 = vsel %vm793, %v670, %v810
      %812 = vst [vmem:[%s790 + $0x18] sm:$0xf] %v811
      %813 = vst.msk [vmem:[%s790 + $0x1c] sm:$0xf] %vm469, %v679
      %v814 = vld [vmem:[%s790 + $0x20] sm:$0x1]
      %v815 = vsel %vm799, %v680, %v814
      %816 = vst [vmem:[%s790 + $0x20] sm:$0x1] %v815
      %v817 = vld [vmem:[%s790 + $0x24] sm:$0xf]
      %v818 = vsel %vm793, %v687, %v817
      %819 = vst [vmem:[%s790 + $0x24] sm:$0xf] %v818
      %820 = vst.msk [vmem:[%s790 + $0x28] sm:$0xf] %vm469, %v696
      %v821 = vld [vmem:[%s790 + $0x2c] sm:$0x1]
      %v822 = vsel %vm799, %v697, %v821
      %823 = vst [vmem:[%s790 + $0x2c] sm:$0x1] %v822
      %v824 = vld [vmem:[%s790 + $0x30] sm:$0xf]
      %v825 = vsel %vm793, %v704, %v824
      %826 = vst [vmem:[%s790 + $0x30] sm:$0xf] %v825
      %827 = vst.msk [vmem:[%s790 + $0x34] sm:$0xf] %vm469, %v713
      %v828 = vld [vmem:[%s790 + $0x38] sm:$0x1]
      %v829 = vsel %vm799, %v714, %v828
      %830 = vst [vmem:[%s790 + $0x38] sm:$0x1] %v829
      %v831 = vld [vmem:[%s790 + $0x3c] sm:$0xf]
      %v832 = vsel %vm793, %v721, %v831
      %833 = vst [vmem:[%s790 + $0x3c] sm:$0xf] %v832
      %834 = vst.msk [vmem:[%s790 + $0x40] sm:$0xf] %vm469, %v730
      %v835 = vld [vmem:[%s790 + $0x44] sm:$0x1]
      %v836 = vsel %vm799, %v731, %v835
      %837 = vst [vmem:[%s790 + $0x44] sm:$0x1] %v836
      %v838 = vld [vmem:[%s790 + $0x48] sm:$0xf]
      %v839 = vsel %vm793, %v738, %v838
      %840 = vst [vmem:[%s790 + $0x48] sm:$0xf] %v839
      %841 = vst.msk [vmem:[%s790 + $0x4c] sm:$0xf] %vm469, %v747
      %v842 = vld [vmem:[%s790 + $0x50] sm:$0x1]
      %v843 = vsel %vm799, %v748, %v842
      %844 = vst [vmem:[%s790 + $0x50] sm:$0x1] %v843
      %v845 = vld [vmem:[%s790 + $0x54] sm:$0xf]
      %v846 = vsel %vm793, %v755, %v845
      %847 = vst [vmem:[%s790 + $0x54] sm:$0xf] %v846
      %848 = vst.msk [vmem:[%s790 + $0x58] sm:$0xf] %vm469, %v764
      %v849 = vld [vmem:[%s790 + $0x5c] sm:$0x1]
      %v850 = vsel %vm799, %v765, %v849
      %851 = vst [vmem:[%s790 + $0x5c] sm:$0x1] %v850
      %p852 = scmp.gt.s32.totalorder %s24, 0
      // Predicated region
      $region45: #{conv_block_forward.4} parent=43 // pred_check
        %p853 = pneg %p852
      $region46: #{conv_block_forward.4} parent=43 // pred_check_branch
        %855 = sbr.rel (%p853) target = $region48
      $region47: #{conv_block_forward.4} parent=43 // pred_region
        %v856 = vld [vmem:[%s427] sm:$0xff]
        %v857 = vld [vmem:[%s427 + $0x8] sm:$0xff]
        %v858 = vld [vmem:[%s4] sm:$0x1]
        %v860 = vlaneseq
        %v861 = vshrl.u32 %v860, 7
        %v862 = vsub.s32 0, %v861
        %v863 = vrot.slane %v858, %v862
        %v865 = vmul.f32 %v856, %v863
        %v866 = vmul.f32 %v857, %v863
        %v867 = vld [vmem:[%s5] sm:$0x1]
        %v869 = vlaneseq
        %v870 = vshrl.u32 %v869, 7
        %v871 = vsub.s32 0, %v870
        %v872 = vrot.slane %v867, %v871
        %v874 = vadd.f32 %v865, %v872
        %v875 = vadd.f32 %v866, %v872
        %v876 = vmax.f32 %v874, 0.0
        %v877 = vmax.f32 %v875, 0.0
        %v878 = vpack.c.bf16 %v877, %v876
        %v880 = vunpack.c.l.b16 %v878
        %v881 = vunpack.c.h.b16 %v878
        %v882 = vpack.c.b16 %v880, %v880
        %v883 = vpack.c.b16 %v881, %v881
        %v885 = vshrl.u32 %v882, 16
        %v887 = vrot.slane %v885, 7
        %v888 = vshll.u32 %v882, 16
        %v890 = vor.u32 %v887, %v888
        %v891 = vrot.slane %v887, 4
        %v893 = vshrl.u32 %v883, 16
        %v895 = vrot.slane %v893, 7
        %v896 = vshll.u32 %v883, 16
        %v898 = vor.u32 %v895, %v896
        %v899 = vsel %vm629, %v891, %v898
        %v900 = vrot.slane %v895, 4
        %v904 = vld [vmem:[#allocation2] sm:$0xf]
        %v905 = vsel %vm793, %v890, %v904
        %906 = vst [vmem:[#allocation2] sm:$0xf] %v905
        %907 = vst.msk [vmem:[#allocation2 + $0x4] sm:$0xf] %vm469, %v899
        %v908 = vld [vmem:[#allocation2 + $0x8] sm:$0x1]
        %v909 = vsel %vm799, %v900, %v908
        %910 = vst [vmem:[#allocation2 + $0x8] sm:$0x1] %v909
      $region48: #{conv_block_forward.4} parent=43 // pred_fallthru
        _
      %p911 = scmp.lt.s32.totalorder %s24, 1
      // Predicated region
      $region49: #{conv_block_forward.4} parent=43 // pred_check
        %p912 = pneg %p911
      $region50: #{conv_block_forward.4} parent=43 // pred_check_branch
        %914 = sbr.rel (%p912) target = $region52
      $region51: #{conv_block_forward.4} parent=43 // pred_region
        %v915 = vld [vmem:[%s444] sm:$0xff]
        %v916 = vld [vmem:[%s444 + $0x8] sm:$0xff]
        %v917 = vld [vmem:[%s4] sm:$0x1]
        %v919 = vlaneseq
        %v920 = vshrl.u32 %v919, 7
        %v921 = vsub.s32 0, %v920
        %v922 = vrot.slane %v917, %v921
        %v924 = vmul.f32 %v915, %v922
        %v925 = vmul.f32 %v916, %v922
        %v926 = vld [vmem:[%s5] sm:$0x1]
        %v928 = vlaneseq
        %v929 = vshrl.u32 %v928, 7
        %v930 = vsub.s32 0, %v929
        %v931 = vrot.slane %v926, %v930
        %v933 = vadd.f32 %v924, %v931
        %v934 = vadd.f32 %v925, %v931
        %v935 = vmax.f32 %v933, 0.0
        %v936 = vmax.f32 %v934, 0.0
        %v937 = vpack.c.bf16 %v936, %v935
        %v939 = vunpack.c.l.b16 %v937
        %v940 = vunpack.c.h.b16 %v937
        %v941 = vpack.c.b16 %v939, %v939
        %v942 = vpack.c.b16 %v940, %v940
        %v944 = vshrl.u32 %v941, 16
        %v946 = vrot.slane %v944, 7
        %v947 = vshll.u32 %v941, 16
        %v949 = vor.u32 %v946, %v947
        %v950 = vrot.slane %v946, 4
        %v952 = vshrl.u32 %v942, 16
        %v954 = vrot.slane %v952, 7
        %v955 = vshll.u32 %v942, 16
        %v957 = vor.u32 %v954, %v955
        %v958 = vsel %vm629, %v950, %v957
        %v959 = vrot.slane %v954, 4
        %s963 = scalar_lea.vmem [#allocation2], 108
        %v964 = vld [vmem:[%s963] sm:$0xf]
        %v965 = vsel %vm793, %v949, %v964
        %966 = vst [vmem:[%s963] sm:$0xf] %v965
        %967 = vst.msk [vmem:[%s963 + $0x4] sm:$0xf] %vm469, %v958
        %v968 = vld [vmem:[%s963 + $0x8] sm:$0x1]
        %v969 = vsel %vm799, %v959, %v968
        %970 = vst [vmem:[%s963 + $0x8] sm:$0x1] %v969
      $region52: #{conv_block_forward.4} parent=43 // pred_fallthru
        _
      %v971 = vld [vmem:[#allocation2] sm:$0xf]
      %v972 = vld [vmem:[#allocation2 + $0x4] sm:$0xf]
      %v973 = vld [vmem:[#allocation2 + $0xc] sm:$0xf]
      %v974 = vld [vmem:[#allocation2 + $0x10] sm:$0xf]
      %v975 = vld [vmem:[#allocation2 + $0x18] sm:$0xf]
      %v976 = vld [vmem:[#allocation2 + $0x1c] sm:$0xf]
      %v977 = vld [vmem:[#allocation2 + $0x24] sm:$0xf]
      %v978 = vld [vmem:[#allocation2 + $0x28] sm:$0xf]
      %v979 = vld [vmem:[#allocation2 + $0x30] sm:$0xf]
      %v980 = vld [vmem:[#allocation2 + $0x34] sm:$0xf]
      %v981 = vld [vmem:[#allocation2 + $0x3c] sm:$0xf]
      %v982 = vld [vmem:[#allocation2 + $0x40] sm:$0xf]
      %v983 = vld [vmem:[#allocation2 + $0x48] sm:$0xf]
      %v984 = vld [vmem:[#allocation2 + $0x4c] sm:$0xf]
      %v985 = vld [vmem:[#allocation2 + $0x54] sm:$0xf]
      %v986 = vld [vmem:[#allocation2 + $0x58] sm:$0xf]
      %v987 = vld [vmem:[#allocation2 + $0x8] sm:$0x1]
      %v988 = vld [vmem:[#allocation2 + $0x14] sm:$0x1]
      %v989 = vld [vmem:[#allocation2 + $0x20] sm:$0x1]
      %v990 = vld [vmem:[#allocation2 + $0x2c] sm:$0x1]
      %v991 = vld [vmem:[#allocation2 + $0x38] sm:$0x1]
      %v992 = vld [vmem:[#allocation2 + $0x44] sm:$0x1]
      %v993 = vld [vmem:[#allocation2 + $0x50] sm:$0x1]
      %v994 = vld [vmem:[#allocation2 + $0x5c] sm:$0x1]
      %vm995 = vsmask.f32 3328
      %vm996 = vsmask.f32 7440
      %vm997 = vmor %vm995, %vm996
      %v999 = vshrl.u32 %v971, 16
      %v1001 = vrot.slane %v999, 4
      %v1002 = vshll.u32 %v971, 16
      %v1004 = vrot.slane %v1002, 5
      %v1005 = vor.u32 %v1001, %v1004
      %v1006 = vrot.slane %v1005, 4
      %v1008 = vshll.u32 %v972, 16
      %v1010 = vrot.slane %v1008, 5
      %v1011 = vsel %vm997, %v1006, %v1010
      %v1012 = vshrl.u32 %v972, 16
      %v1014 = vrot.slane %v1012, 4
      %v1015 = vor.u32 %v1014, %v1010
      %v1016 = vrot.slane %v1015, 4
      %v1018 = vshll.u32 %v987, 16
      %v1020 = vrot.slane %v1018, 5
      %v1021 = vsel %vm997, %v1016, %v1020
      %v1023 = vshrl.u32 %v973, 16
      %v1025 = vrot.slane %v1023, 4
      %v1026 = vshll.u32 %v973, 16
      %v1028 = vrot.slane %v1026, 5
      %v1029 = vor.u32 %v1025, %v1028
      %v1030 = vrot.slane %v1029, 4
      %v1032 = vshll.u32 %v974, 16
      %v1034 = vrot.slane %v1032, 5
      %v1035 = vsel %vm997, %v1030, %v1034
      %v1036 = vshrl.u32 %v974, 16
      %v1038 = vrot.slane %v1036, 4
      %v1039 = vor.u32 %v1038, %v1034
      %v1040 = vrot.slane %v1039, 4
      %v1042 = vshll.u32 %v988, 16
      %v1044 = vrot.slane %v1042, 5
      %v1045 = vsel %vm997, %v1040, %v1044
      %v1047 = vshrl.u32 %v975, 16
      %v1049 = vrot.slane %v1047, 4
      %v1050 = vshll.u32 %v975, 16
      %v1052 = vrot.slane %v1050, 5
      %v1053 = vor.u32 %v1049, %v1052
      %v1054 = vrot.slane %v1053, 4
      %v1056 = vshll.u32 %v976, 16
      %v1058 = vrot.slane %v1056, 5
      %v1059 = vsel %vm997, %v1054, %v1058
      %v1060 = vshrl.u32 %v976, 16
      %v1062 = vrot.slane %v1060, 4
      %v1063 = vor.u32 %v1062, %v1058
      %v1064 = vrot.slane %v1063, 4
      %v1066 = vshll.u32 %v989, 16
      %v1068 = vrot.slane %v1066, 5
      %v1069 = vsel %vm997, %v1064, %v1068
      %v1071 = vshrl.u32 %v977, 16
      %v1073 = vrot.slane %v1071, 4
      %v1074 = vshll.u32 %v977, 16
      %v1076 = vrot.slane %v1074, 5
      %v1077 = vor.u32 %v1073, %v1076
      %v1078 = vrot.slane %v1077, 4
      %v1080 = vshll.u32 %v978, 16
      %v1082 = vrot.slane %v1080, 5
      %v1083 = vsel %vm997, %v1078, %v1082
      %v1084 = vshrl.u32 %v978, 16
      %v1086 = vrot.slane %v1084, 4
      %v1087 = vor.u32 %v1086, %v1082
      %v1088 = vrot.slane %v1087, 4
      %v1090 = vshll.u32 %v990, 16
      %v1092 = vrot.slane %v1090, 5
      %v1093 = vsel %vm997, %v1088, %v1092
      %v1095 = vshrl.u32 %v979, 16
      %v1097 = vrot.slane %v1095, 4
      %v1098 = vshll.u32 %v979, 16
      %v1100 = vrot.slane %v1098, 5
      %v1101 = vor.u32 %v1097, %v1100
      %v1102 = vrot.slane %v1101, 4
      %v1104 = vshll.u32 %v980, 16
      %v1106 = vrot.slane %v1104, 5
      %v1107 = vsel %vm997, %v1102, %v1106
      %v1108 = vshrl.u32 %v980, 16
      %v1110 = vrot.slane %v1108, 4
      %v1111 = vor.u32 %v1110, %v1106
      %v1112 = vrot.slane %v1111, 4
      %v1114 = vshll.u32 %v991, 16
      %v1116 = vrot.slane %v1114, 5
      %v1117 = vsel %vm997, %v1112, %v1116
      %v1119 = vshrl.u32 %v981, 16
      %v1121 = vrot.slane %v1119, 4
      %v1122 = vshll.u32 %v981, 16
      %v1124 = vrot.slane %v1122, 5
      %v1125 = vor.u32 %v1121, %v1124
      %v1126 = vrot.slane %v1125, 4
      %v1128 = vshll.u32 %v982, 16
      %v1130 = vrot.slane %v1128, 5
      %v1131 = vsel %vm997, %v1126, %v1130
      %v1132 = vshrl.u32 %v982, 16
      %v1134 = vrot.slane %v1132, 4
      %v1135 = vor.u32 %v1134, %v1130
      %v1136 = vrot.slane %v1135, 4
      %v1138 = vshll.u32 %v992, 16
      %v1140 = vrot.slane %v1138, 5
      %v1141 = vsel %vm997, %v1136, %v1140
      %v1143 = vshrl.u32 %v983, 16
      %v1145 = vrot.slane %v1143, 4
      %v1146 = vshll.u32 %v983, 16
      %v1148 = vrot.slane %v1146, 5
      %v1149 = vor.u32 %v1145, %v1148
      %v1150 = vrot.slane %v1149, 4
      %v1152 = vshll.u32 %v984, 16
      %v1154 = vrot.slane %v1152, 5
      %v1155 = vsel %vm997, %v1150, %v1154
      %v1156 = vshrl.u32 %v984, 16
      %v1158 = vrot.slane %v1156, 4
      %v1159 = vor.u32 %v1158, %v1154
      %v1160 = vrot.slane %v1159, 4
      %v1162 = vshll.u32 %v993, 16
      %v1164 = vrot.slane %v1162, 5
      %v1165 = vsel %vm997, %v1160, %v1164
      %v1167 = vshrl.u32 %v985, 16
      %v1169 = vrot.slane %v1167, 4
      %v1170 = vshll.u32 %v985, 16
      %v1172 = vrot.slane %v1170, 5
      %v1173 = vor.u32 %v1169, %v1172
      %v1174 = vrot.slane %v1173, 4
      %v1176 = vshll.u32 %v986, 16
      %v1178 = vrot.slane %v1176, 5
      %v1179 = vsel %vm997, %v1174, %v1178
      %v1180 = vshrl.u32 %v986, 16
      %v1182 = vrot.slane %v1180, 4
      %v1183 = vor.u32 %v1182, %v1178
      %v1184 = vrot.slane %v1183, 4
      %v1186 = vshll.u32 %v994, 16
      %v1188 = vrot.slane %v1186, 5
      %v1189 = vsel %vm997, %v1184, %v1188
      %v1190 = vld [vmem:[#allocation2] sm:$0xe]
      %v1191 = vld [vmem:[#allocation2 + $0xc] sm:$0xe]
      %v1192 = vld [vmem:[#allocation2 + $0x18] sm:$0xe]
      %v1193 = vld [vmem:[#allocation2 + $0x24] sm:$0xe]
      %v1194 = vld [vmem:[#allocation2 + $0x30] sm:$0xe]
      %v1195 = vld [vmem:[#allocation2 + $0x3c] sm:$0xe]
      %v1196 = vld [vmem:[#allocation2 + $0x48] sm:$0xe]
      %v1197 = vld [vmem:[#allocation2 + $0x54] sm:$0xe]
      %vm1222 = vcmask 1042432
      %vm1223 = vcmask 1046532
      %vm1224 = vmor %vm1222, %vm1223
      %v1225 = vrot.slane %v1190, 5
      %v1226 = vrot.slane %v1225, 4
      %v1227 = vrot.slane %v972, 5
      %v1228 = vsel %vm1224, %v1226, %v1227
      %v1229 = vrot.slane %v1227, 4
      %v1230 = vrot.slane %v987, 5
      %v1231 = vsel %vm1224, %v1229, %v1230
      %v1232 = vrot.slane %v1191, 5
      %v1233 = vrot.slane %v1232, 4
      %v1234 = vrot.slane %v974, 5
      %v1235 = vsel %vm1224, %v1233, %v1234
      %v1236 = vrot.slane %v1234, 4
      %v1237 = vrot.slane %v988, 5
      %v1238 = vsel %vm1224, %v1236, %v1237
      %v1239 = vrot.slane %v1192, 5
      %v1240 = vrot.slane %v1239, 4
      %v1241 = vrot.slane %v976, 5
      %v1242 = vsel %vm1224, %v1240, %v1241
      %v1243 = vrot.slane %v1241, 4
      %v1244 = vrot.slane %v989, 5
      %v1245 = vsel %vm1224, %v1243, %v1244
      %v1246 = vrot.slane %v1193, 5
      %v1247 = vrot.slane %v1246, 4
      %v1248 = vrot.slane %v978, 5
      %v1249 = vsel %vm1224, %v1247, %v1248
      %v1250 = vrot.slane %v1248, 4
      %v1251 = vrot.slane %v990, 5
      %v1252 = vsel %vm1224, %v1250, %v1251
      %v1253 = vrot.slane %v1194, 5
      %v1254 = vrot.slane %v1253, 4
      %v1255 = vrot.slane %v980, 5
      %v1256 = vsel %vm1224, %v1254, %v1255
      %v1257 = vrot.slane %v1255, 4
      %v1258 = vrot.slane %v991, 5
      %v1259 = vsel %vm1224, %v1257, %v1258
      %v1260 = vrot.slane %v1195, 5
      %v1261 = vrot.slane %v1260, 4
      %v1262 = vrot.slane %v982, 5
      %v1263 = vsel %vm1224, %v1261, %v1262
      %v1264 = vrot.slane %v1262, 4
      %v1265 = vrot.slane %v992, 5
      %v1266 = vsel %vm1224, %v1264, %v1265
      %v1267 = vrot.slane %v1196, 5
      %v1268 = vrot.slane %v1267, 4
      %v1269 = vrot.slane %v984, 5
      %v1270 = vsel %vm1224, %v1268, %v1269
      %v1271 = vrot.slane %v1269, 4
      %v1272 = vrot.slane %v993, 5
      %v1273 = vsel %vm1224, %v1271, %v1272
      %v1274 = vrot.slane %v1197, 5
      %v1275 = vrot.slane %v1274, 4
      %v1276 = vrot.slane %v986, 5
      %v1277 = vsel %vm1224, %v1275, %v1276
      %v1278 = vrot.slane %v1276, 4
      %v1279 = vrot.slane %v994, 5
      %v1280 = vsel %vm1224, %v1278, %v1279
      %v1281 = vld [vmem:[%s790] sm:$0xf]
      %v1282 = vld [vmem:[%s790 + $0x4] sm:$0xf]
      %v1283 = vld [vmem:[%s790 + $0xc] sm:$0xf]
      %v1284 = vld [vmem:[%s790 + $0x10] sm:$0xf]
      %v1285 = vld [vmem:[%s790 + $0x18] sm:$0xf]
      %v1286 = vld [vmem:[%s790 + $0x1c] sm:$0xf]
      %v1287 = vld [vmem:[%s790 + $0x24] sm:$0xf]
      %v1288 = vld [vmem:[%s790 + $0x28] sm:$0xf]
      %v1289 = vld [vmem:[%s790 + $0x30] sm:$0xf]
      %v1290 = vld [vmem:[%s790 + $0x34] sm:$0xf]
      %v1291 = vld [vmem:[%s790 + $0x3c] sm:$0xf]
      %v1292 = vld [vmem:[%s790 + $0x40] sm:$0xf]
      %v1293 = vld [vmem:[%s790 + $0x48] sm:$0xf]
      %v1294 = vld [vmem:[%s790 + $0x4c] sm:$0xf]
      %v1295 = vld [vmem:[%s790 + $0x54] sm:$0xf]
      %v1296 = vld [vmem:[%s790 + $0x58] sm:$0xf]
      %v1297 = vld [vmem:[%s790 + $0x8] sm:$0x1]
      %v1298 = vld [vmem:[%s790 + $0x14] sm:$0x1]
      %v1299 = vld [vmem:[%s790 + $0x20] sm:$0x1]
      %v1300 = vld [vmem:[%s790 + $0x2c] sm:$0x1]
      %v1301 = vld [vmem:[%s790 + $0x38] sm:$0x1]
      %v1302 = vld [vmem:[%s790 + $0x44] sm:$0x1]
      %v1303 = vld [vmem:[%s790 + $0x50] sm:$0x1]
      %v1304 = vld [vmem:[%s790 + $0x5c] sm:$0x1]
      %v1306 = vshrl.u32 %v1281, 16
      %v1308 = vrot.slane %v1306, 4
      %v1309 = vshll.u32 %v1281, 16
      %v1311 = vrot.slane %v1309, 5
      %v1312 = vor.u32 %v1308, %v1311
      %v1313 = vrot.slane %v1312, 4
      %v1315 = vshll.u32 %v1282, 16
      %v1317 = vrot.slane %v1315, 5
      %v1318 = vsel %vm997, %v1313, %v1317
      %v1319 = vshrl.u32 %v1282, 16
      %v1321 = vrot.slane %v1319, 4
      %v1322 = vor.u32 %v1321, %v1317
      %v1323 = vrot.slane %v1322, 4
      %v1325 = vshll.u32 %v1297, 16
      %v1327 = vrot.slane %v1325, 5
      %v1328 = vsel %vm997, %v1323, %v1327
      %v1330 = vshrl.u32 %v1283, 16
      %v1332 = vrot.slane %v1330, 4
      %v1333 = vshll.u32 %v1283, 16
      %v1335 = vrot.slane %v1333, 5
      %v1336 = vor.u32 %v1332, %v1335
      %v1337 = vrot.slane %v1336, 4
      %v1339 = vshll.u32 %v1284, 16
      %v1341 = vrot.slane %v1339, 5
      %v1342 = vsel %vm997, %v1337, %v1341
      %v1343 = vshrl.u32 %v1284, 16
      %v1345 = vrot.slane %v1343, 4
      %v1346 = vor.u32 %v1345, %v1341
      %v1347 = vrot.slane %v1346, 4
      %v1349 = vshll.u32 %v1298, 16
      %v1351 = vrot.slane %v1349, 5
      %v1352 = vsel %vm997, %v1347, %v1351
      %v1354 = vshrl.u32 %v1285, 16
      %v1356 = vrot.slane %v1354, 4
      %v1357 = vshll.u32 %v1285, 16
      %v1359 = vrot.slane %v1357, 5
      %v1360 = vor.u32 %v1356, %v1359
      %v1361 = vrot.slane %v1360, 4
      %v1363 = vshll.u32 %v1286, 16
      %v1365 = vrot.slane %v1363, 5
      %v1366 = vsel %vm997, %v1361, %v1365
      %v1367 = vshrl.u32 %v1286, 16
      %v1369 = vrot.slane %v1367, 4
      %v1370 = vor.u32 %v1369, %v1365
      %v1371 = vrot.slane %v1370, 4
      %v1373 = vshll.u32 %v1299, 16
      %v1375 = vrot.slane %v1373, 5
      %v1376 = vsel %vm997, %v1371, %v1375
      %v1378 = vshrl.u32 %v1287, 16
      %v1380 = vrot.slane %v1378, 4
      %v1381 = vshll.u32 %v1287, 16
      %v1383 = vrot.slane %v1381, 5
      %v1384 = vor.u32 %v1380, %v1383
      %v1385 = vrot.slane %v1384, 4
      %v1387 = vshll.u32 %v1288, 16
      %v1389 = vrot.slane %v1387, 5
      %v1390 = vsel %vm997, %v1385, %v1389
      %v1391 = vshrl.u32 %v1288, 16
      %v1393 = vrot.slane %v1391, 4
      %v1394 = vor.u32 %v1393, %v1389
      %v1395 = vrot.slane %v1394, 4
      %v1397 = vshll.u32 %v1300, 16
      %v1399 = vrot.slane %v1397, 5
      %v1400 = vsel %vm997, %v1395, %v1399
      %v1402 = vshrl.u32 %v1289, 16
      %v1404 = vrot.slane %v1402, 4
      %v1405 = vshll.u32 %v1289, 16
      %v1407 = vrot.slane %v1405, 5
      %v1408 = vor.u32 %v1404, %v1407
      %v1409 = vrot.slane %v1408, 4
      %v1411 = vshll.u32 %v1290, 16
      %v1413 = vrot.slane %v1411, 5
      %v1414 = vsel %vm997, %v1409, %v1413
      %v1415 = vshrl.u32 %v1290, 16
      %v1417 = vrot.slane %v1415, 4
      %v1418 = vor.u32 %v1417, %v1413
      %v1419 = vrot.slane %v1418, 4
      %v1421 = vshll.u32 %v1301, 16
      %v1423 = vrot.slane %v1421, 5
      %v1424 = vsel %vm997, %v1419, %v1423
      %v1426 = vshrl.u32 %v1291, 16
      %v1428 = vrot.slane %v1426, 4
      %v1429 = vshll.u32 %v1291, 16
      %v1431 = vrot.slane %v1429, 5
      %v1432 = vor.u32 %v1428, %v1431
      %v1433 = vrot.slane %v1432, 4
      %v1435 = vshll.u32 %v1292, 16
      %v1437 = vrot.slane %v1435, 5
      %v1438 = vsel %vm997, %v1433, %v1437
      %v1439 = vshrl.u32 %v1292, 16
      %v1441 = vrot.slane %v1439, 4
      %v1442 = vor.u32 %v1441, %v1437
      %v1443 = vrot.slane %v1442, 4
      %v1445 = vshll.u32 %v1302, 16
      %v1447 = vrot.slane %v1445, 5
      %v1448 = vsel %vm997, %v1443, %v1447
      %v1450 = vshrl.u32 %v1293, 16
      %v1452 = vrot.slane %v1450, 4
      %v1453 = vshll.u32 %v1293, 16
      %v1455 = vrot.slane %v1453, 5
      %v1456 = vor.u32 %v1452, %v1455
      %v1457 = vrot.slane %v1456, 4
      %v1459 = vshll.u32 %v1294, 16
      %v1461 = vrot.slane %v1459, 5
      %v1462 = vsel %vm997, %v1457, %v1461
      %v1463 = vshrl.u32 %v1294, 16
      %v1465 = vrot.slane %v1463, 4
      %v1466 = vor.u32 %v1465, %v1461
      %v1467 = vrot.slane %v1466, 4
      %v1469 = vshll.u32 %v1303, 16
      %v1471 = vrot.slane %v1469, 5
      %v1472 = vsel %vm997, %v1467, %v1471
      %v1474 = vshrl.u32 %v1295, 16
      %v1476 = vrot.slane %v1474, 4
      %v1477 = vshll.u32 %v1295, 16
      %v1479 = vrot.slane %v1477, 5
      %v1480 = vor.u32 %v1476, %v1479
      %v1481 = vrot.slane %v1480, 4
      %v1483 = vshll.u32 %v1296, 16
      %v1485 = vrot.slane %v1483, 5
      %v1486 = vsel %vm997, %v1481, %v1485
      %v1487 = vshrl.u32 %v1296, 16
      %v1489 = vrot.slane %v1487, 4
      %v1490 = vor.u32 %v1489, %v1485
      %v1491 = vrot.slane %v1490, 4
      %v1493 = vshll.u32 %v1304, 16
      %v1495 = vrot.slane %v1493, 5
      %v1496 = vsel %vm997, %v1491, %v1495
      %v1497 = vld [vmem:[%s790] sm:$0xe]
      %v1498 = vld [vmem:[%s790 + $0xc] sm:$0xe]
      %v1499 = vld [vmem:[%s790 + $0x18] sm:$0xe]
      %v1500 = vld [vmem:[%s790 + $0x24] sm:$0xe]
      %v1501 = vld [vmem:[%s790 + $0x30] sm:$0xe]
      %v1502 = vld [vmem:[%s790 + $0x3c] sm:$0xe]
      %v1503 = vld [vmem:[%s790 + $0x48] sm:$0xe]
      %v1504 = vld [vmem:[%s790 + $0x54] sm:$0xe]
      %v1529 = vrot.slane %v1497, 5
      %v1530 = vrot.slane %v1529, 4
      %v1531 = vrot.slane %v1282, 5
      %v1532 = vsel %vm1224, %v1530, %v1531
      %v1533 = vrot.slane %v1531, 4
      %v1534 = vrot.slane %v1297, 5
      %v1535 = vsel %vm1224, %v1533, %v1534
      %v1536 = vrot.slane %v1498, 5
      %v1537 = vrot.slane %v1536, 4
      %v1538 = vrot.slane %v1284, 5
      %v1539 = vsel %vm1224, %v1537, %v1538
      %v1540 = vrot.slane %v1538, 4
      %v1541 = vrot.slane %v1298, 5
      %v1542 = vsel %vm1224, %v1540, %v1541
      %v1543 = vrot.slane %v1499, 5
      %v1544 = vrot.slane %v1543, 4
      %v1545 = vrot.slane %v1286, 5
      %v1546 = vsel %vm1224, %v1544, %v1545
      %v1547 = vrot.slane %v1545, 4
      %v1548 = vrot.slane %v1299, 5
      %v1549 = vsel %vm1224, %v1547, %v1548
      %v1550 = vrot.slane %v1500, 5
      %v1551 = vrot.slane %v1550, 4
      %v1552 = vrot.slane %v1288, 5
      %v1553 = vsel %vm1224, %v1551, %v1552
      %v1554 = vrot.slane %v1552, 4
      %v1555 = vrot.slane %v1300, 5
      %v1556 = vsel %vm1224, %v1554, %v1555
      %v1557 = vrot.slane %v1501, 5
      %v1558 = vrot.slane %v1557, 4
      %v1559 = vrot.slane %v1290, 5
      %v1560 = vsel %vm1224, %v1558, %v1559
      %v1561 = vrot.slane %v1559, 4
      %v1562 = vrot.slane %v1301, 5
      %v1563 = vsel %vm1224, %v1561, %v1562
      %v1564 = vrot.slane %v1502, 5
      %v1565 = vrot.slane %v1564, 4
      %v1566 = vrot.slane %v1292, 5
      %v1567 = vsel %vm1224, %v1565, %v1566
      %v1568 = vrot.slane %v1566, 4
      %v1569 = vrot.slane %v1302, 5
      %v1570 = vsel %vm1224, %v1568, %v1569
      %v1571 = vrot.slane %v1503, 5
      %v1572 = vrot.slane %v1571, 4
      %v1573 = vrot.slane %v1294, 5
      %v1574 = vsel %vm1224, %v1572, %v1573
      %v1575 = vrot.slane %v1573, 4
      %v1576 = vrot.slane %v1303, 5
      %v1577 = vsel %vm1224, %v1575, %v1576
      %v1578 = vrot.slane %v1504, 5
      %v1579 = vrot.slane %v1578, 4
      %v1580 = vrot.slane %v1296, 5
      %v1581 = vsel %vm1224, %v1579, %v1580
      %v1582 = vrot.slane %v1580, 4
      %v1583 = vrot.slane %v1304, 5
      %v1584 = vsel %vm1224, %v1582, %v1583
      %s1585 = scalar_lea.vmem [#allocation2], 24
      %v1586 = vld [vmem:[%s1585] sm:$0xf]
      %v1587 = vld [vmem:[%s1585 + $0x4] sm:$0xf]
      %v1588 = vld [vmem:[%s1585 + $0xc] sm:$0xf]
      %v1589 = vld [vmem:[%s1585 + $0x10] sm:$0xf]
      %v1590 = vld [vmem:[%s1585 + $0x18] sm:$0xf]
      %v1591 = vld [vmem:[%s1585 + $0x1c] sm:$0xf]
      %v1592 = vld [vmem:[%s1585 + $0x24] sm:$0xf]
      %v1593 = vld [vmem:[%s1585 + $0x28] sm:$0xf]
      %v1594 = vld [vmem:[%s1585 + $0x30] sm:$0xf]
      %v1595 = vld [vmem:[%s1585 + $0x34] sm:$0xf]
      %v1596 = vld [vmem:[%s1585 + $0x3c] sm:$0xf]
      %v1597 = vld [vmem:[%s1585 + $0x40] sm:$0xf]
      %v1598 = vld [vmem:[%s1585 + $0x48] sm:$0xf]
      %v1599 = vld [vmem:[%s1585 + $0x4c] sm:$0xf]
      %v1600 = vld [vmem:[%s1585 + $0x54] sm:$0xf]
      %v1601 = vld [vmem:[%s1585 + $0x58] sm:$0xf]
      %v1602 = vld [vmem:[%s1585 + $0x8] sm:$0x1]
      %v1603 = vld [vmem:[%s1585 + $0x14] sm:$0x1]
      %v1604 = vld [vmem:[%s1585 + $0x20] sm:$0x1]
      %v1605 = vld [vmem:[%s1585 + $0x2c] sm:$0x1]
      %v1606 = vld [vmem:[%s1585 + $0x38] sm:$0x1]
      %v1607 = vld [vmem:[%s1585 + $0x44] sm:$0x1]
      %v1608 = vld [vmem:[%s1585 + $0x50] sm:$0x1]
      %v1609 = vld [vmem:[%s1585 + $0x5c] sm:$0x1]
      %v1611 = vshrl.u32 %v1586, 16
      %v1613 = vrot.slane %v1611, 4
      %v1614 = vshll.u32 %v1586, 16
      %v1616 = vrot.slane %v1614, 5
      %v1617 = vor.u32 %v1613, %v1616
      %v1618 = vrot.slane %v1617, 4
      %v1620 = vshll.u32 %v1587, 16
      %v1622 = vrot.slane %v1620, 5
      %v1623 = vsel %vm997, %v1618, %v1622
      %v1624 = vshrl.u32 %v1587, 16
      %v1626 = vrot.slane %v1624, 4
      %v1627 = vor.u32 %v1626, %v1622
      %v1628 = vrot.slane %v1627, 4
      %v1630 = vshll.u32 %v1602, 16
      %v1632 = vrot.slane %v1630, 5
      %v1633 = vsel %vm997, %v1628, %v1632
      %v1635 = vshrl.u32 %v1588, 16
      %v1637 = vrot.slane %v1635, 4
      %v1638 = vshll.u32 %v1588, 16
      %v1640 = vrot.slane %v1638, 5
      %v1641 = vor.u32 %v1637, %v1640
      %v1642 = vrot.slane %v1641, 4
      %v1644 = vshll.u32 %v1589, 16
      %v1646 = vrot.slane %v1644, 5
      %v1647 = vsel %vm997, %v1642, %v1646
      %v1648 = vshrl.u32 %v1589, 16
      %v1650 = vrot.slane %v1648, 4
      %v1651 = vor.u32 %v1650, %v1646
      %v1652 = vrot.slane %v1651, 4
      %v1654 = vshll.u32 %v1603, 16
      %v1656 = vrot.slane %v1654, 5
      %v1657 = vsel %vm997, %v1652, %v1656
      %v1659 = vshrl.u32 %v1590, 16
      %v1661 = vrot.slane %v1659, 4
      %v1662 = vshll.u32 %v1590, 16
      %v1664 = vrot.slane %v1662, 5
      %v1665 = vor.u32 %v1661, %v1664
      %v1666 = vrot.slane %v1665, 4
      %v1668 = vshll.u32 %v1591, 16
      %v1670 = vrot.slane %v1668, 5
      %v1671 = vsel %vm997, %v1666, %v1670
      %v1672 = vshrl.u32 %v1591, 16
      %v1674 = vrot.slane %v1672, 4
      %v1675 = vor.u32 %v1674, %v1670
      %v1676 = vrot.slane %v1675, 4
      %v1678 = vshll.u32 %v1604, 16
      %v1680 = vrot.slane %v1678, 5
      %v1681 = vsel %vm997, %v1676, %v1680
      %v1683 = vshrl.u32 %v1592, 16
      %v1685 = vrot.slane %v1683, 4
      %v1686 = vshll.u32 %v1592, 16
      %v1688 = vrot.slane %v1686, 5
      %v1689 = vor.u32 %v1685, %v1688
      %v1690 = vrot.slane %v1689, 4
      %v1692 = vshll.u32 %v1593, 16
      %v1694 = vrot.slane %v1692, 5
      %v1695 = vsel %vm997, %v1690, %v1694
      %v1696 = vshrl.u32 %v1593, 16
      %v1698 = vrot.slane %v1696, 4
      %v1699 = vor.u32 %v1698, %v1694
      %v1700 = vrot.slane %v1699, 4
      %v1702 = vshll.u32 %v1605, 16
      %v1704 = vrot.slane %v1702, 5
      %v1705 = vsel %vm997, %v1700, %v1704
      %v1707 = vshrl.u32 %v1594, 16
      %v1709 = vrot.slane %v1707, 4
      %v1710 = vshll.u32 %v1594, 16
      %v1712 = vrot.slane %v1710, 5
      %v1713 = vor.u32 %v1709, %v1712
      %v1714 = vrot.slane %v1713, 4
      %v1716 = vshll.u32 %v1595, 16
      %v1718 = vrot.slane %v1716, 5
      %v1719 = vsel %vm997, %v1714, %v1718
      %v1720 = vshrl.u32 %v1595, 16
      %v1722 = vrot.slane %v1720, 4
      %v1723 = vor.u32 %v1722, %v1718
      %v1724 = vrot.slane %v1723, 4
      %v1726 = vshll.u32 %v1606, 16
      %v1728 = vrot.slane %v1726, 5
      %v1729 = vsel %vm997, %v1724, %v1728
      %v1731 = vshrl.u32 %v1596, 16
      %v1733 = vrot.slane %v1731, 4
      %v1734 = vshll.u32 %v1596, 16
      %v1736 = vrot.slane %v1734, 5
      %v1737 = vor.u32 %v1733, %v1736
      %v1738 = vrot.slane %v1737, 4
      %v1740 = vshll.u32 %v1597, 16
      %v1742 = vrot.slane %v1740, 5
      %v1743 = vsel %vm997, %v1738, %v1742
      %v1744 = vshrl.u32 %v1597, 16
      %v1746 = vrot.slane %v1744, 4
      %v1747 = vor.u32 %v1746, %v1742
      %v1748 = vrot.slane %v1747, 4
      %v1750 = vshll.u32 %v1607, 16
      %v1752 = vrot.slane %v1750, 5
      %v1753 = vsel %vm997, %v1748, %v1752
      %v1755 = vshrl.u32 %v1598, 16
      %v1757 = vrot.slane %v1755, 4
      %v1758 = vshll.u32 %v1598, 16
      %v1760 = vrot.slane %v1758, 5
      %v1761 = vor.u32 %v1757, %v1760
      %v1762 = vrot.slane %v1761, 4
      %v1764 = vshll.u32 %v1599, 16
      %v1766 = vrot.slane %v1764, 5
      %v1767 = vsel %vm997, %v1762, %v1766
      %v1768 = vshrl.u32 %v1599, 16
      %v1770 = vrot.slane %v1768, 4
      %v1771 = vor.u32 %v1770, %v1766
      %v1772 = vrot.slane %v1771, 4
      %v1774 = vshll.u32 %v1608, 16
      %v1776 = vrot.slane %v1774, 5
      %v1777 = vsel %vm997, %v1772, %v1776
      %v1779 = vshrl.u32 %v1600, 16
      %v1781 = vrot.slane %v1779, 4
      %v1782 = vshll.u32 %v1600, 16
      %v1784 = vrot.slane %v1782, 5
      %v1785 = vor.u32 %v1781, %v1784
      %v1786 = vrot.slane %v1785, 4
      %v1788 = vshll.u32 %v1601, 16
      %v1790 = vrot.slane %v1788, 5
      %v1791 = vsel %vm997, %v1786, %v1790
      %v1792 = vshrl.u32 %v1601, 16
      %v1794 = vrot.slane %v1792, 4
      %v1795 = vor.u32 %v1794, %v1790
      %v1796 = vrot.slane %v1795, 4
      %v1798 = vshll.u32 %v1609, 16
      %v1800 = vrot.slane %v1798, 5
      %v1801 = vsel %vm997, %v1796, %v1800
      %v1802 = vld [vmem:[%s1585] sm:$0xe]
      %v1803 = vld [vmem:[%s1585 + $0xc] sm:$0xe]
      %v1804 = vld [vmem:[%s1585 + $0x18] sm:$0xe]
      %v1805 = vld [vmem:[%s1585 + $0x24] sm:$0xe]
      %v1806 = vld [vmem:[%s1585 + $0x30] sm:$0xe]
      %v1807 = vld [vmem:[%s1585 + $0x3c] sm:$0xe]
      %v1808 = vld [vmem:[%s1585 + $0x48] sm:$0xe]
      %v1809 = vld [vmem:[%s1585 + $0x54] sm:$0xe]
      %v1834 = vrot.slane %v1802, 5
      %v1835 = vrot.slane %v1834, 4
      %v1836 = vrot.slane %v1587, 5
      %v1837 = vsel %vm1224, %v1835, %v1836
      %v1838 = vrot.slane %v1836, 4
      %v1839 = vrot.slane %v1602, 5
      %v1840 = vsel %vm1224, %v1838, %v1839
      %v1841 = vrot.slane %v1803, 5
      %v1842 = vrot.slane %v1841, 4
      %v1843 = vrot.slane %v1589, 5
      %v1844 = vsel %vm1224, %v1842, %v1843
      %v1845 = vrot.slane %v1843, 4
      %v1846 = vrot.slane %v1603, 5
      %v1847 = vsel %vm1224, %v1845, %v1846
      %v1848 = vrot.slane %v1804, 5
      %v1849 = vrot.slane %v1848, 4
      %v1850 = vrot.slane %v1591, 5
      %v1851 = vsel %vm1224, %v1849, %v1850
      %v1852 = vrot.slane %v1850, 4
      %v1853 = vrot.slane %v1604, 5
      %v1854 = vsel %vm1224, %v1852, %v1853
      %v1855 = vrot.slane %v1805, 5
      %v1856 = vrot.slane %v1855, 4
      %v1857 = vrot.slane %v1593, 5
      %v1858 = vsel %vm1224, %v1856, %v1857
      %v1859 = vrot.slane %v1857, 4
      %v1860 = vrot.slane %v1605, 5
      %v1861 = vsel %vm1224, %v1859, %v1860
      %v1862 = vrot.slane %v1806, 5
      %v1863 = vrot.slane %v1862, 4
      %v1864 = vrot.slane %v1595, 5
      %v1865 = vsel %vm1224, %v1863, %v1864
      %v1866 = vrot.slane %v1864, 4
      %v1867 = vrot.slane %v1606, 5
      %v1868 = vsel %vm1224, %v1866, %v1867
      %v1869 = vrot.slane %v1807, 5
      %v1870 = vrot.slane %v1869, 4
      %v1871 = vrot.slane %v1597, 5
      %v1872 = vsel %vm1224, %v1870, %v1871
      %v1873 = vrot.slane %v1871, 4
      %v1874 = vrot.slane %v1607, 5
      %v1875 = vsel %vm1224, %v1873, %v1874
      %v1876 = vrot.slane %v1808, 5
      %v1877 = vrot.slane %v1876, 4
      %v1878 = vrot.slane %v1599, 5
      %v1879 = vsel %vm1224, %v1877, %v1878
      %v1880 = vrot.slane %v1878, 4
      %v1881 = vrot.slane %v1608, 5
      %v1882 = vsel %vm1224, %v1880, %v1881
      %v1883 = vrot.slane %v1809, 5
      %v1884 = vrot.slane %v1883, 4
      %v1885 = vrot.slane %v1601, 5
      %v1886 = vsel %vm1224, %v1884, %v1885
      %v1887 = vrot.slane %v1885, 4
      %v1888 = vrot.slane %v1609, 5
      %v1889 = vsel %vm1224, %v1887, %v1888
      %v1898 = vunpack.c.l.b16 %v971
      %v1899 = vunpack.c.l.b16 %v972
      %v1900 = vunpack.c.l.b16 %v973
      %v1901 = vunpack.c.l.b16 %v974
      %v1902 = vunpack.c.l.b16 %v975
      %v1903 = vunpack.c.l.b16 %v976
      %v1904 = vunpack.c.l.b16 %v977
      %v1905 = vunpack.c.l.b16 %v978
      %v1906 = vunpack.c.l.b16 %v979
      %v1907 = vunpack.c.l.b16 %v980
      %v1908 = vunpack.c.l.b16 %v981
      %v1909 = vunpack.c.l.b16 %v982
      %v1910 = vunpack.c.l.b16 %v983
      %v1911 = vunpack.c.l.b16 %v984
      %v1912 = vunpack.c.l.b16 %v985
      %v1913 = vunpack.c.l.b16 %v986
      %v1914 = vpack.c.b16 %v1899, %v1898
      %v1915 = vpack.c.b16 %v1901, %v1900
      %v1916 = vpack.c.b16 %v1903, %v1902
      %v1917 = vpack.c.b16 %v1905, %v1904
      %v1918 = vpack.c.b16 %v1907, %v1906
      %v1919 = vpack.c.b16 %v1909, %v1908
      %v1920 = vpack.c.b16 %v1911, %v1910
      %v1921 = vpack.c.b16 %v1913, %v1912
      %v1922 = vunpack.c.l.b16 %v1011
      %v1923 = vunpack.c.l.b16 %v1021
      %v1924 = vunpack.c.l.b16 %v1035
      %v1925 = vunpack.c.l.b16 %v1045
      %v1926 = vunpack.c.l.b16 %v1059
      %v1927 = vunpack.c.l.b16 %v1069
      %v1928 = vunpack.c.l.b16 %v1083
      %v1929 = vunpack.c.l.b16 %v1093
      %v1930 = vunpack.c.l.b16 %v1107
      %v1931 = vunpack.c.l.b16 %v1117
      %v1932 = vunpack.c.l.b16 %v1131
      %v1933 = vunpack.c.l.b16 %v1141
      %v1934 = vunpack.c.l.b16 %v1155
      %v1935 = vunpack.c.l.b16 %v1165
      %v1936 = vunpack.c.l.b16 %v1179
      %v1937 = vunpack.c.l.b16 %v1189
      %v1938 = vpack.c.b16 %v1923, %v1922
      %v1939 = vpack.c.b16 %v1925, %v1924
      %v1940 = vpack.c.b16 %v1927, %v1926
      %v1941 = vpack.c.b16 %v1929, %v1928
      %v1942 = vpack.c.b16 %v1931, %v1930
      %v1943 = vpack.c.b16 %v1933, %v1932
      %v1944 = vpack.c.b16 %v1935, %v1934
      %v1945 = vpack.c.b16 %v1937, %v1936
      %1946 = vrot.lane.b32.xlu0 %v1938, 8
      %v1947 = vpop.permute.xlu0 %1946
      %1948 = vrot.lane.b32.xlu0 %v1939, 8
      %v1949 = vpop.permute.xlu0 %1948
      %1950 = vrot.lane.b32.xlu0 %v1940, 8
      %v1951 = vpop.permute.xlu0 %1950
      %1952 = vrot.lane.b32.xlu0 %v1941, 8
      %v1953 = vpop.permute.xlu0 %1952
      %1954 = vrot.lane.b32.xlu0 %v1942, 8
      %v1955 = vpop.permute.xlu0 %1954
      %1956 = vrot.lane.b32.xlu0 %v1943, 8
      %v1957 = vpop.permute.xlu0 %1956
      %1958 = vrot.lane.b32.xlu0 %v1944, 8
      %v1959 = vpop.permute.xlu0 %1958
      %1960 = vrot.lane.b32.xlu0 %v1945, 8
      %v1961 = vpop.permute.xlu0 %1960
      %v1962 = vunpack.c.l.b16 %v1228
      %v1963 = vunpack.c.l.b16 %v1231
      %v1964 = vunpack.c.l.b16 %v1235
      %v1965 = vunpack.c.l.b16 %v1238
      %v1966 = vunpack.c.l.b16 %v1242
      %v1967 = vunpack.c.l.b16 %v1245
      %v1968 = vunpack.c.l.b16 %v1249
      %v1969 = vunpack.c.l.b16 %v1252
      %v1970 = vunpack.c.l.b16 %v1256
      %v1971 = vunpack.c.l.b16 %v1259
      %v1972 = vunpack.c.l.b16 %v1263
      %v1973 = vunpack.c.l.b16 %v1266
      %v1974 = vunpack.c.l.b16 %v1270
      %v1975 = vunpack.c.l.b16 %v1273
      %v1976 = vunpack.c.l.b16 %v1277
      %v1977 = vunpack.c.l.b16 %v1280
      %v1978 = vpack.c.b16 %v1963, %v1962
      %v1979 = vpack.c.b16 %v1965, %v1964
      %v1980 = vpack.c.b16 %v1967, %v1966
      %v1981 = vpack.c.b16 %v1969, %v1968
      %v1982 = vpack.c.b16 %v1971, %v1970
      %v1983 = vpack.c.b16 %v1973, %v1972
      %v1984 = vpack.c.b16 %v1975, %v1974
      %v1985 = vpack.c.b16 %v1977, %v1976
      %1986 = vrot.lane.b32.xlu0 %v1978, 16
      %v1987 = vpop.permute.xlu0 %1986
      %1988 = vrot.lane.b32.xlu0 %v1979, 16
      %v1989 = vpop.permute.xlu0 %1988
      %1990 = vrot.lane.b32.xlu0 %v1980, 16
      %v1991 = vpop.permute.xlu0 %1990
      %1992 = vrot.lane.b32.xlu0 %v1981, 16
      %v1993 = vpop.permute.xlu0 %1992
      %1994 = vrot.lane.b32.xlu0 %v1982, 16
      %v1995 = vpop.permute.xlu0 %1994
      %1996 = vrot.lane.b32.xlu0 %v1983, 16
      %v1997 = vpop.permute.xlu0 %1996
      %1998 = vrot.lane.b32.xlu0 %v1984, 16
      %v1999 = vpop.permute.xlu0 %1998
      %2000 = vrot.lane.b32.xlu0 %v1985, 16
      %v2001 = vpop.permute.xlu0 %2000
      %v2010 = vunpack.c.l.b16 %v1281
      %v2011 = vunpack.c.l.b16 %v1282
      %v2012 = vunpack.c.l.b16 %v1283
      %v2013 = vunpack.c.l.b16 %v1284
      %v2014 = vunpack.c.l.b16 %v1285
      %v2015 = vunpack.c.l.b16 %v1286
      %v2016 = vunpack.c.l.b16 %v1287
      %v2017 = vunpack.c.l.b16 %v1288
      %v2018 = vunpack.c.l.b16 %v1289
      %v2019 = vunpack.c.l.b16 %v1290
      %v2020 = vunpack.c.l.b16 %v1291
      %v2021 = vunpack.c.l.b16 %v1292
      %v2022 = vunpack.c.l.b16 %v1293
      %v2023 = vunpack.c.l.b16 %v1294
      %v2024 = vunpack.c.l.b16 %v1295
      %v2025 = vunpack.c.l.b16 %v1296
      %v2026 = vpack.c.b16 %v2011, %v2010
      %v2027 = vpack.c.b16 %v2013, %v2012
      %v2028 = vpack.c.b16 %v2015, %v2014
      %v2029 = vpack.c.b16 %v2017, %v2016
      %v2030 = vpack.c.b16 %v2019, %v2018
      %v2031 = vpack.c.b16 %v2021, %v2020
      %v2032 = vpack.c.b16 %v2023, %v2022
      %v2033 = vpack.c.b16 %v2025, %v2024
      %2034 = vrot.lane.b32.xlu0 %v2026, 24
      %v2035 = vpop.permute.xlu0 %2034
      %2036 = vrot.lane.b32.xlu0 %v2027, 24
      %v2037 = vpop.permute.xlu0 %2036
      %2038 = vrot.lane.b32.xlu0 %v2028, 24
      %v2039 = vpop.permute.xlu0 %2038
      %2040 = vrot.lane.b32.xlu0 %v2029, 24
      %v2041 = vpop.permute.xlu0 %2040
      %2042 = vrot.lane.b32.xlu0 %v2030, 24
      %v2043 = vpop.permute.xlu0 %2042
      %2044 = vrot.lane.b32.xlu0 %v2031, 24
      %v2045 = vpop.permute.xlu0 %2044
      %2046 = vrot.lane.b32.xlu0 %v2032, 24
      %v2047 = vpop.permute.xlu0 %2046
      %2048 = vrot.lane.b32.xlu0 %v2033, 24
      %v2049 = vpop.permute.xlu0 %2048
      %v2050 = vunpack.c.l.b16 %v1318
      %v2051 = vunpack.c.l.b16 %v1328
      %v2052 = vunpack.c.l.b16 %v1342
      %v2053 = vunpack.c.l.b16 %v1352
      %v2054 = vunpack.c.l.b16 %v1366
      %v2055 = vunpack.c.l.b16 %v1376
      %v2056 = vunpack.c.l.b16 %v1390
      %v2057 = vunpack.c.l.b16 %v1400
      %v2058 = vunpack.c.l.b16 %v1414
      %v2059 = vunpack.c.l.b16 %v1424
      %v2060 = vunpack.c.l.b16 %v1438
      %v2061 = vunpack.c.l.b16 %v1448
      %v2062 = vunpack.c.l.b16 %v1462
      %v2063 = vunpack.c.l.b16 %v1472
      %v2064 = vunpack.c.l.b16 %v1486
      %v2065 = vunpack.c.l.b16 %v1496
      %v2066 = vpack.c.b16 %v2051, %v2050
      %v2067 = vpack.c.b16 %v2053, %v2052
      %v2068 = vpack.c.b16 %v2055, %v2054
      %v2069 = vpack.c.b16 %v2057, %v2056
      %v2070 = vpack.c.b16 %v2059, %v2058
      %v2071 = vpack.c.b16 %v2061, %v2060
      %v2072 = vpack.c.b16 %v2063, %v2062
      %v2073 = vpack.c.b16 %v2065, %v2064
      %2074 = vrot.lane.b32.xlu0 %v2066, 32
      %v2075 = vpop.permute.xlu0 %2074
      %2076 = vrot.lane.b32.xlu0 %v2067, 32
      %v2077 = vpop.permute.xlu0 %2076
      %2078 = vrot.lane.b32.xlu0 %v2068, 32
      %v2079 = vpop.permute.xlu0 %2078
      %2080 = vrot.lane.b32.xlu0 %v2069, 32
      %v2081 = vpop.permute.xlu0 %2080
      %2082 = vrot.lane.b32.xlu0 %v2070, 32
      %v2083 = vpop.permute.xlu0 %2082
      %2084 = vrot.lane.b32.xlu0 %v2071, 32
      %v2085 = vpop.permute.xlu0 %2084
      %2086 = vrot.lane.b32.xlu0 %v2072, 32
      %v2087 = vpop.permute.xlu0 %2086
      %2088 = vrot.lane.b32.xlu0 %v2073, 32
      %v2089 = vpop.permute.xlu0 %2088
      %v2090 = vunpack.c.l.b16 %v1532
      %v2091 = vunpack.c.l.b16 %v1535
      %v2092 = vunpack.c.l.b16 %v1539
      %v2093 = vunpack.c.l.b16 %v1542
      %v2094 = vunpack.c.l.b16 %v1546
      %v2095 = vunpack.c.l.b16 %v1549
      %v2096 = vunpack.c.l.b16 %v1553
      %v2097 = vunpack.c.l.b16 %v1556
      %v2098 = vunpack.c.l.b16 %v1560
      %v2099 = vunpack.c.l.b16 %v1563
      %v2100 = vunpack.c.l.b16 %v1567
      %v2101 = vunpack.c.l.b16 %v1570
      %v2102 = vunpack.c.l.b16 %v1574
      %v2103 = vunpack.c.l.b16 %v1577
      %v2104 = vunpack.c.l.b16 %v1581
      %v2105 = vunpack.c.l.b16 %v1584
      %v2106 = vpack.c.b16 %v2091, %v2090
      %v2107 = vpack.c.b16 %v2093, %v2092
      %v2108 = vpack.c.b16 %v2095, %v2094
      %v2109 = vpack.c.b16 %v2097, %v2096
      %v2110 = vpack.c.b16 %v2099, %v2098
      %v2111 = vpack.c.b16 %v2101, %v2100
      %v2112 = vpack.c.b16 %v2103, %v2102
      %v2113 = vpack.c.b16 %v2105, %v2104
      %2114 = vrot.lane.b32.xlu0 %v2106, 40
      %v2115 = vpop.permute.xlu0 %2114
      %2116 = vrot.lane.b32.xlu0 %v2107, 40
      %v2117 = vpop.permute.xlu0 %2116
      %2118 = vrot.lane.b32.xlu0 %v2108, 40
      %v2119 = vpop.permute.xlu0 %2118
      %2120 = vrot.lane.b32.xlu0 %v2109, 40
      %v2121 = vpop.permute.xlu0 %2120
      %2122 = vrot.lane.b32.xlu0 %v2110, 40
      %v2123 = vpop.permute.xlu0 %2122
      %2124 = vrot.lane.b32.xlu0 %v2111, 40
      %v2125 = vpop.permute.xlu0 %2124
      %2126 = vrot.lane.b32.xlu0 %v2112, 40
      %v2127 = vpop.permute.xlu0 %2126
      %2128 = vrot.lane.b32.xlu0 %v2113, 40
      %v2129 = vpop.permute.xlu0 %2128
      %v2138 = vunpack.c.l.b16 %v1586
      %v2139 = vunpack.c.l.b16 %v1587
      %v2140 = vunpack.c.l.b16 %v1588
      %v2141 = vunpack.c.l.b16 %v1589
      %v2142 = vunpack.c.l.b16 %v1590
      %v2143 = vunpack.c.l.b16 %v1591
      %v2144 = vunpack.c.l.b16 %v1592
      %v2145 = vunpack.c.l.b16 %v1593
      %v2146 = vunpack.c.l.b16 %v1594
      %v2147 = vunpack.c.l.b16 %v1595
      %v2148 = vunpack.c.l.b16 %v1596
      %v2149 = vunpack.c.l.b16 %v1597
      %v2150 = vunpack.c.l.b16 %v1598
      %v2151 = vunpack.c.l.b16 %v1599
      %v2152 = vunpack.c.l.b16 %v1600
      %v2153 = vunpack.c.l.b16 %v1601
      %v2154 = vpack.c.b16 %v2139, %v2138
      %v2155 = vpack.c.b16 %v2141, %v2140
      %v2156 = vpack.c.b16 %v2143, %v2142
      %v2157 = vpack.c.b16 %v2145, %v2144
      %v2158 = vpack.c.b16 %v2147, %v2146
      %v2159 = vpack.c.b16 %v2149, %v2148
      %v2160 = vpack.c.b16 %v2151, %v2150
      %v2161 = vpack.c.b16 %v2153, %v2152
      %2162 = vrot.lane.b32.xlu0 %v2154, 48
      %v2163 = vpop.permute.xlu0 %2162
      %2164 = vrot.lane.b32.xlu0 %v2155, 48
      %v2165 = vpop.permute.xlu0 %2164
      %2166 = vrot.lane.b32.xlu0 %v2156, 48
      %v2167 = vpop.permute.xlu0 %2166
      %2168 = vrot.lane.b32.xlu0 %v2157, 48
      %v2169 = vpop.permute.xlu0 %2168
      %2170 = vrot.lane.b32.xlu0 %v2158, 48
      %v2171 = vpop.permute.xlu0 %2170
      %2172 = vrot.lane.b32.xlu0 %v2159, 48
      %v2173 = vpop.permute.xlu0 %2172
      %2174 = vrot.lane.b32.xlu0 %v2160, 48
      %v2175 = vpop.permute.xlu0 %2174
      %2176 = vrot.lane.b32.xlu0 %v2161, 48
      %v2177 = vpop.permute.xlu0 %2176
      %v2178 = vunpack.c.l.b16 %v1623
      %v2179 = vunpack.c.l.b16 %v1633
      %v2180 = vunpack.c.l.b16 %v1647
      %v2181 = vunpack.c.l.b16 %v1657
      %v2182 = vunpack.c.l.b16 %v1671
      %v2183 = vunpack.c.l.b16 %v1681
      %v2184 = vunpack.c.l.b16 %v1695
      %v2185 = vunpack.c.l.b16 %v1705
      %v2186 = vunpack.c.l.b16 %v1719
      %v2187 = vunpack.c.l.b16 %v1729
      %v2188 = vunpack.c.l.b16 %v1743
      %v2189 = vunpack.c.l.b16 %v1753
      %v2190 = vunpack.c.l.b16 %v1767
      %v2191 = vunpack.c.l.b16 %v1777
      %v2192 = vunpack.c.l.b16 %v1791
      %v2193 = vunpack.c.l.b16 %v1801
      %v2194 = vpack.c.b16 %v2179, %v2178
      %v2195 = vpack.c.b16 %v2181, %v2180
      %v2196 = vpack.c.b16 %v2183, %v2182
      %v2197 = vpack.c.b16 %v2185, %v2184
      %v2198 = vpack.c.b16 %v2187, %v2186
      %v2199 = vpack.c.b16 %v2189, %v2188
      %v2200 = vpack.c.b16 %v2191, %v2190
      %v2201 = vpack.c.b16 %v2193, %v2192
      %2202 = vrot.lane.b32.xlu0 %v2194, 56
      %v2203 = vpop.permute.xlu0 %2202
      %2204 = vrot.lane.b32.xlu0 %v2195, 56
      %v2205 = vpop.permute.xlu0 %2204
      %2206 = vrot.lane.b32.xlu0 %v2196, 56
      %v2207 = vpop.permute.xlu0 %2206
      %2208 = vrot.lane.b32.xlu0 %v2197, 56
      %v2209 = vpop.permute.xlu0 %2208
      %2210 = vrot.lane.b32.xlu0 %v2198, 56
      %v2211 = vpop.permute.xlu0 %2210
      %2212 = vrot.lane.b32.xlu0 %v2199, 56
      %v2213 = vpop.permute.xlu0 %2212
      %2214 = vrot.lane.b32.xlu0 %v2200, 56
      %v2215 = vpop.permute.xlu0 %2214
      %2216 = vrot.lane.b32.xlu0 %v2201, 56
      %v2217 = vpop.permute.xlu0 %2216
      %v2218 = vunpack.c.l.b16 %v1837
      %v2219 = vunpack.c.l.b16 %v1840
      %v2220 = vunpack.c.l.b16 %v1844
      %v2221 = vunpack.c.l.b16 %v1847
      %v2222 = vunpack.c.l.b16 %v1851
      %v2223 = vunpack.c.l.b16 %v1854
      %v2224 = vunpack.c.l.b16 %v1858
      %v2225 = vunpack.c.l.b16 %v1861
      %v2226 = vunpack.c.l.b16 %v1865
      %v2227 = vunpack.c.l.b16 %v1868
      %v2228 = vunpack.c.l.b16 %v1872
      %v2229 = vunpack.c.l.b16 %v1875
      %v2230 = vunpack.c.l.b16 %v1879
      %v2231 = vunpack.c.l.b16 %v1882
      %v2232 = vunpack.c.l.b16 %v1886
      %v2233 = vunpack.c.l.b16 %v1889
      %v2234 = vpack.c.b16 %v2219, %v2218
      %v2235 = vpack.c.b16 %v2221, %v2220
      %v2236 = vpack.c.b16 %v2223, %v2222
      %v2237 = vpack.c.b16 %v2225, %v2224
      %v2238 = vpack.c.b16 %v2227, %v2226
      %v2239 = vpack.c.b16 %v2229, %v2228
      %v2240 = vpack.c.b16 %v2231, %v2230
      %v2241 = vpack.c.b16 %v2233, %v2232
      %2242 = vrot.lane.b32.xlu0 %v2234, 64
      %v2243 = vpop.permute.xlu0 %2242
      %2244 = vrot.lane.b32.xlu0 %v2235, 64
      %v2245 = vpop.permute.xlu0 %2244
      %2246 = vrot.lane.b32.xlu0 %v2236, 64
      %v2247 = vpop.permute.xlu0 %2246
      %2248 = vrot.lane.b32.xlu0 %v2237, 64
      %v2249 = vpop.permute.xlu0 %2248
      %2250 = vrot.lane.b32.xlu0 %v2238, 64
      %v2251 = vpop.permute.xlu0 %2250
      %2252 = vrot.lane.b32.xlu0 %v2239, 64
      %v2253 = vpop.permute.xlu0 %2252
      %2254 = vrot.lane.b32.xlu0 %v2240, 64
      %v2255 = vpop.permute.xlu0 %2254
      %2256 = vrot.lane.b32.xlu0 %v2241, 64
      %v2257 = vpop.permute.xlu0 %2256
      %vm2258 = vcmask 64512
      %v2261 = vsel %vm2258, %v1914, %v1947
      %v2264 = vsel %vm2258, %v1915, %v1949
      %v2267 = vsel %vm2258, %v1916, %v1951
      %v2270 = vsel %vm2258, %v1917, %v1953
      %v2273 = vsel %vm2258, %v1918, %v1955
      %v2276 = vsel %vm2258, %v1919, %v1957
      %v2279 = vsel %vm2258, %v1920, %v1959
      %v2282 = vsel %vm2258, %v1921, %v1961
      %vm2283 = vcmask 130048
      %v2285 = vsel %vm2283, %v2261, %v1987
      %v2287 = vsel %vm2283, %v2264, %v1989
      %v2289 = vsel %vm2283, %v2267, %v1991
      %v2291 = vsel %vm2283, %v2270, %v1993
      %v2293 = vsel %vm2283, %v2273, %v1995
      %v2295 = vsel %vm2283, %v2276, %v1997
      %v2297 = vsel %vm2283, %v2279, %v1999
      %v2299 = vsel %vm2283, %v2282, %v2001
      %vm2300 = vcmask 195584
      %v2302 = vsel %vm2300, %v2285, %v2035
      %v2304 = vsel %vm2300, %v2287, %v2037
      %v2306 = vsel %vm2300, %v2289, %v2039
      %v2308 = vsel %vm2300, %v2291, %v2041
      %v2310 = vsel %vm2300, %v2293, %v2043
      %v2312 = vsel %vm2300, %v2295, %v2045
      %v2314 = vsel %vm2300, %v2297, %v2047
      %v2316 = vsel %vm2300, %v2299, %v2049
      %vm2317 = vcmask 261120
      %v2319 = vsel %vm2317, %v2302, %v2075
      %v2321 = vsel %vm2317, %v2304, %v2077
      %v2323 = vsel %vm2317, %v2306, %v2079
      %v2325 = vsel %vm2317, %v2308, %v2081
      %v2327 = vsel %vm2317, %v2310, %v2083
      %v2329 = vsel %vm2317, %v2312, %v2085
      %v2331 = vsel %vm2317, %v2314, %v2087
      %v2333 = vsel %vm2317, %v2316, %v2089
      %vm2334 = vcmask 326656
      %v2336 = vsel %vm2334, %v2319, %v2115
      %v2338 = vsel %vm2334, %v2321, %v2117
      %v2340 = vsel %vm2334, %v2323, %v2119
      %v2342 = vsel %vm2334, %v2325, %v2121
      %v2344 = vsel %vm2334, %v2327, %v2123
      %v2346 = vsel %vm2334, %v2329, %v2125
      %v2348 = vsel %vm2334, %v2331, %v2127
      %v2350 = vsel %vm2334, %v2333, %v2129
      %vm2351 = vcmask 392192
      %v2353 = vsel %vm2351, %v2336, %v2163
      %v2355 = vsel %vm2351, %v2338, %v2165
      %v2357 = vsel %vm2351, %v2340, %v2167
      %v2359 = vsel %vm2351, %v2342, %v2169
      %v2361 = vsel %vm2351, %v2344, %v2171
      %v2363 = vsel %vm2351, %v2346, %v2173
      %v2365 = vsel %vm2351, %v2348, %v2175
      %v2367 = vsel %vm2351, %v2350, %v2177
      %vm2368 = vcmask 457728
      %v2370 = vsel %vm2368, %v2353, %v2203
      %v2372 = vsel %vm2368, %v2355, %v2205
      %v2374 = vsel %vm2368, %v2357, %v2207
      %v2376 = vsel %vm2368, %v2359, %v2209
      %v2378 = vsel %vm2368, %v2361, %v2211
      %v2380 = vsel %vm2368, %v2363, %v2213
      %v2382 = vsel %vm2368, %v2365, %v2215
      %v2384 = vsel %vm2368, %v2367, %v2217
      %vm2385 = vcmask 523264
      %v2387 = vsel %vm2385, %v2370, %v2243
      %v2389 = vsel %vm2385, %v2372, %v2245
      %v2391 = vsel %vm2385, %v2374, %v2247
      %v2393 = vsel %vm2385, %v2376, %v2249
      %v2395 = vsel %vm2385, %v2378, %v2251
      %v2397 = vsel %vm2385, %v2380, %v2253
      %v2399 = vsel %vm2385, %v2382, %v2255
      %v2401 = vsel %vm2385, %v2384, %v2257
      %v2402 = vld [vmem:[%s3] sm:$0xf]
      %v2403 = vld [vmem:[%s3 + $0x4] sm:$0xf]
      %v2404 = vld [vmem:[%s3 + $0x8] sm:$0xf]
      %v2405 = vld [vmem:[%s3 + $0xc] sm:$0xf]
      %v2406 = vld [vmem:[%s3 + $0x10] sm:$0xf]
      %v2407 = vld [vmem:[%s3 + $0x14] sm:$0xf]
      %v2408 = vld [vmem:[%s3 + $0x18] sm:$0xf]
      %v2409 = vld [vmem:[%s3 + $0x1c] sm:$0xf]
      %v2410 = vld [vmem:[%s3 + $0x20] sm:$0xf]
      %v2420 = vunpack.c.l.b16 %v2402
      %v2421 = vunpack.c.l.b16 %v2403
      %v2422 = vunpack.c.l.b16 %v2404
      %v2423 = vunpack.c.l.b16 %v2405
      %v2424 = vunpack.c.l.b16 %v2406
      %v2425 = vunpack.c.l.b16 %v2407
      %v2426 = vunpack.c.l.b16 %v2408
      %v2427 = vunpack.c.l.b16 %v2409
      %v2428 = vunpack.c.l.b16 %v2410
      %v2429 = vpack.c.b16 %v2421, %v2420
      %v2430 = vpack.c.b16 %v2423, %v2422
      %v2431 = vpack.c.b16 %v2425, %v2424
      %v2432 = vpack.c.b16 %v2427, %v2426
      %v2433 = vpack.c.b16 %v2428, %v2428
      %vm2438 = vcmask 588800
      %v2439 = vsel %vm2438, %v2387, 0
      %v2441 = vsel %vm2438, %v2389, 0
      %v2443 = vsel %vm2438, %v2391, 0
      %v2445 = vsel %vm2438, %v2393, 0
      %v2447 = vsel %vm2438, %v2395, 0
      %v2449 = vsel %vm2438, %v2397, 0
      %v2451 = vsel %vm2438, %v2399, 0
      %v2453 = vsel %vm2438, %v2401, 0
      %vm2455 = vcmask 1043456
      %v2457 = vsel %vm2455, %v2433, 0
      %2459 = vmatprep.subr.bf16.mxu0 0
      %2460 = vmatpush1.bf16.msra.mxu0 %v2429
      %2461 = vmatprep.subr.bf16.mxu0 0
      %2462 = vmatpush1.bf16.msra.mxu0 %v2430
      %2463 = vmatprep.subr.bf16.mxu0 0
      %2464 = vmatpush1.bf16.msra.mxu0 %v2431
      %2465 = vmatprep.subr.bf16.mxu0 0
      %2466 = vmatpush1.bf16.msra.mxu0 %v2432
      %2467 = vmatprep.subr.bf16.mxu0 0
      %2468 = vmatpush1.bf16.msra.mxu0 %v2457
      %2469 = vmatprep.subr.bf16.mxu0 0
      %2470 = vmatpush1.bf16.msra.mxu0 0
      %2471 = vmatprep.subr.bf16.mxu0 0
      %2472 = vmatpush1.bf16.msra.mxu0 0
      %2473 = vmatprep.subr.bf16.mxu0 0
      %2474 = vmatpush1.bf16.msra.mxu0 0
      %2475 = vmatprep.subr.bf16.mxu0 0
      %2476 = vmatpush1.bf16.msra.mxu0 0
      %2477 = vmatprep.subr.bf16.mxu0 0
      %2478 = vmatpush1.bf16.msra.mxu0 0
      %2479 = vmatprep.subr.bf16.mxu0 0
      %2480 = vmatpush1.bf16.msra.mxu0 0
      %2481 = vmatprep.subr.bf16.mxu0 0
      %2482 = vmatpush1.bf16.msra.mxu0 0
      %2483 = vmatprep.subr.bf16.mxu0 0
      %2484 = vmatpush1.bf16.msra.mxu0 0
      %2485 = vmatprep.subr.bf16.mxu0 0
      %2486 = vmatpush1.bf16.msra.mxu0 0
      %2487 = vmatprep.subr.bf16.mxu0 0
      %2488 = vmatpush1.bf16.msra.mxu0 0
      %2489 = vmatprep.subr.bf16.mxu0 0
      %2490 = vmatpush1.bf16.msra.mxu0 0
      %2491 = vmatprep.mubr.bf16.mxu0 0
      %2492 = vmatmul.mubr.bf16.gmra.mrb[0].mxu0 %v2439
      %v2493 = vpop.f32.mrb[0].mxu0
      %v2494 = vadd.f32 0.0, %v2493
      %v2495 = vpop.f32.mrb[0].mxu0
      %v2496 = vpop.f32.mrb[0].mxu0
      %v2497 = vadd.f32 0.0, %v2496
      %v2498 = vpop.f32.mrb[0].mxu0
      %2499 = vmatprep.mubr.bf16.mxu0 0
      %2500 = vmatmul.mubr.bf16.gmra.mrb[0].mxu0 %v2441
      %v2501 = vpop.f32.mrb[0].mxu0
      %v2502 = vadd.f32 0.0, %v2501
      %v2503 = vpop.f32.mrb[0].mxu0
      %v2504 = vpop.f32.mrb[0].mxu0
      %v2505 = vadd.f32 0.0, %v2504
      %v2506 = vpop.f32.mrb[0].mxu0
      %2507 = vmatprep.mubr.bf16.mxu0 0
      %2508 = vmatmul.mubr.bf16.gmra.mrb[0].mxu0 %v2443
      %v2509 = vpop.f32.mrb[0].mxu0
      %v2510 = vadd.f32 0.0, %v2509
      %v2511 = vpop.f32.mrb[0].mxu0
      %v2512 = vpop.f32.mrb[0].mxu0
      %v2513 = vadd.f32 0.0, %v2512
      %v2514 = vpop.f32.mrb[0].mxu0
      %2515 = vmatprep.mubr.bf16.mxu0 0
      %2516 = vmatmul.mubr.bf16.gmra.mrb[0].mxu0 %v2445
      %v2517 = vpop.f32.mrb[0].mxu0
      %v2518 = vadd.f32 0.0, %v2517
      %v2519 = vpop.f32.mrb[0].mxu0
      %v2520 = vpop.f32.mrb[0].mxu0
      %v2521 = vadd.f32 0.0, %v2520
      %v2522 = vpop.f32.mrb[0].mxu0
      %2523 = vmatprep.mubr.bf16.mxu0 0
      %2524 = vmatmul.mubr.bf16.gmra.mrb[0].mxu0 %v2447
      %v2525 = vpop.f32.mrb[0].mxu0
      %v2526 = vadd.f32 0.0, %v2525
      %v2527 = vpop.f32.mrb[0].mxu0
      %v2528 = vpop.f32.mrb[0].mxu0
      %v2529 = vadd.f32 0.0, %v2528
      %v2530 = vpop.f32.mrb[0].mxu0
      %2531 = vmatprep.mubr.bf16.mxu0 0
      %2532 = vmatmul.mubr.bf16.gmra.mrb[0].mxu0 %v2449
      %v2533 = vpop.f32.mrb[0].mxu0
      %v2534 = vadd.f32 0.0, %v2533
      %v2535 = vpop.f32.mrb[0].mxu0
      %v2536 = vpop.f32.mrb[0].mxu0
      %v2537 = vadd.f32 0.0, %v2536
      %v2538 = vpop.f32.mrb[0].mxu0
      %2539 = vmatprep.mubr.bf16.mxu0 0
      %2540 = vmatmul.mubr.bf16.gmra.mrb[0].mxu0 %v2451
      %v2541 = vpop.f32.mrb[0].mxu0
      %v2542 = vadd.f32 0.0, %v2541
      %v2543 = vpop.f32.mrb[0].mxu0
      %v2544 = vpop.f32.mrb[0].mxu0
      %v2545 = vadd.f32 0.0, %v2544
      %v2546 = vpop.f32.mrb[0].mxu0
      %2547 = vmatprep.mubr.bf16.mxu0 0
      %2548 = vmatmul.mubr.bf16.gmra.mrb[0].mxu0 %v2453
      %v2549 = vpop.f32.mrb[0].mxu0
      %v2550 = vadd.f32 0.0, %v2549
      %v2551 = vpop.f32.mrb[0].mxu0
      %v2552 = vpop.f32.mrb[0].mxu0
      %v2553 = vadd.f32 0.0, %v2552
      %v2554 = vpop.f32.mrb[0].mxu0
      %2555 = vdwg.mxu0
      %2556 = vst.msk [vmem:[%s458] sm:$0xff] %vm2258, %v2494
      %2557 = vst.msk [vmem:[%s458 + $0x8] sm:$0xff] %vm2258, %v2497
      %2558 = vst.msk [vmem:[%s458 + $0x10] sm:$0xff] %vm2258, %v2502
      %2559 = vst.msk [vmem:[%s458 + $0x18] sm:$0xff] %vm2258, %v2505
      %2560 = vst.msk [vmem:[%s458 + $0x20] sm:$0xff] %vm2258, %v2510
      %2561 = vst.msk [vmem:[%s458 + $0x28] sm:$0xff] %vm2258, %v2513
      %2562 = vst.msk [vmem:[%s458 + $0x30] sm:$0xff] %vm2258, %v2518
      %2563 = vst.msk [vmem:[%s458 + $0x38] sm:$0xff] %vm2258, %v2521
      %2564 = vst.msk [vmem:[%s458 + $0x40] sm:$0xff] %vm2258, %v2526
      %2565 = vst.msk [vmem:[%s458 + $0x48] sm:$0xff] %vm2258, %v2529
      %2566 = vst.msk [vmem:[%s458 + $0x50] sm:$0xff] %vm2258, %v2534
      %2567 = vst.msk [vmem:[%s458 + $0x58] sm:$0xff] %vm2258, %v2537
      %2568 = vst.msk [vmem:[%s458 + $0x60] sm:$0xff] %vm2258, %v2542
      %2569 = vst.msk [vmem:[%s458 + $0x68] sm:$0xff] %vm2258, %v2545
      %2570 = vst.msk [vmem:[%s458 + $0x70] sm:$0xff] %vm2258, %v2550
      %2571 = vst.msk [vmem:[%s458 + $0x78] sm:$0xff] %vm2258, %v2553
      %v2572 = vsel %vm2258, %v2494, 0.0
      %v2573 = vsel %vm2258, %v2497, 0.0
      %v2574 = vadd.f32 %v2572, %v2573
      %v2575 = vsel %vm2258, %v2502, 0.0
      %v2576 = vadd.f32 %v2574, %v2575
      %v2577 = vsel %vm2258, %v2505, 0.0
      %v2578 = vadd.f32 %v2576, %v2577
      %v2579 = vsel %vm2258, %v2510, 0.0
      %v2580 = vadd.f32 %v2578, %v2579
      %v2581 = vsel %vm2258, %v2513, 0.0
      %v2582 = vadd.f32 %v2580, %v2581
      %v2583 = vsel %vm2258, %v2518, 0.0
      %v2584 = vadd.f32 %v2582, %v2583
      %v2585 = vsel %vm2258, %v2521, 0.0
      %v2586 = vadd.f32 %v2584, %v2585
      %v2587 = vsel %vm2258, %v2526, 0.0
      %v2588 = vadd.f32 %v2586, %v2587
      %v2589 = vsel %vm2258, %v2529, 0.0
      %v2590 = vadd.f32 %v2588, %v2589
      %v2591 = vsel %vm2258, %v2534, 0.0
      %v2592 = vadd.f32 %v2590, %v2591
      %v2593 = vsel %vm2258, %v2537, 0.0
      %v2594 = vadd.f32 %v2592, %v2593
      %v2595 = vsel %vm2258, %v2542, 0.0
      %v2596 = vadd.f32 %v2594, %v2595
      %v2597 = vsel %vm2258, %v2545, 0.0
      %v2598 = vadd.f32 %v2596, %v2597
      %v2599 = vsel %vm2258, %v2550, 0.0
      %v2600 = vadd.f32 %v2598, %v2599
      %v2601 = vsel %vm2258, %v2553, 0.0
      %v2602 = vadd.f32 %v2600, %v2601
      %v2603 = vrot.slane %v2602, 4
      %v2604 = vadd.f32 %v2602, %v2603
      %v2605 = vrot.slane %v2604, 2
      %v2606 = vadd.f32 %v2604, %v2605
      %v2607 = vrot.slane %v2606, 1
      %v2608 = vadd.f32 %v2606, %v2607
      %2609 = vst.msk [vmem:[%s467] sm:$0x1] %vm472, %v2608
      %v2610 = vmul.f32 %v2494, %v2494
      %v2611 = vmul.f32 %v2497, %v2497
      %v2612 = vmul.f32 %v2502, %v2502
      %v2613 = vmul.f32 %v2505, %v2505
      %v2614 = vmul.f32 %v2510, %v2510
      %v2615 = vmul.f32 %v2513, %v2513
      %v2616 = vmul.f32 %v2518, %v2518
      %v2617 = vmul.f32 %v2521, %v2521
      %v2618 = vmul.f32 %v2526, %v2526
      %v2619 = vmul.f32 %v2529, %v2529
      %v2620 = vmul.f32 %v2534, %v2534
      %v2621 = vmul.f32 %v2537, %v2537
      %v2622 = vmul.f32 %v2542, %v2542
      %v2623 = vmul.f32 %v2545, %v2545
      %v2624 = vmul.f32 %v2550, %v2550
      %v2625 = vmul.f32 %v2553, %v2553
      %v2626 = vsel %vm2258, %v2610, 0.0
      %v2627 = vsel %vm2258, %v2611, 0.0
      %v2628 = vadd.f32 %v2626, %v2627
      %v2629 = vsel %vm2258, %v2612, 0.0
      %v2630 = vadd.f32 %v2628, %v2629
      %v2631 = vsel %vm2258, %v2613, 0.0
      %v2632 = vadd.f32 %v2630, %v2631
      %v2633 = vsel %vm2258, %v2614, 0.0
      %v2634 = vadd.f32 %v2632, %v2633
      %v2635 = vsel %vm2258, %v2615, 0.0
      %v2636 = vadd.f32 %v2634, %v2635
      %v2637 = vsel %vm2258, %v2616, 0.0
      %v2638 = vadd.f32 %v2636, %v2637
      %v2639 = vsel %vm2258, %v2617, 0.0
      %v2640 = vadd.f32 %v2638, %v2639
      %v2641 = vsel %vm2258, %v2618, 0.0
      %v2642 = vadd.f32 %v2640, %v2641
      %v2643 = vsel %vm2258, %v2619, 0.0
      %v2644 = vadd.f32 %v2642, %v2643
      %v2645 = vsel %vm2258, %v2620, 0.0
      %v2646 = vadd.f32 %v2644, %v2645
      %v2647 = vsel %vm2258, %v2621, 0.0
      %v2648 = vadd.f32 %v2646, %v2647
      %v2649 = vsel %vm2258, %v2622, 0.0
      %v2650 = vadd.f32 %v2648, %v2649
      %v2651 = vsel %vm2258, %v2623, 0.0
      %v2652 = vadd.f32 %v2650, %v2651
      %v2653 = vsel %vm2258, %v2624, 0.0
      %v2654 = vadd.f32 %v2652, %v2653
      %v2655 = vsel %vm2258, %v2625, 0.0
      %v2656 = vadd.f32 %v2654, %v2655
      %v2657 = vrot.slane %v2656, 4
      %v2658 = vadd.f32 %v2656, %v2657
      %v2659 = vrot.slane %v2658, 2
      %v2660 = vadd.f32 %v2658, %v2659
      %v2661 = vrot.slane %v2660, 1
      %v2662 = vadd.f32 %v2660, %v2661
      %2663 = vst.msk [vmem:[%s467 + $0x1] sm:$0x1] %vm472, %v2662
      %s2664 = smul.u32 8, %s24
      %p2665 = scmp.lt.s32.totalorder %s23, 1
      %s2666 = scalar_select %p2665, %s23, 1
      %p2667 = scmp.lt.s32.totalorder %s2664, 15
      %s2668 = scalar_select %p2667, %s2664, 15
      %s2669 = smul.addr %s2668, 2
      %s2670 = smul.addr %s2666, 32
      %s2671 = sadd.s32 %s2669, %s2670
      %s2672 = smul.addr %s2671, 8
      %s2673 = scalar_lea.vmem %s6, %s2672
      %p2674 = scmp.lt.s32.totalorder %s23, 1
      %s2675 = scalar_select %p2674, %s23, 1
      %p2676 = scmp.lt.s32.totalorder %s24, 1
      %s2677 = scalar_select %p2676, %s24, 1
      %s2678 = smul.addr %s2675, 2
      %s2679 = sadd.s32 %s2677, %s2678
      %s2680 = smul.addr %s2679, 2
      %s2681 = scalar_lea.vmem %s7, %s2680
      // Predicated region
      $region53: #{conv_block_forward.4} parent=43 // pred_check
        %p2682 = pneg %p214
      $region54: #{conv_block_forward.4} parent=43 // pred_check_branch
        %2684 = sbr.rel (%p2682) target = $region56
      $region55: #{conv_block_forward.4} parent=43 // pred_region
        %s2685 = smul.u32 8, %s24
      $region56: #{conv_block_forward.4} parent=43 // pred_fallthru
        _
      // Predicated region
      $region57: #{conv_block_forward.4} parent=43 // pred_check
        %p2686 = pneg %p242
      $region58: #{conv_block_forward.4} parent=43 // pred_check_branch
        %2688 = sbr.rel (%p2686) target = $region60
      $region59: #{conv_block_forward.4} parent=43 // pred_region
        _
      $region60: #{conv_block_forward.4} parent=43 // pred_fallthru
        _
    $region44: #{conv_block_forward.4} parent=5 // pred_fallthru
      _
    %p2689 = scmp.le.s32.totalorder 2, %s14
    // Predicated region
    $region61: #{conv_block_forward.4} parent=5 // pred_check
      %p2690 = pneg %p2689
    $region62: #{conv_block_forward.4} parent=5 // pred_check_branch
      %2692 = sbr.rel (%p2690) target = $region64
    $region63: #{conv_block_forward.4} parent=5 // pred_region
      %s2693 = ssub.s32 %s14, 2
      // Predicated region
      $region65: #{conv_block_forward.4} parent=63 // pred_check
        %p2694 = pneg %p220
      $region66: #{conv_block_forward.4} parent=63 // pred_check_branch
        %2696 = sbr.rel (%p2694) target = $region68
      $region67: #{conv_block_forward.4} parent=63 // pred_region
        %s2697 = smul.u32 8, %s26
        %p2698 = scmp.lt.s32.totalorder %s25, 1
        %s2699 = scalar_select %p2698, %s25, 1
        %p2700 = scmp.lt.s32.totalorder %s2697, 15
        %s2701 = scalar_select %p2700, %s2697, 15
        %s2702 = smul.addr %s2701, 2
        %s2703 = smul.addr %s2699, 32
        %s2704 = sadd.s32 %s2702, %s2703
        %s2705 = smul.addr %s2704, 8
        %s2706 = scalar_lea.vmem %s6, %s2705
      $region68: #{conv_block_forward.4} parent=63 // pred_fallthru
        _
      // Predicated region
      $region69: #{conv_block_forward.4} parent=63 // pred_check
        %p2707 = pneg %p248
      $region70: #{conv_block_forward.4} parent=63 // pred_check_branch
        %2709 = sbr.rel (%p2707) target = $region72
      $region71: #{conv_block_forward.4} parent=63 // pred_region
        %p2710 = scmp.lt.s32.totalorder %s25, 1
        %s2711 = scalar_select %p2710, %s25, 1
        %p2712 = scmp.lt.s32.totalorder %s26, 1
        %s2713 = scalar_select %p2712, %s26, 1
        %s2714 = smul.addr %s2711, 2
        %s2715 = sadd.s32 %s2713, %s2714
        %s2716 = smul.addr %s2715, 2
        %s2717 = scalar_lea.vmem %s7, %s2716
      $region72: #{conv_block_forward.4} parent=63 // pred_fallthru
        _
    $region64: #{conv_block_forward.4} parent=5 // pred_fallthru
      _
  $region6: #{conv_block_forward.4} parent=0 // loop_footer
    %s18 = sadd.s32 1, %s14
  $region7: #{conv_block_forward.4} parent=0 // loop_footer_branch
    %13 = sbr.rel target = $region3
  $region8: #{conv_block_forward.4} parent=0 // loop_exit
    _

</llo_original>
